<compile_context>
chip_gen: v7x
topology: tpu7x:2x2x1
jax: 0.10.0
libtpu: 0.0.40
codegen_flags: <defaults>
</compile_context>

<pallas_src>
import jax
import jax.numpy as jnp
from jax import lax
from jax.experimental import pallas as pl
from jax.experimental.pallas import tpu as pltpu

EPS = 1e-5


def _make_kernel(Nb, H, W, Cin, Cout, use_attention):
    Hp, Wp = H + 2, W + 2
    rows = Nb * H * W

    def kernel(x_ref, w1_ref, b1_ref, w2_ref, b2_ref, *rest):
        if use_attention:
            wa1_ref, wa2_ref, out_ref, xpad_ref, h1pad_ref = rest
        else:
            out_ref, xpad_ref, h1pad_ref = rest

        def write_padded(dst_ref, interior, c):
            # Zero only the 1-pixel border (not the whole scratch) and write the
            # interior. Done every step so correctness does not depend on
            # iteration order / core assignment of the "parallel" batch axis.
            dst_ref[:, 0:1, :, :] = jnp.zeros((Nb, 1, Wp, c), jnp.float32)
            dst_ref[:, Hp - 1:Hp, :, :] = jnp.zeros((Nb, 1, Wp, c), jnp.float32)
            dst_ref[:, 1:1 + H, 0:1, :] = jnp.zeros((Nb, H, 1, c), jnp.float32)
            dst_ref[:, 1:1 + H, Wp - 1:Wp, :] = jnp.zeros((Nb, H, 1, c), jnp.float32)
            dst_ref[:, 1:1 + H, 1:1 + W, :] = interior

        def im2col(src_ref, c):
            # Gather the 9 shifted taps once into a (rows, 9*c) patch so the
            # conv is a single MXU matmul with K = 9*c instead of K = c.
            taps = [src_ref[:, dy:dy + H, dx:dx + W, :].reshape(rows, c)
                    for dy in range(3) for dx in range(3)]
            return jnp.concatenate(taps, axis=-1)

        # ---- conv1 (grouped; block-diagonal dense weight with BN1 scale
        # folded in) + bias + ReLU
        write_padded(xpad_ref, x_ref[...], Cin)
        h1 = jnp.dot(im2col(xpad_ref, Cin), w1_ref[...],
                     preferred_element_type=jnp.float32)
        h1 = jnp.maximum(h1 + b1_ref[...], 0.0)
        # Dropout2d(0.05) is identity in eval mode.
        # TODO(synk): training-mode Dropout2d (channel dropout) not implemented.

        # ---- conv2 (dense 3x3, BN2 scale folded) + bias + ReLU
        write_padded(h1pad_ref, h1.reshape(Nb, H, W, Cout), Cout)
        h2 = jnp.dot(im2col(h1pad_ref, Cout), w2_ref[...],
                     preferred_element_type=jnp.float32)
        h2 = jnp.maximum(h2 + b2_ref[...], 0.0)

        if use_attention:
            # LightChannelAttention: GAP -> 1x1 -> ReLU -> 1x1 -> sigmoid (MXU dots).
            h2b = h2.reshape(Nb, H * W, Cout)
            pooled = jnp.mean(h2b, axis=1)                      # (Nb, Cout)
            hid = jnp.maximum(
                jnp.dot(pooled, wa1_ref[...],
                        preferred_element_type=jnp.float32), 0.0)   # (Nb, Cr)
            att = jax.nn.sigmoid(
                jnp.dot(hid, wa2_ref[...],
                        preferred_element_type=jnp.float32))        # (Nb, Cout)
            h2 = (h2b * att[:, None, :]).reshape(rows, Cout)

        out_ref[...] = h2.reshape(Nb, H, W, Cout).astype(out_ref.dtype)

    return kernel


def _pick_block_n(N, per_item_bytes, weight_bytes, budget_bytes):
    """Largest batch block within the VMEM budget; keep >= 2 grid steps when
    N >= 2 so the 'parallel' batch axis can be sharded across v7x's 2 cores."""
    best = 1
    for nb in range(1, N + 1):
        if N % nb != 0:
            continue
        if nb * per_item_bytes + weight_bytes > budget_bytes:
            continue
        if N >= 2 and (N // nb) < 2:
            continue
        best = nb
    return best


def efficient_double_conv(x_nchw, params, use_attention=False):
    """Pallas implementation. x_nchw: (N, Cin, H, W) f32 -> (N, Cout, H, W) f32."""
    N, Cin, H, W = x_nchw.shape
    Cout = params["b1"].shape[-1]
    Hp, Wp = H + 2, W + 2

    # NCHW -> NHWC (channels on lanes). Spatial padding happens in-kernel.
    # TODO(synk): boundary transposes stay in the wrapper; a lane-dense
    # channels-first output would require an in-kernel (H*W, Cout) transpose.
    x_nhwc = jnp.transpose(x_nchw, (0, 2, 3, 1)).astype(jnp.float32)

    # --- VMEM budget / batch blocking (conservative for v7x's 64 MiB VMEM).
    f32b = 4
    per_item = f32b * (
        2 * H * W * Cin                       # input block, double buffered
        + 2 * H * W * Cout                    # output block, double buffered
        + Hp * Wp * (Cin + Cout)              # padded VMEM scratches
        + 2 * H * W * 9 * max(Cin, Cout))     # im2col patch values / temps
    weight_bytes = f32b * 2 * (9 * Cin * Cout + 9 * Cout * Cout + 2 * Cout * Cout)
    budget = 40 * 2**20
    Nb = _pick_block_n(N, per_item, weight_bytes, budget)
    # TODO(synk): no spatial (H) tiling path for feature maps whose padded
    # intermediates exceed the VMEM budget even at Nb=1.
    vmem_limit = int(min(64 * 2**20,
                         max(32 * 2**20, 2 * (Nb * per_item + weight_bytes))))

    inputs = [x_nhwc, params["w1k"], params["b1"], params["w2k"], params["b2"]]
    in_specs = [
        pl.BlockSpec((Nb, H, W, Cin), lambda n: (n, 0, 0, 0)),
        pl.BlockSpec((9 * Cin, Cout), lambda n: (0, 0)),
        pl.BlockSpec((1, Cout), lambda n: (0, 0)),
        pl.BlockSpec((9 * Cout, Cout), lambda n: (0, 0)),
        pl.BlockSpec((1, Cout), lambda n: (0, 0)),
    ]
    if use_attention:
        Cr = params["wa1"].shape[-1]
        inputs += [params["wa1"], params["wa2"]]
        in_specs += [
            pl.BlockSpec((Cout, Cr), lambda n: (0, 0)),
            pl.BlockSpec((Cr, Cout), lambda n: (0, 0)),
        ]

    kernel = _make_kernel(Nb, H, W, Cin, Cout, use_attention)
    out_nhwc = pl.pallas_call(
        kernel,
        out_shape=jax.ShapeDtypeStruct((N, H, W, Cout), jnp.float32),
        grid=(N // Nb,),
        in_specs=in_specs,
        out_specs=pl.BlockSpec((Nb, H, W, Cout), lambda n: (n, 0, 0, 0)),
        scratch_shapes=[pltpu.VMEM((Nb, Hp, Wp, Cin), jnp.float32),
                        pltpu.VMEM((Nb, Hp, Wp, Cout), jnp.float32)],
        compiler_params=pltpu.CompilerParams(
            dimension_semantics=("parallel",),
            vmem_limit_bytes=vmem_limit),
    )(*inputs)
    return jnp.transpose(out_nhwc, (0, 3, 1, 2))


def init_params(key, in_channels, out_channels, use_attention=False):
    """Deterministic synthetic parameters matching the PyTorch module's shapes."""
    # replicate the group-selection logic of EfficientDoubleConv.__init__
    max_groups = min(in_channels, out_channels, 8)
    groups = 1
    for g in range(max_groups, 0, -1):
        if in_channels % g == 0 and out_channels % g == 0:
            groups = g
            break
    cin_g = in_channels // groups
    cout_g = out_channels // groups

    ks = jax.random.split(key, 12)
    w1_t = 0.2 * jax.random.normal(ks[0], (out_channels, cin_g, 3, 3), jnp.float32)
    w2_t = 0.2 * jax.random.normal(ks[1], (out_channels, out_channels, 3, 3), jnp.float32)
    g1 = 1.0 + 0.1 * jax.random.normal(ks[2], (out_channels,), jnp.float32)
    be1 = 0.1 * jax.random.normal(ks[3], (out_channels,), jnp.float32)
    m1 = 0.1 * jax.random.normal(ks[4], (out_channels,), jnp.float32)
    v1 = 0.5 + jax.random.uniform(ks[5], (out_channels,), jnp.float32)
    g2 = 1.0 + 0.1 * jax.random.normal(ks[6], (out_channels,), jnp.float32)
    be2 = 0.1 * jax.random.normal(ks[7], (out_channels,), jnp.float32)
    m2 = 0.1 * jax.random.normal(ks[8], (out_channels,), jnp.float32)
    v2 = 0.5 + jax.random.uniform(ks[9], (out_channels,), jnp.float32)

    # Grouped conv1 weight expanded to a block-diagonal dense (Cout, Cin, 3, 3).
    # Kept dense on purpose: a single full-width (9*Cin, Cout) MXU matmul beats
    # `groups` matmuls with only Cout/groups output columns; the zero rows are
    # cheaper than the lost MXU column utilization, and the extra weight bytes
    # are negligible.
    w1_dense = jnp.zeros((out_channels, in_channels, 3, 3), jnp.float32)
    for g in range(groups):
        w1_dense = w1_dense.at[g * cout_g:(g + 1) * cout_g,
                               g * cin_g:(g + 1) * cin_g].set(
            w1_t[g * cout_g:(g + 1) * cout_g])

    # im2col-layout weights: row index = (dy*3 + dx) * C + ci, columns = Cout.
    w1_k = jnp.transpose(w1_dense, (2, 3, 1, 0)).reshape(9 * in_channels, out_channels)
    w2_k = jnp.transpose(w2_t, (2, 3, 1, 0)).reshape(9 * out_channels, out_channels)

    # Fold BatchNorm (eval) into per-channel scale/bias; fold the scale into
    # the conv weights so the kernel epilogue is just bias + ReLU.
    s1 = g1 / jnp.sqrt(v1 + EPS)
    b1 = be1 - m1 * s1
    s2 = g2 / jnp.sqrt(v2 + EPS)
    b2 = be2 - m2 * s2

    params = {
        "w1k": w1_k * s1[None, :], "w2k": w2_k * s2[None, :],
        "b1": b1.reshape(1, -1), "b2": b2.reshape(1, -1),
        # un-folded pieces kept for the pure-JAX reference
        "s1": s1.reshape(1, -1), "s2": s2.reshape(1, -1),
        "w1_t": w1_t, "w2_t": w2_t,
    }
    if use_attention:
        cr = out_channels // 8  # reduction=8
        wa1_t = 0.3 * jax.random.normal(ks[10], (cr, out_channels), jnp.float32)
        wa2_t = 0.3 * jax.random.normal(ks[11], (out_channels, cr), jnp.float32)
        params["wa1"] = wa1_t.T  # (Cout, Cr)
        params["wa2"] = wa2_t.T  # (Cr, Cout)
    return params, groups


def reference(x_nchw, params, use_attention, groups):
    """Pure-JAX reference mirroring the PyTorch forward (eval mode)."""
    dn = ("NCHW", "OIHW", "NCHW")
    y = lax.conv_general_dilated(x_nchw, params["w1_t"], (1, 1), "SAME",
                                 feature_group_count=groups,
                                 dimension_numbers=dn)
    y = y * params["s1"].reshape(1, -1, 1, 1) + params["b1"].reshape(1, -1, 1, 1)
    y = jnp.maximum(y, 0.0)
    y = lax.conv_general_dilated(y, params["w2_t"], (1, 1), "SAME",
                                 dimension_numbers=dn)
    y = y * params["s2"].reshape(1, -1, 1, 1) + params["b2"].reshape(1, -1, 1, 1)
    y = jnp.maximum(y, 0.0)
    if use_attention:
        pooled = jnp.mean(y, axis=(2, 3))                 # (N, Cout)
        hid = jnp.maximum(pooled @ params["wa1"], 0.0)    # (N, Cr)
        att = jax.nn.sigmoid(hid @ params["wa2"])         # (N, Cout)
        y = y * att[:, :, None, None]
    return y


if __name__ == "__main__":
    key = jax.random.PRNGKey(0)
    kx, kp = jax.random.split(key)
    N, Cin, H, W = 2, 4, 16, 16
    Cout = 8

    x = jax.random.normal(kx, (N, Cin, H, W), jnp.float32)

    for use_attention in (False, True):
        params, groups = init_params(kp, Cin, Cout, use_attention)
        out = efficient_double_conv(x, params, use_attention)
        out = jax.block_until_ready(out)
        ref = reference(x, params, use_attention, groups)
        assert out.shape == (N, Cout, H, W), out.shape
        max_err = float(jnp.max(jnp.abs(out - ref)))
        assert jnp.allclose(out, ref, atol=1e-4, rtol=1e-4), max_err

    print("KERNEL_OK")
</pallas_src>

<mosaic_0001>
module attributes {stable_mosaic.version = 11 : i64} {
  func.func @kernel(%arg0: i32, %arg1: memref<1x16x16x4xf32, #tpu.memory_space<vmem>>, %arg2: memref<36x8xf32, #tpu.memory_space<vmem>>, %arg3: memref<1x8xf32, #tpu.memory_space<vmem>>, %arg4: memref<72x8xf32, #tpu.memory_space<vmem>>, %arg5: memref<1x8xf32, #tpu.memory_space<vmem>>, %arg6: memref<1x16x16x8xf32, #tpu.memory_space<vmem>>, %arg7: memref<1x18x18x4xf32, #tpu.memory_space<vmem>>, %arg8: memref<1x18x18x8xf32, #tpu.memory_space<vmem>>) attributes {dimension_semantics = [#tpu.dimension_semantics<parallel>], iteration_bounds = array<i64: 2>, scalar_prefetch = 0 : i64, scratch_operands = 2 : i64, tpu.core_type = #tpu.core_type<tc>, window_params = [{transform_indices = @transform_0, window_bounds = array<i64: 1, 16, 16, 4>}, {pipeline_mode = #tpu.pipeline_mode<synchronous>, transform_indices = @transform_1, window_bounds = array<i64: 36, 8>}, {pipeline_mode = #tpu.pipeline_mode<synchronous>, transform_indices = @transform_2, window_bounds = array<i64: 1, 8>}, {pipeline_mode = #tpu.pipeline_mode<synchronous>, transform_indices = @transform_3, window_bounds = array<i64: 72, 8>}, {pipeline_mode = #tpu.pipeline_mode<synchronous>, transform_indices = @transform_4, window_bounds = array<i64: 1, 8>}, {transform_indices = @transform_5, window_bounds = array<i64: 1, 16, 16, 8>}]} {
    %c0 = arith.constant 0 : index
    %c0_0 = arith.constant 0 : index
    %c0_1 = arith.constant 0 : index
    %c0_2 = arith.constant 0 : index
    %0 = vector.load %arg1[%c0, %c0_0, %c0_1, %c0_2] : memref<1x16x16x4xf32, #tpu.memory_space<vmem>>, vector<1x16x16x4xf32>
    %cst = arith.constant 0.000000e+00 : f32
    %1 = vector.broadcast %cst : f32 to vector<1x1x18x4xf32>
    %c0_3 = arith.constant 0 : index
    %c0_4 = arith.constant 0 : index
    %c0_5 = arith.constant 0 : index
    %c0_6 = arith.constant 0 : index
    %2 = vector.load %arg7[%c0_3, %c0_4, %c0_5, %c0_6] : memref<1x18x18x4xf32, #tpu.memory_space<vmem>>, vector<1x1x18x4xf32>
    tpu.vector_store %arg7[%c0_3, %c0_4, %c0_5, %c0_6], %1 {strides = array<i32>} : memref<1x18x18x4xf32, #tpu.memory_space<vmem>>, vector<1x1x18x4xf32>,
    %cst_7 = arith.constant 0.000000e+00 : f32
    %3 = vector.broadcast %cst_7 : f32 to vector<1x1x18x4xf32>
    %c0_8 = arith.constant 0 : index
    %c17 = arith.constant 17 : index
    %c0_9 = arith.constant 0 : index
    %c0_10 = arith.constant 0 : index
    %4 = vector.load %arg7[%c0_8, %c17, %c0_9, %c0_10] : memref<1x18x18x4xf32, #tpu.memory_space<vmem>>, vector<1x1x18x4xf32>
    tpu.vector_store %arg7[%c0_8, %c17, %c0_9, %c0_10], %3 {strides = array<i32>} : memref<1x18x18x4xf32, #tpu.memory_space<vmem>>, vector<1x1x18x4xf32>,
    %cst_11 = arith.constant 0.000000e+00 : f32
    %5 = vector.broadcast %cst_11 : f32 to vector<1x16x1x4xf32>
    %c0_12 = arith.constant 0 : index
    %c1 = arith.constant 1 : index
    %c0_13 = arith.constant 0 : index
    %c0_14 = arith.constant 0 : index
    %6 = vector.load %arg7[%c0_12, %c1, %c0_13, %c0_14] : memref<1x18x18x4xf32, #tpu.memory_space<vmem>>, vector<1x16x1x4xf32>
    tpu.vector_store %arg7[%c0_12, %c1, %c0_13, %c0_14], %5 {strides = array<i32>} : memref<1x18x18x4xf32, #tpu.memory_space<vmem>>, vector<1x16x1x4xf32>,
    %cst_15 = arith.constant 0.000000e+00 : f32
    %7 = vector.broadcast %cst_15 : f32 to vector<1x16x1x4xf32>
    %c0_16 = arith.constant 0 : index
    %c1_17 = arith.constant 1 : index
    %c17_18 = arith.constant 17 : index
    %c0_19 = arith.constant 0 : index
    %8 = vector.load %arg7[%c0_16, %c1_17, %c17_18, %c0_19] : memref<1x18x18x4xf32, #tpu.memory_space<vmem>>, vector<1x16x1x4xf32>
    tpu.vector_store %arg7[%c0_16, %c1_17, %c17_18, %c0_19], %7 {strides = array<i32>} : memref<1x18x18x4xf32, #tpu.memory_space<vmem>>, vector<1x16x1x4xf32>,
    %c0_20 = arith.constant 0 : index
    %c1_21 = arith.constant 1 : index
    %c1_22 = arith.constant 1 : index
    %c0_23 = arith.constant 0 : index
    %9 = vector.load %arg7[%c0_20, %c1_21, %c1_22, %c0_23] : memref<1x18x18x4xf32, #tpu.memory_space<vmem>>, vector<1x16x16x4xf32>
    tpu.vector_store %arg7[%c0_20, %c1_21, %c1_22, %c0_23], %0 {strides = array<i32>} : memref<1x18x18x4xf32, #tpu.memory_space<vmem>>, vector<1x16x16x4xf32>,
    %c0_24 = arith.constant 0 : index
    %c0_25 = arith.constant 0 : index
    %c0_26 = arith.constant 0 : index
    %c0_27 = arith.constant 0 : index
    %10 = vector.load %arg7[%c0_24, %c0_25, %c0_26, %c0_27] : memref<1x18x18x4xf32, #tpu.memory_space<vmem>>, vector<1x16x16x4xf32>
    %11 = vector.shape_cast %10 : vector<1x16x16x4xf32> to vector<256x4xf32>
    %c0_28 = arith.constant 0 : index
    %c0_29 = arith.constant 0 : index
    %c1_30 = arith.constant 1 : index
    %c0_31 = arith.constant 0 : index
    %12 = vector.load %arg7[%c0_28, %c0_29, %c1_30, %c0_31] : memref<1x18x18x4xf32, #tpu.memory_space<vmem>>, vector<1x16x16x4xf32>
    %13 = vector.shape_cast %12 : vector<1x16x16x4xf32> to vector<256x4xf32>
    %c0_32 = arith.constant 0 : index
    %c0_33 = arith.constant 0 : index
    %c2 = arith.constant 2 : index
    %c0_34 = arith.constant 0 : index
    %14 = vector.load %arg7[%c0_32, %c0_33, %c2, %c0_34] : memref<1x18x18x4xf32, #tpu.memory_space<vmem>>, vector<1x16x16x4xf32>
    %15 = vector.shape_cast %14 : vector<1x16x16x4xf32> to vector<256x4xf32>
    %c0_35 = arith.constant 0 : index
    %c1_36 = arith.constant 1 : index
    %c0_37 = arith.constant 0 : index
    %c0_38 = arith.constant 0 : index
    %16 = vector.load %arg7[%c0_35, %c1_36, %c0_37, %c0_38] : memref<1x18x18x4xf32, #tpu.memory_space<vmem>>, vector<1x16x16x4xf32>
    %17 = vector.shape_cast %16 : vector<1x16x16x4xf32> to vector<256x4xf32>
    %c0_39 = arith.constant 0 : index
    %c1_40 = arith.constant 1 : index
    %c1_41 = arith.constant 1 : index
    %c0_42 = arith.constant 0 : index
    %18 = vector.load %arg7[%c0_39, %c1_40, %c1_41, %c0_42] : memref<1x18x18x4xf32, #tpu.memory_space<vmem>>, vector<1x16x16x4xf32>
    %19 = vector.shape_cast %18 : vector<1x16x16x4xf32> to vector<256x4xf32>
    %c0_43 = arith.constant 0 : index
    %c1_44 = arith.constant 1 : index
    %c2_45 = arith.constant 2 : index
    %c0_46 = arith.constant 0 : index
    %20 = vector.load %arg7[%c0_43, %c1_44, %c2_45, %c0_46] : memref<1x18x18x4xf32, #tpu.memory_space<vmem>>, vector<1x16x16x4xf32>
    %21 = vector.shape_cast %20 : vector<1x16x16x4xf32> to vector<256x4xf32>
    %c0_47 = arith.constant 0 : index
    %c2_48 = arith.constant 2 : index
    %c0_49 = arith.constant 0 : index
    %c0_50 = arith.constant 0 : index
    %22 = vector.load %arg7[%c0_47, %c2_48, %c0_49, %c0_50] : memref<1x18x18x4xf32, #tpu.memory_space<vmem>>, vector<1x16x16x4xf32>
    %23 = vector.shape_cast %22 : vector<1x16x16x4xf32> to vector<256x4xf32>
    %c0_51 = arith.constant 0 : index
    %c2_52 = arith.constant 2 : index
    %c1_53 = arith.constant 1 : index
    %c0_54 = arith.constant 0 : index
    %24 = vector.load %arg7[%c0_51, %c2_52, %c1_53, %c0_54] : memref<1x18x18x4xf32, #tpu.memory_space<vmem>>, vector<1x16x16x4xf32>
    %25 = vector.shape_cast %24 : vector<1x16x16x4xf32> to vector<256x4xf32>
    %c0_55 = arith.constant 0 : index
    %c2_56 = arith.constant 2 : index
    %c2_57 = arith.constant 2 : index
    %c0_58 = arith.constant 0 : index
    %26 = vector.load %arg7[%c0_55, %c2_56, %c2_57, %c0_58] : memref<1x18x18x4xf32, #tpu.memory_space<vmem>>, vector<1x16x16x4xf32>
    %27 = vector.shape_cast %26 : vector<1x16x16x4xf32> to vector<256x4xf32>
    %28 = tpu.concatenate %11, %13, %15, %17, %19, %21, %23, %25, %27 in 1 : vector<256x4xf32>, vector<256x4xf32>, vector<256x4xf32>, vector<256x4xf32>, vector<256x4xf32>, vector<256x4xf32>, vector<256x4xf32>, vector<256x4xf32>, vector<256x4xf32> -> vector<256x36xf32>
    %c0_59 = arith.constant 0 : index
    %c0_60 = arith.constant 0 : index
    %29 = vector.load %arg2[%c0_59, %c0_60] : memref<36x8xf32, #tpu.memory_space<vmem>>, vector<36x8xf32>
    %cst_61 = arith.constant dense<0.000000e+00> : vector<256x8xf32>
    %30 = tpu.matmul %28, %29, %cst_61 {dimension_numbers = #tpu.dot_dimension_numbers<[1], [0], [0], [1], [0, 0, 1, 1], [], []>} : vector<256x36xf32>, vector<36x8xf32>, vector<256x8xf32> -> vector<256x8xf32>
    %c0_62 = arith.constant 0 : index
    %c0_63 = arith.constant 0 : index
    %31 = vector.load %arg3[%c0_62, %c0_63] : memref<1x8xf32, #tpu.memory_space<vmem>>, vector<1x8xf32>
    %32 = vector.broadcast %31 : vector<1x8xf32> to vector<256x8xf32>
    %33 = arith.addf %30, %32 : vector<256x8xf32>
    %cst_64 = arith.constant 0.000000e+00 : f32
    %34 = vector.broadcast %cst_64 : f32 to vector<256x8xf32>
    %35 = arith.maximumf %33, %34 : vector<256x8xf32>
    %36 = vector.shape_cast %35 : vector<256x8xf32> to vector<1x16x16x8xf32>
    %cst_65 = arith.constant 0.000000e+00 : f32
    %37 = vector.broadcast %cst_65 : f32 to vector<1x1x18x8xf32>
    %c0_66 = arith.constant 0 : index
    %c0_67 = arith.constant 0 : index
    %c0_68 = arith.constant 0 : index
    %c0_69 = arith.constant 0 : index
    %38 = vector.load %arg8[%c0_66, %c0_67, %c0_68, %c0_69] : memref<1x18x18x8xf32, #tpu.memory_space<vmem>>, vector<1x1x18x8xf32>
    tpu.vector_store %arg8[%c0_66, %c0_67, %c0_68, %c0_69], %37 {strides = array<i32>} : memref<1x18x18x8xf32, #tpu.memory_space<vmem>>, vector<1x1x18x8xf32>,
    %cst_70 = arith.constant 0.000000e+00 : f32
    %39 = vector.broadcast %cst_70 : f32 to vector<1x1x18x8xf32>
    %c0_71 = arith.constant 0 : index
    %c17_72 = arith.constant 17 : index
    %c0_73 = arith.constant 0 : index
    %c0_74 = arith.constant 0 : index
    %40 = vector.load %arg8[%c0_71, %c17_72, %c0_73, %c0_74] : memref<1x18x18x8xf32, #tpu.memory_space<vmem>>, vector<1x1x18x8xf32>
    tpu.vector_store %arg8[%c0_71, %c17_72, %c0_73, %c0_74], %39 {strides = array<i32>} : memref<1x18x18x8xf32, #tpu.memory_space<vmem>>, vector<1x1x18x8xf32>,
    %cst_75 = arith.constant 0.000000e+00 : f32
    %41 = vector.broadcast %cst_75 : f32 to vector<1x16x1x8xf32>
    %c0_76 = arith.constant 0 : index
    %c1_77 = arith.constant 1 : index
    %c0_78 = arith.constant 0 : index
    %c0_79 = arith.constant 0 : index
    %42 = vector.load %arg8[%c0_76, %c1_77, %c0_78, %c0_79] : memref<1x18x18x8xf32, #tpu.memory_space<vmem>>, vector<1x16x1x8xf32>
    tpu.vector_store %arg8[%c0_76, %c1_77, %c0_78, %c0_79], %41 {strides = array<i32>} : memref<1x18x18x8xf32, #tpu.memory_space<vmem>>, vector<1x16x1x8xf32>,
    %cst_80 = arith.constant 0.000000e+00 : f32
    %43 = vector.broadcast %cst_80 : f32 to vector<1x16x1x8xf32>
    %c0_81 = arith.constant 0 : index
    %c1_82 = arith.constant 1 : index
    %c17_83 = arith.constant 17 : index
    %c0_84 = arith.constant 0 : index
    %44 = vector.load %arg8[%c0_81, %c1_82, %c17_83, %c0_84] : memref<1x18x18x8xf32, #tpu.memory_space<vmem>>, vector<1x16x1x8xf32>
    tpu.vector_store %arg8[%c0_81, %c1_82, %c17_83, %c0_84], %43 {strides = array<i32>} : memref<1x18x18x8xf32, #tpu.memory_space<vmem>>, vector<1x16x1x8xf32>,
    %c0_85 = arith.constant 0 : index
    %c1_86 = arith.constant 1 : index
    %c1_87 = arith.constant 1 : index
    %c0_88 = arith.constant 0 : index
    %45 = vector.load %arg8[%c0_85, %c1_86, %c1_87, %c0_88] : memref<1x18x18x8xf32, #tpu.memory_space<vmem>>, vector<1x16x16x8xf32>
    tpu.vector_store %arg8[%c0_85, %c1_86, %c1_87, %c0_88], %36 {strides = array<i32>} : memref<1x18x18x8xf32, #tpu.memory_space<vmem>>, vector<1x16x16x8xf32>,
    %c0_89 = arith.constant 0 : index
    %c0_90 = arith.constant 0 : index
    %c0_91 = arith.constant 0 : index
    %c0_92 = arith.constant 0 : index
    %46 = vector.load %arg8[%c0_89, %c0_90, %c0_91, %c0_92] : memref<1x18x18x8xf32, #tpu.memory_space<vmem>>, vector<1x16x16x8xf32>
    %47 = vector.shape_cast %46 : vector<1x16x16x8xf32> to vector<256x8xf32>
    %c0_93 = arith.constant 0 : index
    %c0_94 = arith.constant 0 : index
    %c1_95 = arith.constant 1 : index
    %c0_96 = arith.constant 0 : index
    %48 = vector.load %arg8[%c0_93, %c0_94, %c1_95, %c0_96] : memref<1x18x18x8xf32, #tpu.memory_space<vmem>>, vector<1x16x16x8xf32>
    %49 = vector.shape_cast %48 : vector<1x16x16x8xf32> to vector<256x8xf32>
    %c0_97 = arith.constant 0 : index
    %c0_98 = arith.constant 0 : index
    %c2_99 = arith.constant 2 : index
    %c0_100 = arith.constant 0 : index
    %50 = vector.load %arg8[%c0_97, %c0_98, %c2_99, %c0_100] : memref<1x18x18x8xf32, #tpu.memory_space<vmem>>, vector<1x16x16x8xf32>
    %51 = vector.shape_cast %50 : vector<1x16x16x8xf32> to vector<256x8xf32>
    %c0_101 = arith.constant 0 : index
    %c1_102 = arith.constant 1 : index
    %c0_103 = arith.constant 0 : index
    %c0_104 = arith.constant 0 : index
    %52 = vector.load %arg8[%c0_101, %c1_102, %c0_103, %c0_104] : memref<1x18x18x8xf32, #tpu.memory_space<vmem>>, vector<1x16x16x8xf32>
    %53 = vector.shape_cast %52 : vector<1x16x16x8xf32> to vector<256x8xf32>
    %c0_105 = arith.constant 0 : index
    %c1_106 = arith.constant 1 : index
    %c1_107 = arith.constant 1 : index
    %c0_108 = arith.constant 0 : index
    %54 = vector.load %arg8[%c0_105, %c1_106, %c1_107, %c0_108] : memref<1x18x18x8xf32, #tpu.memory_space<vmem>>, vector<1x16x16x8xf32>
    %55 = vector.shape_cast %54 : vector<1x16x16x8xf32> to vector<256x8xf32>
    %c0_109 = arith.constant 0 : index
    %c1_110 = arith.constant 1 : index
    %c2_111 = arith.constant 2 : index
    %c0_112 = arith.constant 0 : index
    %56 = vector.load %arg8[%c0_109, %c1_110, %c2_111, %c0_112] : memref<1x18x18x8xf32, #tpu.memory_space<vmem>>, vector<1x16x16x8xf32>
    %57 = vector.shape_cast %56 : vector<1x16x16x8xf32> to vector<256x8xf32>
    %c0_113 = arith.constant 0 : index
    %c2_114 = arith.constant 2 : index
    %c0_115 = arith.constant 0 : index
    %c0_116 = arith.constant 0 : index
    %58 = vector.load %arg8[%c0_113, %c2_114, %c0_115, %c0_116] : memref<1x18x18x8xf32, #tpu.memory_space<vmem>>, vector<1x16x16x8xf32>
    %59 = vector.shape_cast %58 : vector<1x16x16x8xf32> to vector<256x8xf32>
    %c0_117 = arith.constant 0 : index
    %c2_118 = arith.constant 2 : index
    %c1_119 = arith.constant 1 : index
    %c0_120 = arith.constant 0 : index
    %60 = vector.load %arg8[%c0_117, %c2_118, %c1_119, %c0_120] : memref<1x18x18x8xf32, #tpu.memory_space<vmem>>, vector<1x16x16x8xf32>
    %61 = vector.shape_cast %60 : vector<1x16x16x8xf32> to vector<256x8xf32>
    %c0_121 = arith.constant 0 : index
    %c2_122 = arith.constant 2 : index
    %c2_123 = arith.constant 2 : index
    %c0_124 = arith.constant 0 : index
    %62 = vector.load %arg8[%c0_121, %c2_122, %c2_123, %c0_124] : memref<1x18x18x8xf32, #tpu.memory_space<vmem>>, vector<1x16x16x8xf32>
    %63 = vector.shape_cast %62 : vector<1x16x16x8xf32> to vector<256x8xf32>
    %64 = tpu.concatenate %47, %49, %51, %53, %55, %57, %59, %61, %63 in 1 : vector<256x8xf32>, vector<256x8xf32>, vector<256x8xf32>, vector<256x8xf32>, vector<256x8xf32>, vector<256x8xf32>, vector<256x8xf32>, vector<256x8xf32>, vector<256x8xf32> -> vector<256x72xf32>
    %c0_125 = arith.constant 0 : index
    %c0_126 = arith.constant 0 : index
    %65 = vector.load %arg4[%c0_125, %c0_126] : memref<72x8xf32, #tpu.memory_space<vmem>>, vector<72x8xf32>
    %cst_127 = arith.constant dense<0.000000e+00> : vector<256x8xf32>
    %66 = tpu.matmul %64, %65, %cst_127 {dimension_numbers = #tpu.dot_dimension_numbers<[1], [0], [0], [1], [0, 0, 1, 1], [], []>} : vector<256x72xf32>, vector<72x8xf32>, vector<256x8xf32> -> vector<256x8xf32>
    %c0_128 = arith.constant 0 : index
    %c0_129 = arith.constant 0 : index
    %67 = vector.load %arg5[%c0_128, %c0_129] : memref<1x8xf32, #tpu.memory_space<vmem>>, vector<1x8xf32>
    %68 = vector.broadcast %67 : vector<1x8xf32> to vector<256x8xf32>
    %69 = arith.addf %66, %68 : vector<256x8xf32>
    %cst_130 = arith.constant 0.000000e+00 : f32
    %70 = vector.broadcast %cst_130 : f32 to vector<256x8xf32>
    %71 = arith.maximumf %69, %70 : vector<256x8xf32>
    %72 = vector.shape_cast %71 : vector<256x8xf32> to vector<1x16x16x8xf32>
    %c0_131 = arith.constant 0 : index
    %c0_132 = arith.constant 0 : index
    %c0_133 = arith.constant 0 : index
    %c0_134 = arith.constant 0 : index
    %73 = vector.load %arg6[%c0_131, %c0_132, %c0_133, %c0_134] : memref<1x16x16x8xf32, #tpu.memory_space<vmem>>, vector<1x16x16x8xf32>
    tpu.vector_store %arg6[%c0_131, %c0_132, %c0_133, %c0_134], %72 {strides = array<i32>} : memref<1x16x16x8xf32, #tpu.memory_space<vmem>>, vector<1x16x16x8xf32>,
    return
  }
  func.func @transform_0(%arg0: i32) -> (i32, i32, i32, i32) {
    %c0_i32 = arith.constant 0 : i32
    %c0_i32_0 = arith.constant 0 : i32
    %c0_i32_1 = arith.constant 0 : i32
    %c0_i32_2 = arith.constant 0 : i32
    return %arg0, %c0_i32, %c0_i32_0, %c0_i32_1 : i32, i32, i32, i32
  }
  func.func @transform_1(%arg0: i32) -> (i32, i32) {
    %c0_i32 = arith.constant 0 : i32
    %c0_i32_0 = arith.constant 0 : i32
    %c0_i32_1 = arith.constant 0 : i32
    return %c0_i32, %c0_i32_0 : i32, i32
  }
  func.func @transform_2(%arg0: i32) -> (i32, i32) {
    %c0_i32 = arith.constant 0 : i32
    %c0_i32_0 = arith.constant 0 : i32
    %c0_i32_1 = arith.constant 0 : i32
    return %c0_i32, %c0_i32_0 : i32, i32
  }
  func.func @transform_3(%arg0: i32) -> (i32, i32) {
    %c0_i32 = arith.constant 0 : i32
    %c0_i32_0 = arith.constant 0 : i32
    %c0_i32_1 = arith.constant 0 : i32
    return %c0_i32, %c0_i32_0 : i32, i32
  }
  func.func @transform_4(%arg0: i32) -> (i32, i32) {
    %c0_i32 = arith.constant 0 : i32
    %c0_i32_0 = arith.constant 0 : i32
    %c0_i32_1 = arith.constant 0 : i32
    return %c0_i32, %c0_i32_0 : i32, i32
  }
  func.func @transform_5(%arg0: i32) -> (i32, i32, i32, i32) {
    %c0_i32 = arith.constant 0 : i32
    %c0_i32_0 = arith.constant 0 : i32
    %c0_i32_1 = arith.constant 0 : i32
    %c0_i32_2 = arith.constant 0 : i32
    return %arg0, %c0_i32, %c0_i32_0, %c0_i32_1 : i32, i32, i32, i32
  }
}

</mosaic_0001>

<llo_original>
// kernel: tpu_custom_call.1
$region0: #{tpu_custom_call.1}
  #allocation0 [shape = 'u32[]', space=smem, size = 0x4, offset = 0x4, fixed_abs, tag = 'smem constant byte address 0x4 - core index']
  #allocation1 [shape = 'u32[144,128]{1,0:T(1,128)}', space=vmem, size = 0x12000, scoped, tag = 'internal scratch']
  #allocation2 [shape = 'f32[1,18,18,4]{3,2,1,0:T(8,128)}', space=vmem, size = 0x36000, scoped, tag = 'scratch operand']
  #allocation3 [shape = 'f32[1,18,18,8]{3,2,1,0:T(8,128)}', space=vmem, size = 0x36000, scoped, tag = 'scratch operand']
  %s0 = inlined_call_operand.vmem [shape: f32[2,16,16,4], index: 0, kind: input, shape index: {}]
  %s1 = inlined_call_operand.vmem [shape: f32[36,8], index: 1, kind: input, shape index: {}]
  %s2 = inlined_call_operand.vmem [shape: f32[1,8], index: 2, kind: input, shape index: {}]
  %s3 = inlined_call_operand.vmem [shape: f32[72,8], index: 3, kind: input, shape index: {}]
  %s4 = inlined_call_operand.vmem [shape: f32[1,8], index: 4, kind: input, shape index: {}]
  %s5 = inlined_call_operand.vmem [shape: f32[2,16,16,8], index: 5, kind: output, shape index: {}]
  %s6 = sld [smem:[#allocation0]]
  $region53: #{tpu_custom_call.1} parent=0
    _
  %s8 = ssub.s32 1, %s6
  %s9 = scalar_select 0, %s8, %s6
  loop: start=0, step=1, limit=4
  $region2: #{tpu_custom_call.1} parent=0 // loop_pre_header
    _
  $region3: #{tpu_custom_call.1} parent=0 // loop_header
    %s11 = sphi 0, %s15
    %p12 = scmp.ge.s32.totalorder %s11, 4
    %s21 = sphi 0, %s23
    %s24 = sphi 0, %s21
    %s25 = sphi 0, %s24
    %s41 = sphi 0, %s25
    %s45 = sphi 0, %s45
    %s47 = sphi 0, %s45
    %s48 = sphi 0, %s47
    %s62 = sphi 0, %s48
    %s66 = sphi 0, %s66
    %s68 = sphi 0, %s66
    %s69 = sphi 0, %s68
    %s83 = sphi 0, %s69
    %s87 = sphi 0, %s87
    %s89 = sphi 0, %s87
    %s90 = sphi 0, %s89
    %s104 = sphi 0, %s90
    %s108 = sphi 0, %s108
    %s110 = sphi 0, %s108
    %s111 = sphi 0, %s110
    %s125 = sphi 0, %s111
    %s131 = sphi 0, %s133
    %s134 = sphi 0, %s131
    %s135 = sphi 0, %s134
    %s151 = sphi 0, %s135
  $region4: #{tpu_custom_call.1} parent=0 // loop_header_branch
    %14 = sbr.rel (%p12) target = $region8
  $region5: #{tpu_custom_call.1} parent=0 // loop_body
    %s16 = ssub.s32 %s11, 1
    %s17 = ssub.s32 %s11, 2
    %s18 = sadd.s32 %s11, 1
    %s19 = ssub.s32 %s11, %s18
    %p20 = scmp.eq.s32.totalorder %s19, 0
    %s22 = sadd.s32 %s21, 1
    %s23 = scalar_select %p20, %s21, %s22
    %p26 = pneg %p20
    %p27 = scmp.eq.s32.totalorder %s11, 1
    %p28 = por %p26, %p27
    %p29 = scmp.ne.s32.totalorder %s21, %s24
    %p30 = scmp.eq.s32.totalorder %s11, 0
    %p31 = por %p29, %p30
    %p32 = scmp.ne.s32.totalorder %s21, %s24
    %p33 = scmp.eq.s32.totalorder %s16, 1
    %p34 = por %p32, %p33
    %p35 = scmp.ne.s32.totalorder %s24, %s25
    %p36 = scmp.eq.s32.totalorder %s16, 0
    %p37 = por %p35, %p36
    %p38 = scmp.ne.s32.totalorder %s24, %s25
    %p39 = scmp.eq.s32.totalorder %s17, 1
    %p40 = por %p38, %p39
    %p42 = scmp.ne.s32.totalorder %s25, %s41
    %p43 = scmp.eq.s32.totalorder %s17, 0
    %p44 = por %p42, %p43
    %s46 = sadd.s32 %s45, 1
    %p49 = scmp.eq.s32.totalorder %s11, 1
    %p50 = scmp.ne.s32.totalorder %s45, %s47
    %p51 = scmp.eq.s32.totalorder %s11, 0
    %p52 = por %p50, %p51
    %p53 = scmp.ne.s32.totalorder %s45, %s47
    %p54 = scmp.eq.s32.totalorder %s16, 1
    %p55 = por %p53, %p54
    %p56 = scmp.ne.s32.totalorder %s47, %s48
    %p57 = scmp.eq.s32.totalorder %s16, 0
    %p58 = por %p56, %p57
    %p59 = scmp.ne.s32.totalorder %s47, %s48
    %p60 = scmp.eq.s32.totalorder %s17, 1
    %p61 = por %p59, %p60
    %p63 = scmp.ne.s32.totalorder %s48, %s62
    %p64 = scmp.eq.s32.totalorder %s17, 0
    %p65 = por %p63, %p64
    %s67 = sadd.s32 %s66, 1
    %p70 = scmp.eq.s32.totalorder %s11, 1
    %p71 = scmp.ne.s32.totalorder %s66, %s68
    %p72 = scmp.eq.s32.totalorder %s11, 0
    %p73 = por %p71, %p72
    %p74 = scmp.ne.s32.totalorder %s66, %s68
    %p75 = scmp.eq.s32.totalorder %s16, 1
    %p76 = por %p74, %p75
    %p77 = scmp.ne.s32.totalorder %s68, %s69
    %p78 = scmp.eq.s32.totalorder %s16, 0
    %p79 = por %p77, %p78
    %p80 = scmp.ne.s32.totalorder %s68, %s69
    %p81 = scmp.eq.s32.totalorder %s17, 1
    %p82 = por %p80, %p81
    %p84 = scmp.ne.s32.totalorder %s69, %s83
    %p85 = scmp.eq.s32.totalorder %s17, 0
    %p86 = por %p84, %p85
    %s88 = sadd.s32 %s87, 1
    %p91 = scmp.eq.s32.totalorder %s11, 1
    %p92 = scmp.ne.s32.totalorder %s87, %s89
    %p93 = scmp.eq.s32.totalorder %s11, 0
    %p94 = por %p92, %p93
    %p95 = scmp.ne.s32.totalorder %s87, %s89
    %p96 = scmp.eq.s32.totalorder %s16, 1
    %p97 = por %p95, %p96
    %p98 = scmp.ne.s32.totalorder %s89, %s90
    %p99 = scmp.eq.s32.totalorder %s16, 0
    %p100 = por %p98, %p99
    %p101 = scmp.ne.s32.totalorder %s89, %s90
    %p102 = scmp.eq.s32.totalorder %s17, 1
    %p103 = por %p101, %p102
    %p105 = scmp.ne.s32.totalorder %s90, %s104
    %p106 = scmp.eq.s32.totalorder %s17, 0
    %p107 = por %p105, %p106
    %s109 = sadd.s32 %s108, 1
    %p112 = scmp.eq.s32.totalorder %s11, 1
    %p113 = scmp.ne.s32.totalorder %s108, %s110
    %p114 = scmp.eq.s32.totalorder %s11, 0
    %p115 = por %p113, %p114
    %p116 = scmp.ne.s32.totalorder %s108, %s110
    %p117 = scmp.eq.s32.totalorder %s16, 1
    %p118 = por %p116, %p117
    %p119 = scmp.ne.s32.totalorder %s110, %s111
    %p120 = scmp.eq.s32.totalorder %s16, 0
    %p121 = por %p119, %p120
    %p122 = scmp.ne.s32.totalorder %s110, %s111
    %p123 = scmp.eq.s32.totalorder %s17, 1
    %p124 = por %p122, %p123
    %p126 = scmp.ne.s32.totalorder %s111, %s125
    %p127 = scmp.eq.s32.totalorder %s17, 0
    %p128 = por %p126, %p127
    %s129 = ssub.s32 %s11, %s18
    %p130 = scmp.eq.s32.totalorder %s129, 0
    %s132 = sadd.s32 %s131, 1
    %s133 = scalar_select %p130, %s131, %s132
    %p136 = pneg %p130
    %p137 = scmp.eq.s32.totalorder %s11, 1
    %p138 = por %p136, %p137
    %p139 = scmp.ne.s32.totalorder %s131, %s134
    %p140 = scmp.eq.s32.totalorder %s11, 0
    %p141 = por %p139, %p140
    %p142 = scmp.ne.s32.totalorder %s131, %s134
    %p143 = scmp.eq.s32.totalorder %s16, 1
    %p144 = por %p142, %p143
    %p145 = scmp.ne.s32.totalorder %s134, %s135
    %p146 = scmp.eq.s32.totalorder %s16, 0
    %p147 = por %p145, %p146
    %p148 = scmp.ne.s32.totalorder %s134, %s135
    %p149 = scmp.eq.s32.totalorder %s17, 1
    %p150 = por %p148, %p149
    %p152 = scmp.ne.s32.totalorder %s135, %s151
    %p153 = scmp.eq.s32.totalorder %s17, 0
    %p154 = por %p152, %p153
    %p155 = scmp.le.s32.totalorder 1, %s11
    %p156 = scmp.lt.s32.totalorder %s11, 3
    %p157 = pnand %p155, %p156
    %p158 = pneg %p157
    // Predicated region
    $region9: #{tpu_custom_call.1} parent=5 // pred_check
      _
    $region10: #{tpu_custom_call.1} parent=5 // pred_check_branch
      %160 = sbr.rel (%p157) target = $region12
    $region11: #{tpu_custom_call.1} parent=5 // pred_region
      %s161 = ssub.s32 %s11, 1
      // Predicated region
      $region13: #{tpu_custom_call.1} parent=11 // pred_check
        %p162 = pneg %p58
      $region14: #{tpu_custom_call.1} parent=11 // pred_check_branch
        %164 = sbr.rel (%p162) target = $region16
      $region15: #{tpu_custom_call.1} parent=11 // pred_region
        _
      $region16: #{tpu_custom_call.1} parent=11 // pred_fallthru
        _
      // Predicated region
      $region17: #{tpu_custom_call.1} parent=11 // pred_check
        %p165 = pneg %p79
      $region18: #{tpu_custom_call.1} parent=11 // pred_check_branch
        %167 = sbr.rel (%p165) target = $region20
      $region19: #{tpu_custom_call.1} parent=11 // pred_region
        _
      $region20: #{tpu_custom_call.1} parent=11 // pred_fallthru
        _
      // Predicated region
      $region21: #{tpu_custom_call.1} parent=11 // pred_check
        %p168 = pneg %p100
      $region22: #{tpu_custom_call.1} parent=11 // pred_check_branch
        %170 = sbr.rel (%p168) target = $region24
      $region23: #{tpu_custom_call.1} parent=11 // pred_region
        _
      $region24: #{tpu_custom_call.1} parent=11 // pred_fallthru
        _
      // Predicated region
      $region25: #{tpu_custom_call.1} parent=11 // pred_check
        %p171 = pneg %p121
      $region26: #{tpu_custom_call.1} parent=11 // pred_check_branch
        %173 = sbr.rel (%p171) target = $region28
      $region27: #{tpu_custom_call.1} parent=11 // pred_region
        _
      $region28: #{tpu_custom_call.1} parent=11 // pred_fallthru
        _
    $region12: #{tpu_custom_call.1} parent=5 // pred_fallthru
      _
    %p174 = scmp.lt.s32.totalorder %s11, 2
    // Predicated region
    $region29: #{tpu_custom_call.1} parent=5 // pred_check
      %p175 = pneg %p174
    $region30: #{tpu_custom_call.1} parent=5 // pred_check_branch
      %177 = sbr.rel (%p175) target = $region32
    $region31: #{tpu_custom_call.1} parent=5 // pred_region
      // Predicated region
      $region33: #{tpu_custom_call.1} parent=31 // pred_check
        %p178 = pneg %p31
      $region34: #{tpu_custom_call.1} parent=31 // pred_check_branch
        %180 = sbr.rel (%p178) target = $region36
      $region35: #{tpu_custom_call.1} parent=31 // pred_region
        %p181 = scmp.lt.s32.totalorder %s11, 1
        %s182 = scalar_select %p181, %s11, 1
        %s183 = smul.addr %s182, 32
        %s184 = smul.addr %s183, 8
        %s185 = scalar_lea.vmem %s0, %s184
      $region36: #{tpu_custom_call.1} parent=31 // pred_fallthru
        _
    $region32: #{tpu_custom_call.1} parent=5 // pred_fallthru
      _
    %p186 = scmp.le.s32.totalorder 1, %s11
    %p187 = scmp.lt.s32.totalorder %s11, 3
    %p188 = pnand %p186, %p187
    %p189 = pneg %p188
    // Predicated region
    $region37: #{tpu_custom_call.1} parent=5 // pred_check
      _
    $region38: #{tpu_custom_call.1} parent=5 // pred_check_branch
      %191 = sbr.rel (%p188) target = $region40
    $region39: #{tpu_custom_call.1} parent=5 // pred_region
      %s192 = ssub.s32 %s11, 1
      %p193 = scmp.lt.s32.totalorder %s16, 1
      %s194 = scalar_select %p193, %s16, 1
      %s195 = smul.addr %s194, 32
      %s196 = smul.addr %s195, 8
      %s197 = scalar_lea.vmem %s0, %s196
      %p198 = pneg %p37
      %p199 = pneg %p34
      %p200 = pneg %p58
      %p201 = pneg %p55
      %p202 = pneg %p79
      %p203 = pneg %p76
      %p204 = pneg %p100
      %p205 = pneg %p97
      %p206 = pneg %p121
      %p207 = pneg %p118
      %p208 = pneg %p147
      %p209 = pneg %p144
      %p210 = scmp.lt.s32.totalorder %s16, 1
      %s211 = scalar_select %p210, %s16, 1
      %s212 = smul.addr %s211, 32
      %s213 = smul.addr %s212, 8
      %s214 = scalar_lea.vmem %s5, %s213
      %p215 = scmp.lt.s32.totalorder %s16, 1
      %s216 = scalar_select %p215, %s16, 1
      %s217 = smul.addr %s216, 32
      %s218 = smul.addr %s217, 8
      %s219 = scalar_lea.vmem %s0, %s218
      %p220 = scmp.lt.s32.totalorder %s16, 1
      %s221 = scalar_select %p220, %s16, 1
      %s222 = smul.addr %s221, 32
      %s223 = smul.addr %s222, 8
      %s224 = scalar_lea.vmem %s5, %s223
      %v225 = vld [vmem:[%s219] sm:$0xff]
      %v226 = vld [vmem:[%s219 + $0x8] sm:$0xff]
      %v227 = vld [vmem:[%s219 + $0x10] sm:$0xff]
      %v228 = vld [vmem:[%s219 + $0x18] sm:$0xff]
      %v229 = vld [vmem:[%s219 + $0x20] sm:$0xff]
      %v230 = vld [vmem:[%s219 + $0x28] sm:$0xff]
      %v231 = vld [vmem:[%s219 + $0x30] sm:$0xff]
      %v232 = vld [vmem:[%s219 + $0x38] sm:$0xff]
      %v233 = vld [vmem:[%s219 + $0x40] sm:$0xff]
      %v234 = vld [vmem:[%s219 + $0x48] sm:$0xff]
      %v235 = vld [vmem:[%s219 + $0x50] sm:$0xff]
      %v236 = vld [vmem:[%s219 + $0x58] sm:$0xff]
      %v237 = vld [vmem:[%s219 + $0x60] sm:$0xff]
      %v238 = vld [vmem:[%s219 + $0x68] sm:$0xff]
      %v239 = vld [vmem:[%s219 + $0x70] sm:$0xff]
      %v240 = vld [vmem:[%s219 + $0x78] sm:$0xff]
      %v241 = vld [vmem:[%s219 + $0x80] sm:$0xff]
      %v242 = vld [vmem:[%s219 + $0x88] sm:$0xff]
      %v243 = vld [vmem:[%s219 + $0x90] sm:$0xff]
      %v244 = vld [vmem:[%s219 + $0x98] sm:$0xff]
      %v245 = vld [vmem:[%s219 + $0xa0] sm:$0xff]
      %v246 = vld [vmem:[%s219 + $0xa8] sm:$0xff]
      %v247 = vld [vmem:[%s219 + $0xb0] sm:$0xff]
      %v248 = vld [vmem:[%s219 + $0xb8] sm:$0xff]
      %v249 = vld [vmem:[%s219 + $0xc0] sm:$0xff]
      %v250 = vld [vmem:[%s219 + $0xc8] sm:$0xff]
      %v251 = vld [vmem:[%s219 + $0xd0] sm:$0xff]
      %v252 = vld [vmem:[%s219 + $0xd8] sm:$0xff]
      %v253 = vld [vmem:[%s219 + $0xe0] sm:$0xff]
      %v254 = vld [vmem:[%s219 + $0xe8] sm:$0xff]
      %v255 = vld [vmem:[%s219 + $0xf0] sm:$0xff]
      %v256 = vld [vmem:[%s219 + $0xf8] sm:$0xff]
      %vm257 = vcmask 31744
      %258 = vst.msk [vmem:[#allocation2] sm:$0xff] %vm257, 0.0
      %259 = vst.msk [vmem:[#allocation2 + $0x8] sm:$0xff] %vm257, 0.0
      %vm260 = vcmask 25600
      %261 = vst.msk [vmem:[#allocation2 + $0x10] sm:$0x3] %vm260, 0.0
      %s262 = scalar_lea.vmem [#allocation2], 408
      %263 = vst.msk [vmem:[%s262] sm:$0xff] %vm257, 0.0
      %264 = vst.msk [vmem:[%s262 + $0x8] sm:$0xff] %vm257, 0.0
      %265 = vst.msk [vmem:[%s262 + $0x10] sm:$0x3] %vm260, 0.0
      %s266 = scalar_lea.vmem [#allocation2], 24
      %vm267 = vcmask 24576
      %268 = vst.msk [vmem:[%s266] sm:$0x1] %vm267, 0.0
      %269 = vst.msk [vmem:[%s266 + $0x18] sm:$0x1] %vm267, 0.0
      %270 = vst.msk [vmem:[%s266 + $0x30] sm:$0x1] %vm267, 0.0
      %271 = vst.msk [vmem:[%s266 + $0x48] sm:$0x1] %vm267, 0.0
      %272 = vst.msk [vmem:[%s266 + $0x60] sm:$0x1] %vm267, 0.0
      %273 = vst.msk [vmem:[%s266 + $0x78] sm:$0x1] %vm267, 0.0
      %274 = vst.msk [vmem:[%s266 + $0x90] sm:$0x1] %vm267, 0.0
      %275 = vst.msk [vmem:[%s266 + $0xa8] sm:$0x1] %vm267, 0.0
      %276 = vst.msk [vmem:[%s266 + $0xc0] sm:$0x1] %vm267, 0.0
      %277 = vst.msk [vmem:[%s266 + $0xd8] sm:$0x1] %vm267, 0.0
      %278 = vst.msk [vmem:[%s266 + $0xf0] sm:$0x1] %vm267, 0.0
      %279 = vst.msk [vmem:[%s266 + $0x108] sm:$0x1] %vm267, 0.0
      %280 = vst.msk [vmem:[%s266 + $0x120] sm:$0x1] %vm267, 0.0
      %281 = vst.msk [vmem:[%s266 + $0x138] sm:$0x1] %vm267, 0.0
      %282 = vst.msk [vmem:[%s266 + $0x150] sm:$0x1] %vm267, 0.0
      %283 = vst.msk [vmem:[%s266 + $0x168] sm:$0x1] %vm267, 0.0
      %284 = vst.msk [vmem:[%s266 + $0x11] sm:$0x1] %vm267, 0.0
      %285 = vst.msk [vmem:[%s266 + $0x29] sm:$0x1] %vm267, 0.0
      %286 = vst.msk [vmem:[%s266 + $0x41] sm:$0x1] %vm267, 0.0
      %287 = vst.msk [vmem:[%s266 + $0x59] sm:$0x1] %vm267, 0.0
      %288 = vst.msk [vmem:[%s266 + $0x71] sm:$0x1] %vm267, 0.0
      %289 = vst.msk [vmem:[%s266 + $0x89] sm:$0x1] %vm267, 0.0
      %290 = vst.msk [vmem:[%s266 + $0xa1] sm:$0x1] %vm267, 0.0
      %291 = vst.msk [vmem:[%s266 + $0xb9] sm:$0x1] %vm267, 0.0
      %292 = vst.msk [vmem:[%s266 + $0xd1] sm:$0x1] %vm267, 0.0
      %293 = vst.msk [vmem:[%s266 + $0xe9] sm:$0x1] %vm267, 0.0
      %294 = vst.msk [vmem:[%s266 + $0x101] sm:$0x1] %vm267, 0.0
      %295 = vst.msk [vmem:[%s266 + $0x119] sm:$0x1] %vm267, 0.0
      %296 = vst.msk [vmem:[%s266 + $0x131] sm:$0x1] %vm267, 0.0
      %297 = vst.msk [vmem:[%s266 + $0x149] sm:$0x1] %vm267, 0.0
      %298 = vst.msk [vmem:[%s266 + $0x161] sm:$0x1] %vm267, 0.0
      %299 = vst.msk [vmem:[%s266 + $0x179] sm:$0x1] %vm267, 0.0
      %300 = vst.msk [vmem:[%s266 + $0x1] sm:$0xff] %vm257, %v225
      %301 = vst.msk [vmem:[%s266 + $0x9] sm:$0xff] %vm257, %v226
      %302 = vst.msk [vmem:[%s266 + $0x19] sm:$0xff] %vm257, %v227
      %303 = vst.msk [vmem:[%s266 + $0x21] sm:$0xff] %vm257, %v228
      %304 = vst.msk [vmem:[%s266 + $0x31] sm:$0xff] %vm257, %v229
      %305 = vst.msk [vmem:[%s266 + $0x39] sm:$0xff] %vm257, %v230
      %306 = vst.msk [vmem:[%s266 + $0x49] sm:$0xff] %vm257, %v231
      %307 = vst.msk [vmem:[%s266 + $0x51] sm:$0xff] %vm257, %v232
      %308 = vst.msk [vmem:[%s266 + $0x61] sm:$0xff] %vm257, %v233
      %309 = vst.msk [vmem:[%s266 + $0x69] sm:$0xff] %vm257, %v234
      %310 = vst.msk [vmem:[%s266 + $0x79] sm:$0xff] %vm257, %v235
      %311 = vst.msk [vmem:[%s266 + $0x81] sm:$0xff] %vm257, %v236
      %312 = vst.msk [vmem:[%s266 + $0x91] sm:$0xff] %vm257, %v237
      %313 = vst.msk [vmem:[%s266 + $0x99] sm:$0xff] %vm257, %v238
      %314 = vst.msk [vmem:[%s266 + $0xa9] sm:$0xff] %vm257, %v239
      %315 = vst.msk [vmem:[%s266 + $0xb1] sm:$0xff] %vm257, %v240
      %316 = vst.msk [vmem:[%s266 + $0xc1] sm:$0xff] %vm257, %v241
      %317 = vst.msk [vmem:[%s266 + $0xc9] sm:$0xff] %vm257, %v242
      %318 = vst.msk [vmem:[%s266 + $0xd9] sm:$0xff] %vm257, %v243
      %319 = vst.msk [vmem:[%s266 + $0xe1] sm:$0xff] %vm257, %v244
      %320 = vst.msk [vmem:[%s266 + $0xf1] sm:$0xff] %vm257, %v245
      %321 = vst.msk [vmem:[%s266 + $0xf9] sm:$0xff] %vm257, %v246
      %322 = vst.msk [vmem:[%s266 + $0x109] sm:$0xff] %vm257, %v247
      %323 = vst.msk [vmem:[%s266 + $0x111] sm:$0xff] %vm257, %v248
      %324 = vst.msk [vmem:[%s266 + $0x121] sm:$0xff] %vm257, %v249
      %325 = vst.msk [vmem:[%s266 + $0x129] sm:$0xff] %vm257, %v250
      %326 = vst.msk [vmem:[%s266 + $0x139] sm:$0xff] %vm257, %v251
      %327 = vst.msk [vmem:[%s266 + $0x141] sm:$0xff] %vm257, %v252
      %328 = vst.msk [vmem:[%s266 + $0x151] sm:$0xff] %vm257, %v253
      %329 = vst.msk [vmem:[%s266 + $0x159] sm:$0xff] %vm257, %v254
      %330 = vst.msk [vmem:[%s266 + $0x169] sm:$0xff] %vm257, %v255
      %331 = vst.msk [vmem:[%s266 + $0x171] sm:$0xff] %vm257, %v256
      %v332 = vld [vmem:[#allocation2] sm:$0xff]
      %v333 = vld [vmem:[#allocation2 + $0x8] sm:$0xff]
      %v334 = vld [vmem:[#allocation2 + $0x18] sm:$0xff]
      %v335 = vld [vmem:[#allocation2 + $0x20] sm:$0xff]
      %v336 = vld [vmem:[#allocation2 + $0x30] sm:$0xff]
      %v337 = vld [vmem:[#allocation2 + $0x38] sm:$0xff]
      %v338 = vld [vmem:[#allocation2 + $0x48] sm:$0xff]
      %v339 = vld [vmem:[#allocation2 + $0x50] sm:$0xff]
      %v340 = vld [vmem:[#allocation2 + $0x60] sm:$0xff]
      %v341 = vld [vmem:[#allocation2 + $0x68] sm:$0xff]
      %v342 = vld [vmem:[#allocation2 + $0x78] sm:$0xff]
      %v343 = vld [vmem:[#allocation2 + $0x80] sm:$0xff]
      %v344 = vld [vmem:[#allocation2 + $0x90] sm:$0xff]
      %v345 = vld [vmem:[#allocation2 + $0x98] sm:$0xff]
      %v346 = vld [vmem:[#allocation2 + $0xa8] sm:$0xff]
      %v347 = vld [vmem:[#allocation2 + $0xb0] sm:$0xff]
      %v348 = vld [vmem:[#allocation2 + $0xc0] sm:$0xff]
      %v349 = vld [vmem:[#allocation2 + $0xc8] sm:$0xff]
      %v350 = vld [vmem:[#allocation2 + $0xd8] sm:$0xff]
      %v351 = vld [vmem:[#allocation2 + $0xe0] sm:$0xff]
      %v352 = vld [vmem:[#allocation2 + $0xf0] sm:$0xff]
      %v353 = vld [vmem:[#allocation2 + $0xf8] sm:$0xff]
      %v354 = vld [vmem:[#allocation2 + $0x108] sm:$0xff]
      %v355 = vld [vmem:[#allocation2 + $0x110] sm:$0xff]
      %v356 = vld [vmem:[#allocation2 + $0x120] sm:$0xff]
      %v357 = vld [vmem:[#allocation2 + $0x128] sm:$0xff]
      %v358 = vld [vmem:[#allocation2 + $0x138] sm:$0xff]
      %v359 = vld [vmem:[#allocation2 + $0x140] sm:$0xff]
      %v360 = vld [vmem:[#allocation2 + $0x150] sm:$0xff]
      %v361 = vld [vmem:[#allocation2 + $0x158] sm:$0xff]
      %v362 = vld [vmem:[#allocation2 + $0x168] sm:$0xff]
      %v363 = vld [vmem:[#allocation2 + $0x170] sm:$0xff]
      %v364 = vld [vmem:[#allocation2 + $0x1] sm:$0xff]
      %v365 = vld [vmem:[#allocation2 + $0x9] sm:$0xff]
      %v366 = vld [vmem:[#allocation2 + $0x19] sm:$0xff]
      %v367 = vld [vmem:[#allocation2 + $0x21] sm:$0xff]
      %v368 = vld [vmem:[#allocation2 + $0x31] sm:$0xff]
      %v369 = vld [vmem:[#allocation2 + $0x39] sm:$0xff]
      %v370 = vld [vmem:[#allocation2 + $0x49] sm:$0xff]
      %v371 = vld [vmem:[#allocation2 + $0x51] sm:$0xff]
      %v372 = vld [vmem:[#allocation2 + $0x61] sm:$0xff]
      %v373 = vld [vmem:[#allocation2 + $0x69] sm:$0xff]
      %v374 = vld [vmem:[#allocation2 + $0x79] sm:$0xff]
      %v375 = vld [vmem:[#allocation2 + $0x81] sm:$0xff]
      %v376 = vld [vmem:[#allocation2 + $0x91] sm:$0xff]
      %v377 = vld [vmem:[#allocation2 + $0x99] sm:$0xff]
      %v378 = vld [vmem:[#allocation2 + $0xa9] sm:$0xff]
      %v379 = vld [vmem:[#allocation2 + $0xb1] sm:$0xff]
      %v380 = vld [vmem:[#allocation2 + $0xc1] sm:$0xff]
      %v381 = vld [vmem:[#allocation2 + $0xc9] sm:$0xff]
      %v382 = vld [vmem:[#allocation2 + $0xd9] sm:$0xff]
      %v383 = vld [vmem:[#allocation2 + $0xe1] sm:$0xff]
      %v384 = vld [vmem:[#allocation2 + $0xf1] sm:$0xff]
      %v385 = vld [vmem:[#allocation2 + $0xf9] sm:$0xff]
      %v386 = vld [vmem:[#allocation2 + $0x109] sm:$0xff]
      %v387 = vld [vmem:[#allocation2 + $0x111] sm:$0xff]
      %v388 = vld [vmem:[#allocation2 + $0x121] sm:$0xff]
      %v389 = vld [vmem:[#allocation2 + $0x129] sm:$0xff]
      %v390 = vld [vmem:[#allocation2 + $0x139] sm:$0xff]
      %v391 = vld [vmem:[#allocation2 + $0x141] sm:$0xff]
      %v392 = vld [vmem:[#allocation2 + $0x151] sm:$0xff]
      %v393 = vld [vmem:[#allocation2 + $0x159] sm:$0xff]
      %v394 = vld [vmem:[#allocation2 + $0x169] sm:$0xff]
      %v395 = vld [vmem:[#allocation2 + $0x171] sm:$0xff]
      %v396 = vld [vmem:[#allocation2 + $0x2] sm:$0xff]
      %v397 = vld [vmem:[#allocation2 + $0xa] sm:$0xff]
      %v398 = vld [vmem:[#allocation2 + $0x1a] sm:$0xff]
      %v399 = vld [vmem:[#allocation2 + $0x22] sm:$0xff]
      %v400 = vld [vmem:[#allocation2 + $0x32] sm:$0xff]
      %v401 = vld [vmem:[#allocation2 + $0x3a] sm:$0xff]
      %v402 = vld [vmem:[#allocation2 + $0x4a] sm:$0xff]
      %v403 = vld [vmem:[#allocation2 + $0x52] sm:$0xff]
      %v404 = vld [vmem:[#allocation2 + $0x62] sm:$0xff]
      %v405 = vld [vmem:[#allocation2 + $0x6a] sm:$0xff]
      %v406 = vld [vmem:[#allocation2 + $0x7a] sm:$0xff]
      %v407 = vld [vmem:[#allocation2 + $0x82] sm:$0xff]
      %v408 = vld [vmem:[#allocation2 + $0x92] sm:$0xff]
      %v409 = vld [vmem:[#allocation2 + $0x9a] sm:$0xff]
      %v410 = vld [vmem:[#allocation2 + $0xaa] sm:$0xff]
      %v411 = vld [vmem:[#allocation2 + $0xb2] sm:$0xff]
      %v412 = vld [vmem:[#allocation2 + $0xc2] sm:$0xff]
      %v413 = vld [vmem:[#allocation2 + $0xca] sm:$0xff]
      %v414 = vld [vmem:[#allocation2 + $0xda] sm:$0xff]
      %v415 = vld [vmem:[#allocation2 + $0xe2] sm:$0xff]
      %v416 = vld [vmem:[#allocation2 + $0xf2] sm:$0xff]
      %v417 = vld [vmem:[#allocation2 + $0xfa] sm:$0xff]
      %v418 = vld [vmem:[#allocation2 + $0x10a] sm:$0xff]
      %v419 = vld [vmem:[#allocation2 + $0x112] sm:$0xff]
      %v420 = vld [vmem:[#allocation2 + $0x122] sm:$0xff]
      %v421 = vld [vmem:[#allocation2 + $0x12a] sm:$0xff]
      %v422 = vld [vmem:[#allocation2 + $0x13a] sm:$0xff]
      %v423 = vld [vmem:[#allocation2 + $0x142] sm:$0xff]
      %v424 = vld [vmem:[#allocation2 + $0x152] sm:$0xff]
      %v425 = vld [vmem:[#allocation2 + $0x15a] sm:$0xff]
      %v426 = vld [vmem:[#allocation2 + $0x16a] sm:$0xff]
      %v427 = vld [vmem:[#allocation2 + $0x172] sm:$0xff]
      %v428 = vld [vmem:[%s266] sm:$0xff]
      %v429 = vld [vmem:[%s266 + $0x8] sm:$0xff]
      %v430 = vld [vmem:[%s266 + $0x18] sm:$0xff]
      %v431 = vld [vmem:[%s266 + $0x20] sm:$0xff]
      %v432 = vld [vmem:[%s266 + $0x30] sm:$0xff]
      %v433 = vld [vmem:[%s266 + $0x38] sm:$0xff]
      %v434 = vld [vmem:[%s266 + $0x48] sm:$0xff]
      %v435 = vld [vmem:[%s266 + $0x50] sm:$0xff]
      %v436 = vld [vmem:[%s266 + $0x60] sm:$0xff]
      %v437 = vld [vmem:[%s266 + $0x68] sm:$0xff]
      %v438 = vld [vmem:[%s266 + $0x78] sm:$0xff]
      %v439 = vld [vmem:[%s266 + $0x80] sm:$0xff]
      %v440 = vld [vmem:[%s266 + $0x90] sm:$0xff]
      %v441 = vld [vmem:[%s266 + $0x98] sm:$0xff]
      %v442 = vld [vmem:[%s266 + $0xa8] sm:$0xff]
      %v443 = vld [vmem:[%s266 + $0xb0] sm:$0xff]
      %v444 = vld [vmem:[%s266 + $0xc0] sm:$0xff]
      %v445 = vld [vmem:[%s266 + $0xc8] sm:$0xff]
      %v446 = vld [vmem:[%s266 + $0xd8] sm:$0xff]
      %v447 = vld [vmem:[%s266 + $0xe0] sm:$0xff]
      %v448 = vld [vmem:[%s266 + $0xf0] sm:$0xff]
      %v449 = vld [vmem:[%s266 + $0xf8] sm:$0xff]
      %v450 = vld [vmem:[%s266 + $0x108] sm:$0xff]
      %v451 = vld [vmem:[%s266 + $0x110] sm:$0xff]
      %v452 = vld [vmem:[%s266 + $0x120] sm:$0xff]
      %v453 = vld [vmem:[%s266 + $0x128] sm:$0xff]
      %v454 = vld [vmem:[%s266 + $0x138] sm:$0xff]
      %v455 = vld [vmem:[%s266 + $0x140] sm:$0xff]
      %v456 = vld [vmem:[%s266 + $0x150] sm:$0xff]
      %v457 = vld [vmem:[%s266 + $0x158] sm:$0xff]
      %v458 = vld [vmem:[%s266 + $0x168] sm:$0xff]
      %v459 = vld [vmem:[%s266 + $0x170] sm:$0xff]
      %v460 = vld [vmem:[%s266 + $0x1] sm:$0xff]
      %v461 = vld [vmem:[%s266 + $0x9] sm:$0xff]
      %v462 = vld [vmem:[%s266 + $0x19] sm:$0xff]
      %v463 = vld [vmem:[%s266 + $0x21] sm:$0xff]
      %v464 = vld [vmem:[%s266 + $0x31] sm:$0xff]
      %v465 = vld [vmem:[%s266 + $0x39] sm:$0xff]
      %v466 = vld [vmem:[%s266 + $0x49] sm:$0xff]
      %v467 = vld [vmem:[%s266 + $0x51] sm:$0xff]
      %v468 = vld [vmem:[%s266 + $0x61] sm:$0xff]
      %v469 = vld [vmem:[%s266 + $0x69] sm:$0xff]
      %v470 = vld [vmem:[%s266 + $0x79] sm:$0xff]
      %v471 = vld [vmem:[%s266 + $0x81] sm:$0xff]
      %v472 = vld [vmem:[%s266 + $0x91] sm:$0xff]
      %v473 = vld [vmem:[%s266 + $0x99] sm:$0xff]
      %v474 = vld [vmem:[%s266 + $0xa9] sm:$0xff]
      %v475 = vld [vmem:[%s266 + $0xb1] sm:$0xff]
      %v476 = vld [vmem:[%s266 + $0xc1] sm:$0xff]
      %v477 = vld [vmem:[%s266 + $0xc9] sm:$0xff]
      %v478 = vld [vmem:[%s266 + $0xd9] sm:$0xff]
      %v479 = vld [vmem:[%s266 + $0xe1] sm:$0xff]
      %v480 = vld [vmem:[%s266 + $0xf1] sm:$0xff]
      %v481 = vld [vmem:[%s266 + $0xf9] sm:$0xff]
      %v482 = vld [vmem:[%s266 + $0x109] sm:$0xff]
      %v483 = vld [vmem:[%s266 + $0x111] sm:$0xff]
      %v484 = vld [vmem:[%s266 + $0x121] sm:$0xff]
      %v485 = vld [vmem:[%s266 + $0x129] sm:$0xff]
      %v486 = vld [vmem:[%s266 + $0x139] sm:$0xff]
      %v487 = vld [vmem:[%s266 + $0x141] sm:$0xff]
      %v488 = vld [vmem:[%s266 + $0x151] sm:$0xff]
      %v489 = vld [vmem:[%s266 + $0x159] sm:$0xff]
      %v490 = vld [vmem:[%s266 + $0x169] sm:$0xff]
      %v491 = vld [vmem:[%s266 + $0x171] sm:$0xff]
      %v492 = vld [vmem:[%s266 + $0x2] sm:$0xff]
      %v493 = vld [vmem:[%s266 + $0xa] sm:$0xff]
      %v494 = vld [vmem:[%s266 + $0x1a] sm:$0xff]
      %v495 = vld [vmem:[%s266 + $0x22] sm:$0xff]
      %v496 = vld [vmem:[%s266 + $0x32] sm:$0xff]
      %v497 = vld [vmem:[%s266 + $0x3a] sm:$0xff]
      %v498 = vld [vmem:[%s266 + $0x4a] sm:$0xff]
      %v499 = vld [vmem:[%s266 + $0x52] sm:$0xff]
      %v500 = vld [vmem:[%s266 + $0x62] sm:$0xff]
      %v501 = vld [vmem:[%s266 + $0x6a] sm:$0xff]
      %v502 = vld [vmem:[%s266 + $0x7a] sm:$0xff]
      %v503 = vld [vmem:[%s266 + $0x82] sm:$0xff]
      %v504 = vld [vmem:[%s266 + $0x92] sm:$0xff]
      %v505 = vld [vmem:[%s266 + $0x9a] sm:$0xff]
      %v506 = vld [vmem:[%s266 + $0xaa] sm:$0xff]
      %v507 = vld [vmem:[%s266 + $0xb2] sm:$0xff]
      %v508 = vld [vmem:[%s266 + $0xc2] sm:$0xff]
      %v509 = vld [vmem:[%s266 + $0xca] sm:$0xff]
      %v510 = vld [vmem:[%s266 + $0xda] sm:$0xff]
      %v511 = vld [vmem:[%s266 + $0xe2] sm:$0xff]
      %v512 = vld [vmem:[%s266 + $0xf2] sm:$0xff]
      %v513 = vld [vmem:[%s266 + $0xfa] sm:$0xff]
      %v514 = vld [vmem:[%s266 + $0x10a] sm:$0xff]
      %v515 = vld [vmem:[%s266 + $0x112] sm:$0xff]
      %v516 = vld [vmem:[%s266 + $0x122] sm:$0xff]
      %v517 = vld [vmem:[%s266 + $0x12a] sm:$0xff]
      %v518 = vld [vmem:[%s266 + $0x13a] sm:$0xff]
      %v519 = vld [vmem:[%s266 + $0x142] sm:$0xff]
      %v520 = vld [vmem:[%s266 + $0x152] sm:$0xff]
      %v521 = vld [vmem:[%s266 + $0x15a] sm:$0xff]
      %v522 = vld [vmem:[%s266 + $0x16a] sm:$0xff]
      %v523 = vld [vmem:[%s266 + $0x172] sm:$0xff]
      %s524 = scalar_lea.vmem [#allocation2], 48
      %v525 = vld [vmem:[%s524] sm:$0xff]
      %v526 = vld [vmem:[%s524 + $0x8] sm:$0xff]
      %v527 = vld [vmem:[%s524 + $0x18] sm:$0xff]
      %v528 = vld [vmem:[%s524 + $0x20] sm:$0xff]
      %v529 = vld [vmem:[%s524 + $0x30] sm:$0xff]
      %v530 = vld [vmem:[%s524 + $0x38] sm:$0xff]
      %v531 = vld [vmem:[%s524 + $0x48] sm:$0xff]
      %v532 = vld [vmem:[%s524 + $0x50] sm:$0xff]
      %v533 = vld [vmem:[%s524 + $0x60] sm:$0xff]
      %v534 = vld [vmem:[%s524 + $0x68] sm:$0xff]
      %v535 = vld [vmem:[%s524 + $0x78] sm:$0xff]
      %v536 = vld [vmem:[%s524 + $0x80] sm:$0xff]
      %v537 = vld [vmem:[%s524 + $0x90] sm:$0xff]
      %v538 = vld [vmem:[%s524 + $0x98] sm:$0xff]
      %v539 = vld [vmem:[%s524 + $0xa8] sm:$0xff]
      %v540 = vld [vmem:[%s524 + $0xb0] sm:$0xff]
      %v541 = vld [vmem:[%s524 + $0xc0] sm:$0xff]
      %v542 = vld [vmem:[%s524 + $0xc8] sm:$0xff]
      %v543 = vld [vmem:[%s524 + $0xd8] sm:$0xff]
      %v544 = vld [vmem:[%s524 + $0xe0] sm:$0xff]
      %v545 = vld [vmem:[%s524 + $0xf0] sm:$0xff]
      %v546 = vld [vmem:[%s524 + $0xf8] sm:$0xff]
      %v547 = vld [vmem:[%s524 + $0x108] sm:$0xff]
      %v548 = vld [vmem:[%s524 + $0x110] sm:$0xff]
      %v549 = vld [vmem:[%s524 + $0x120] sm:$0xff]
      %v550 = vld [vmem:[%s524 + $0x128] sm:$0xff]
      %v551 = vld [vmem:[%s524 + $0x138] sm:$0xff]
      %v552 = vld [vmem:[%s524 + $0x140] sm:$0xff]
      %v553 = vld [vmem:[%s524 + $0x150] sm:$0xff]
      %v554 = vld [vmem:[%s524 + $0x158] sm:$0xff]
      %v555 = vld [vmem:[%s524 + $0x168] sm:$0xff]
      %v556 = vld [vmem:[%s524 + $0x170] sm:$0xff]
      %v557 = vld [vmem:[%s524 + $0x1] sm:$0xff]
      %v558 = vld [vmem:[%s524 + $0x9] sm:$0xff]
      %v559 = vld [vmem:[%s524 + $0x19] sm:$0xff]
      %v560 = vld [vmem:[%s524 + $0x21] sm:$0xff]
      %v561 = vld [vmem:[%s524 + $0x31] sm:$0xff]
      %v562 = vld [vmem:[%s524 + $0x39] sm:$0xff]
      %v563 = vld [vmem:[%s524 + $0x49] sm:$0xff]
      %v564 = vld [vmem:[%s524 + $0x51] sm:$0xff]
      %v565 = vld [vmem:[%s524 + $0x61] sm:$0xff]
      %v566 = vld [vmem:[%s524 + $0x69] sm:$0xff]
      %v567 = vld [vmem:[%s524 + $0x79] sm:$0xff]
      %v568 = vld [vmem:[%s524 + $0x81] sm:$0xff]
      %v569 = vld [vmem:[%s524 + $0x91] sm:$0xff]
      %v570 = vld [vmem:[%s524 + $0x99] sm:$0xff]
      %v571 = vld [vmem:[%s524 + $0xa9] sm:$0xff]
      %v572 = vld [vmem:[%s524 + $0xb1] sm:$0xff]
      %v573 = vld [vmem:[%s524 + $0xc1] sm:$0xff]
      %v574 = vld [vmem:[%s524 + $0xc9] sm:$0xff]
      %v575 = vld [vmem:[%s524 + $0xd9] sm:$0xff]
      %v576 = vld [vmem:[%s524 + $0xe1] sm:$0xff]
      %v577 = vld [vmem:[%s524 + $0xf1] sm:$0xff]
      %v578 = vld [vmem:[%s524 + $0xf9] sm:$0xff]
      %v579 = vld [vmem:[%s524 + $0x109] sm:$0xff]
      %v580 = vld [vmem:[%s524 + $0x111] sm:$0xff]
      %v581 = vld [vmem:[%s524 + $0x121] sm:$0xff]
      %v582 = vld [vmem:[%s524 + $0x129] sm:$0xff]
      %v583 = vld [vmem:[%s524 + $0x139] sm:$0xff]
      %v584 = vld [vmem:[%s524 + $0x141] sm:$0xff]
      %v585 = vld [vmem:[%s524 + $0x151] sm:$0xff]
      %v586 = vld [vmem:[%s524 + $0x159] sm:$0xff]
      %v587 = vld [vmem:[%s524 + $0x169] sm:$0xff]
      %v588 = vld [vmem:[%s524 + $0x171] sm:$0xff]
      %v589 = vld [vmem:[%s524 + $0x2] sm:$0xff]
      %v590 = vld [vmem:[%s524 + $0xa] sm:$0xff]
      %v591 = vld [vmem:[%s524 + $0x1a] sm:$0xff]
      %v592 = vld [vmem:[%s524 + $0x22] sm:$0xff]
      %v593 = vld [vmem:[%s524 + $0x32] sm:$0xff]
      %v594 = vld [vmem:[%s524 + $0x3a] sm:$0xff]
      %v595 = vld [vmem:[%s524 + $0x4a] sm:$0xff]
      %v596 = vld [vmem:[%s524 + $0x52] sm:$0xff]
      %v597 = vld [vmem:[%s524 + $0x62] sm:$0xff]
      %v598 = vld [vmem:[%s524 + $0x6a] sm:$0xff]
      %v599 = vld [vmem:[%s524 + $0x7a] sm:$0xff]
      %v600 = vld [vmem:[%s524 + $0x82] sm:$0xff]
      %v601 = vld [vmem:[%s524 + $0x92] sm:$0xff]
      %v602 = vld [vmem:[%s524 + $0x9a] sm:$0xff]
      %v603 = vld [vmem:[%s524 + $0xaa] sm:$0xff]
      %v604 = vld [vmem:[%s524 + $0xb2] sm:$0xff]
      %v605 = vld [vmem:[%s524 + $0xc2] sm:$0xff]
      %v606 = vld [vmem:[%s524 + $0xca] sm:$0xff]
      %v607 = vld [vmem:[%s524 + $0xda] sm:$0xff]
      %v608 = vld [vmem:[%s524 + $0xe2] sm:$0xff]
      %v609 = vld [vmem:[%s524 + $0xf2] sm:$0xff]
      %v610 = vld [vmem:[%s524 + $0xfa] sm:$0xff]
      %v611 = vld [vmem:[%s524 + $0x10a] sm:$0xff]
      %v612 = vld [vmem:[%s524 + $0x112] sm:$0xff]
      %v613 = vld [vmem:[%s524 + $0x122] sm:$0xff]
      %v614 = vld [vmem:[%s524 + $0x12a] sm:$0xff]
      %v615 = vld [vmem:[%s524 + $0x13a] sm:$0xff]
      %v616 = vld [vmem:[%s524 + $0x142] sm:$0xff]
      %v617 = vld [vmem:[%s524 + $0x152] sm:$0xff]
      %v618 = vld [vmem:[%s524 + $0x15a] sm:$0xff]
      %v619 = vld [vmem:[%s524 + $0x16a] sm:$0xff]
      %v620 = vld [vmem:[%s524 + $0x172] sm:$0xff]
      %653 = vrot.lane.b32.xlu0 %v364, 4
      %v654 = vpop.permute.xlu0 %653
      %655 = vrot.lane.b32.xlu0 %v365, 4
      %v656 = vpop.permute.xlu0 %655
      %657 = vrot.lane.b32.xlu0 %v366, 4
      %v658 = vpop.permute.xlu0 %657
      %659 = vrot.lane.b32.xlu0 %v367, 4
      %v660 = vpop.permute.xlu0 %659
      %661 = vrot.lane.b32.xlu0 %v368, 4
      %v662 = vpop.permute.xlu0 %661
      %663 = vrot.lane.b32.xlu0 %v369, 4
      %v664 = vpop.permute.xlu0 %663
      %665 = vrot.lane.b32.xlu0 %v370, 4
      %v666 = vpop.permute.xlu0 %665
      %667 = vrot.lane.b32.xlu0 %v371, 4
      %v668 = vpop.permute.xlu0 %667
      %669 = vrot.lane.b32.xlu0 %v372, 4
      %v670 = vpop.permute.xlu0 %669
      %671 = vrot.lane.b32.xlu0 %v373, 4
      %v672 = vpop.permute.xlu0 %671
      %673 = vrot.lane.b32.xlu0 %v374, 4
      %v674 = vpop.permute.xlu0 %673
      %675 = vrot.lane.b32.xlu0 %v375, 4
      %v676 = vpop.permute.xlu0 %675
      %677 = vrot.lane.b32.xlu0 %v376, 4
      %v678 = vpop.permute.xlu0 %677
      %679 = vrot.lane.b32.xlu0 %v377, 4
      %v680 = vpop.permute.xlu0 %679
      %681 = vrot.lane.b32.xlu0 %v378, 4
      %v682 = vpop.permute.xlu0 %681
      %683 = vrot.lane.b32.xlu0 %v379, 4
      %v684 = vpop.permute.xlu0 %683
      %685 = vrot.lane.b32.xlu0 %v380, 4
      %v686 = vpop.permute.xlu0 %685
      %687 = vrot.lane.b32.xlu0 %v381, 4
      %v688 = vpop.permute.xlu0 %687
      %689 = vrot.lane.b32.xlu0 %v382, 4
      %v690 = vpop.permute.xlu0 %689
      %691 = vrot.lane.b32.xlu0 %v383, 4
      %v692 = vpop.permute.xlu0 %691
      %693 = vrot.lane.b32.xlu0 %v384, 4
      %v694 = vpop.permute.xlu0 %693
      %695 = vrot.lane.b32.xlu0 %v385, 4
      %v696 = vpop.permute.xlu0 %695
      %697 = vrot.lane.b32.xlu0 %v386, 4
      %v698 = vpop.permute.xlu0 %697
      %699 = vrot.lane.b32.xlu0 %v387, 4
      %v700 = vpop.permute.xlu0 %699
      %701 = vrot.lane.b32.xlu0 %v388, 4
      %v702 = vpop.permute.xlu0 %701
      %703 = vrot.lane.b32.xlu0 %v389, 4
      %v704 = vpop.permute.xlu0 %703
      %705 = vrot.lane.b32.xlu0 %v390, 4
      %v706 = vpop.permute.xlu0 %705
      %707 = vrot.lane.b32.xlu0 %v391, 4
      %v708 = vpop.permute.xlu0 %707
      %709 = vrot.lane.b32.xlu0 %v392, 4
      %v710 = vpop.permute.xlu0 %709
      %711 = vrot.lane.b32.xlu0 %v393, 4
      %v712 = vpop.permute.xlu0 %711
      %713 = vrot.lane.b32.xlu0 %v394, 4
      %v714 = vpop.permute.xlu0 %713
      %715 = vrot.lane.b32.xlu0 %v395, 4
      %v716 = vpop.permute.xlu0 %715
      %781 = vrot.lane.b32.xlu0 %v396, 8
      %v782 = vpop.permute.xlu0 %781
      %783 = vrot.lane.b32.xlu0 %v397, 8
      %v784 = vpop.permute.xlu0 %783
      %785 = vrot.lane.b32.xlu0 %v398, 8
      %v786 = vpop.permute.xlu0 %785
      %787 = vrot.lane.b32.xlu0 %v399, 8
      %v788 = vpop.permute.xlu0 %787
      %789 = vrot.lane.b32.xlu0 %v400, 8
      %v790 = vpop.permute.xlu0 %789
      %791 = vrot.lane.b32.xlu0 %v401, 8
      %v792 = vpop.permute.xlu0 %791
      %793 = vrot.lane.b32.xlu0 %v402, 8
      %v794 = vpop.permute.xlu0 %793
      %795 = vrot.lane.b32.xlu0 %v403, 8
      %v796 = vpop.permute.xlu0 %795
      %797 = vrot.lane.b32.xlu0 %v404, 8
      %v798 = vpop.permute.xlu0 %797
      %799 = vrot.lane.b32.xlu0 %v405, 8
      %v800 = vpop.permute.xlu0 %799
      %801 = vrot.lane.b32.xlu0 %v406, 8
      %v802 = vpop.permute.xlu0 %801
      %803 = vrot.lane.b32.xlu0 %v407, 8
      %v804 = vpop.permute.xlu0 %803
      %805 = vrot.lane.b32.xlu0 %v408, 8
      %v806 = vpop.permute.xlu0 %805
      %807 = vrot.lane.b32.xlu0 %v409, 8
      %v808 = vpop.permute.xlu0 %807
      %809 = vrot.lane.b32.xlu0 %v410, 8
      %v810 = vpop.permute.xlu0 %809
      %811 = vrot.lane.b32.xlu0 %v411, 8
      %v812 = vpop.permute.xlu0 %811
      %813 = vrot.lane.b32.xlu0 %v412, 8
      %v814 = vpop.permute.xlu0 %813
      %815 = vrot.lane.b32.xlu0 %v413, 8
      %v816 = vpop.permute.xlu0 %815
      %817 = vrot.lane.b32.xlu0 %v414, 8
      %v818 = vpop.permute.xlu0 %817
      %819 = vrot.lane.b32.xlu0 %v415, 8
      %v820 = vpop.permute.xlu0 %819
      %821 = vrot.lane.b32.xlu0 %v416, 8
      %v822 = vpop.permute.xlu0 %821
      %823 = vrot.lane.b32.xlu0 %v417, 8
      %v824 = vpop.permute.xlu0 %823
      %825 = vrot.lane.b32.xlu0 %v418, 8
      %v826 = vpop.permute.xlu0 %825
      %827 = vrot.lane.b32.xlu0 %v419, 8
      %v828 = vpop.permute.xlu0 %827
      %829 = vrot.lane.b32.xlu0 %v420, 8
      %v830 = vpop.permute.xlu0 %829
      %831 = vrot.lane.b32.xlu0 %v421, 8
      %v832 = vpop.permute.xlu0 %831
      %833 = vrot.lane.b32.xlu0 %v422, 8
      %v834 = vpop.permute.xlu0 %833
      %835 = vrot.lane.b32.xlu0 %v423, 8
      %v836 = vpop.permute.xlu0 %835
      %837 = vrot.lane.b32.xlu0 %v424, 8
      %v838 = vpop.permute.xlu0 %837
      %839 = vrot.lane.b32.xlu0 %v425, 8
      %v840 = vpop.permute.xlu0 %839
      %841 = vrot.lane.b32.xlu0 %v426, 8
      %v842 = vpop.permute.xlu0 %841
      %843 = vrot.lane.b32.xlu0 %v427, 8
      %v844 = vpop.permute.xlu0 %843
      %909 = vrot.lane.b32.xlu0 %v428, 12
      %v910 = vpop.permute.xlu0 %909
      %911 = vrot.lane.b32.xlu0 %v429, 12
      %v912 = vpop.permute.xlu0 %911
      %913 = vrot.lane.b32.xlu0 %v430, 12
      %v914 = vpop.permute.xlu0 %913
      %915 = vrot.lane.b32.xlu0 %v431, 12
      %v916 = vpop.permute.xlu0 %915
      %917 = vrot.lane.b32.xlu0 %v432, 12
      %v918 = vpop.permute.xlu0 %917
      %919 = vrot.lane.b32.xlu0 %v433, 12
      %v920 = vpop.permute.xlu0 %919
      %921 = vrot.lane.b32.xlu0 %v434, 12
      %v922 = vpop.permute.xlu0 %921
      %923 = vrot.lane.b32.xlu0 %v435, 12
      %v924 = vpop.permute.xlu0 %923
      %925 = vrot.lane.b32.xlu0 %v436, 12
      %v926 = vpop.permute.xlu0 %925
      %927 = vrot.lane.b32.xlu0 %v437, 12
      %v928 = vpop.permute.xlu0 %927
      %929 = vrot.lane.b32.xlu0 %v438, 12
      %v930 = vpop.permute.xlu0 %929
      %931 = vrot.lane.b32.xlu0 %v439, 12
      %v932 = vpop.permute.xlu0 %931
      %933 = vrot.lane.b32.xlu0 %v440, 12
      %v934 = vpop.permute.xlu0 %933
      %935 = vrot.lane.b32.xlu0 %v441, 12
      %v936 = vpop.permute.xlu0 %935
      %937 = vrot.lane.b32.xlu0 %v442, 12
      %v938 = vpop.permute.xlu0 %937
      %939 = vrot.lane.b32.xlu0 %v443, 12
      %v940 = vpop.permute.xlu0 %939
      %941 = vrot.lane.b32.xlu0 %v444, 12
      %v942 = vpop.permute.xlu0 %941
      %943 = vrot.lane.b32.xlu0 %v445, 12
      %v944 = vpop.permute.xlu0 %943
      %945 = vrot.lane.b32.xlu0 %v446, 12
      %v946 = vpop.permute.xlu0 %945
      %947 = vrot.lane.b32.xlu0 %v447, 12
      %v948 = vpop.permute.xlu0 %947
      %949 = vrot.lane.b32.xlu0 %v448, 12
      %v950 = vpop.permute.xlu0 %949
      %951 = vrot.lane.b32.xlu0 %v449, 12
      %v952 = vpop.permute.xlu0 %951
      %953 = vrot.lane.b32.xlu0 %v450, 12
      %v954 = vpop.permute.xlu0 %953
      %955 = vrot.lane.b32.xlu0 %v451, 12
      %v956 = vpop.permute.xlu0 %955
      %957 = vrot.lane.b32.xlu0 %v452, 12
      %v958 = vpop.permute.xlu0 %957
      %959 = vrot.lane.b32.xlu0 %v453, 12
      %v960 = vpop.permute.xlu0 %959
      %961 = vrot.lane.b32.xlu0 %v454, 12
      %v962 = vpop.permute.xlu0 %961
      %963 = vrot.lane.b32.xlu0 %v455, 12
      %v964 = vpop.permute.xlu0 %963
      %965 = vrot.lane.b32.xlu0 %v456, 12
      %v966 = vpop.permute.xlu0 %965
      %967 = vrot.lane.b32.xlu0 %v457, 12
      %v968 = vpop.permute.xlu0 %967
      %969 = vrot.lane.b32.xlu0 %v458, 12
      %v970 = vpop.permute.xlu0 %969
      %971 = vrot.lane.b32.xlu0 %v459, 12
      %v972 = vpop.permute.xlu0 %971
      %1037 = vrot.lane.b32.xlu0 %v460, 16
      %v1038 = vpop.permute.xlu0 %1037
      %1039 = vrot.lane.b32.xlu0 %v461, 16
      %v1040 = vpop.permute.xlu0 %1039
      %1041 = vrot.lane.b32.xlu0 %v462, 16
      %v1042 = vpop.permute.xlu0 %1041
      %1043 = vrot.lane.b32.xlu0 %v463, 16
      %v1044 = vpop.permute.xlu0 %1043
      %1045 = vrot.lane.b32.xlu0 %v464, 16
      %v1046 = vpop.permute.xlu0 %1045
      %1047 = vrot.lane.b32.xlu0 %v465, 16
      %v1048 = vpop.permute.xlu0 %1047
      %1049 = vrot.lane.b32.xlu0 %v466, 16
      %v1050 = vpop.permute.xlu0 %1049
      %1051 = vrot.lane.b32.xlu0 %v467, 16
      %v1052 = vpop.permute.xlu0 %1051
      %1053 = vrot.lane.b32.xlu0 %v468, 16
      %v1054 = vpop.permute.xlu0 %1053
      %1055 = vrot.lane.b32.xlu0 %v469, 16
      %v1056 = vpop.permute.xlu0 %1055
      %1057 = vrot.lane.b32.xlu0 %v470, 16
      %v1058 = vpop.permute.xlu0 %1057
      %1059 = vrot.lane.b32.xlu0 %v471, 16
      %v1060 = vpop.permute.xlu0 %1059
      %1061 = vrot.lane.b32.xlu0 %v472, 16
      %v1062 = vpop.permute.xlu0 %1061
      %1063 = vrot.lane.b32.xlu0 %v473, 16
      %v1064 = vpop.permute.xlu0 %1063
      %1065 = vrot.lane.b32.xlu0 %v474, 16
      %v1066 = vpop.permute.xlu0 %1065
      %1067 = vrot.lane.b32.xlu0 %v475, 16
      %v1068 = vpop.permute.xlu0 %1067
      %1069 = vrot.lane.b32.xlu0 %v476, 16
      %v1070 = vpop.permute.xlu0 %1069
      %1071 = vrot.lane.b32.xlu0 %v477, 16
      %v1072 = vpop.permute.xlu0 %1071
      %1073 = vrot.lane.b32.xlu0 %v478, 16
      %v1074 = vpop.permute.xlu0 %1073
      %1075 = vrot.lane.b32.xlu0 %v479, 16
      %v1076 = vpop.permute.xlu0 %1075
      %1077 = vrot.lane.b32.xlu0 %v480, 16
      %v1078 = vpop.permute.xlu0 %1077
      %1079 = vrot.lane.b32.xlu0 %v481, 16
      %v1080 = vpop.permute.xlu0 %1079
      %1081 = vrot.lane.b32.xlu0 %v482, 16
      %v1082 = vpop.permute.xlu0 %1081
      %1083 = vrot.lane.b32.xlu0 %v483, 16
      %v1084 = vpop.permute.xlu0 %1083
      %1085 = vrot.lane.b32.xlu0 %v484, 16
      %v1086 = vpop.permute.xlu0 %1085
      %1087 = vrot.lane.b32.xlu0 %v485, 16
      %v1088 = vpop.permute.xlu0 %1087
      %1089 = vrot.lane.b32.xlu0 %v486, 16
      %v1090 = vpop.permute.xlu0 %1089
      %1091 = vrot.lane.b32.xlu0 %v487, 16
      %v1092 = vpop.permute.xlu0 %1091
      %1093 = vrot.lane.b32.xlu0 %v488, 16
      %v1094 = vpop.permute.xlu0 %1093
      %1095 = vrot.lane.b32.xlu0 %v489, 16
      %v1096 = vpop.permute.xlu0 %1095
      %1097 = vrot.lane.b32.xlu0 %v490, 16
      %v1098 = vpop.permute.xlu0 %1097
      %1099 = vrot.lane.b32.xlu0 %v491, 16
      %v1100 = vpop.permute.xlu0 %1099
      %1165 = vrot.lane.b32.xlu0 %v492, 20
      %v1166 = vpop.permute.xlu0 %1165
      %1167 = vrot.lane.b32.xlu0 %v493, 20
      %v1168 = vpop.permute.xlu0 %1167
      %1169 = vrot.lane.b32.xlu0 %v494, 20
      %v1170 = vpop.permute.xlu0 %1169
      %1171 = vrot.lane.b32.xlu0 %v495, 20
      %v1172 = vpop.permute.xlu0 %1171
      %1173 = vrot.lane.b32.xlu0 %v496, 20
      %v1174 = vpop.permute.xlu0 %1173
      %1175 = vrot.lane.b32.xlu0 %v497, 20
      %v1176 = vpop.permute.xlu0 %1175
      %1177 = vrot.lane.b32.xlu0 %v498, 20
      %v1178 = vpop.permute.xlu0 %1177
      %1179 = vrot.lane.b32.xlu0 %v499, 20
      %v1180 = vpop.permute.xlu0 %1179
      %1181 = vrot.lane.b32.xlu0 %v500, 20
      %v1182 = vpop.permute.xlu0 %1181
      %1183 = vrot.lane.b32.xlu0 %v501, 20
      %v1184 = vpop.permute.xlu0 %1183
      %1185 = vrot.lane.b32.xlu0 %v502, 20
      %v1186 = vpop.permute.xlu0 %1185
      %1187 = vrot.lane.b32.xlu0 %v503, 20
      %v1188 = vpop.permute.xlu0 %1187
      %1189 = vrot.lane.b32.xlu0 %v504, 20
      %v1190 = vpop.permute.xlu0 %1189
      %1191 = vrot.lane.b32.xlu0 %v505, 20
      %v1192 = vpop.permute.xlu0 %1191
      %1193 = vrot.lane.b32.xlu0 %v506, 20
      %v1194 = vpop.permute.xlu0 %1193
      %1195 = vrot.lane.b32.xlu0 %v507, 20
      %v1196 = vpop.permute.xlu0 %1195
      %1197 = vrot.lane.b32.xlu0 %v508, 20
      %v1198 = vpop.permute.xlu0 %1197
      %1199 = vrot.lane.b32.xlu0 %v509, 20
      %v1200 = vpop.permute.xlu0 %1199
      %1201 = vrot.lane.b32.xlu0 %v510, 20
      %v1202 = vpop.permute.xlu0 %1201
      %1203 = vrot.lane.b32.xlu0 %v511, 20
      %v1204 = vpop.permute.xlu0 %1203
      %1205 = vrot.lane.b32.xlu0 %v512, 20
      %v1206 = vpop.permute.xlu0 %1205
      %1207 = vrot.lane.b32.xlu0 %v513, 20
      %v1208 = vpop.permute.xlu0 %1207
      %1209 = vrot.lane.b32.xlu0 %v514, 20
      %v1210 = vpop.permute.xlu0 %1209
      %1211 = vrot.lane.b32.xlu0 %v515, 20
      %v1212 = vpop.permute.xlu0 %1211
      %1213 = vrot.lane.b32.xlu0 %v516, 20
      %v1214 = vpop.permute.xlu0 %1213
      %1215 = vrot.lane.b32.xlu0 %v517, 20
      %v1216 = vpop.permute.xlu0 %1215
      %1217 = vrot.lane.b32.xlu0 %v518, 20
      %v1218 = vpop.permute.xlu0 %1217
      %1219 = vrot.lane.b32.xlu0 %v519, 20
      %v1220 = vpop.permute.xlu0 %1219
      %1221 = vrot.lane.b32.xlu0 %v520, 20
      %v1222 = vpop.permute.xlu0 %1221
      %1223 = vrot.lane.b32.xlu0 %v521, 20
      %v1224 = vpop.permute.xlu0 %1223
      %1225 = vrot.lane.b32.xlu0 %v522, 20
      %v1226 = vpop.permute.xlu0 %1225
      %1227 = vrot.lane.b32.xlu0 %v523, 20
      %v1228 = vpop.permute.xlu0 %1227
      %1293 = vrot.lane.b32.xlu0 %v525, 24
      %v1294 = vpop.permute.xlu0 %1293
      %1295 = vrot.lane.b32.xlu0 %v526, 24
      %v1296 = vpop.permute.xlu0 %1295
      %1297 = vrot.lane.b32.xlu0 %v527, 24
      %v1298 = vpop.permute.xlu0 %1297
      %1299 = vrot.lane.b32.xlu0 %v528, 24
      %v1300 = vpop.permute.xlu0 %1299
      %1301 = vrot.lane.b32.xlu0 %v529, 24
      %v1302 = vpop.permute.xlu0 %1301
      %1303 = vrot.lane.b32.xlu0 %v530, 24
      %v1304 = vpop.permute.xlu0 %1303
      %1305 = vrot.lane.b32.xlu0 %v531, 24
      %v1306 = vpop.permute.xlu0 %1305
      %1307 = vrot.lane.b32.xlu0 %v532, 24
      %v1308 = vpop.permute.xlu0 %1307
      %1309 = vrot.lane.b32.xlu0 %v533, 24
      %v1310 = vpop.permute.xlu0 %1309
      %1311 = vrot.lane.b32.xlu0 %v534, 24
      %v1312 = vpop.permute.xlu0 %1311
      %1313 = vrot.lane.b32.xlu0 %v535, 24
      %v1314 = vpop.permute.xlu0 %1313
      %1315 = vrot.lane.b32.xlu0 %v536, 24
      %v1316 = vpop.permute.xlu0 %1315
      %1317 = vrot.lane.b32.xlu0 %v537, 24
      %v1318 = vpop.permute.xlu0 %1317
      %1319 = vrot.lane.b32.xlu0 %v538, 24
      %v1320 = vpop.permute.xlu0 %1319
      %1321 = vrot.lane.b32.xlu0 %v539, 24
      %v1322 = vpop.permute.xlu0 %1321
      %1323 = vrot.lane.b32.xlu0 %v540, 24
      %v1324 = vpop.permute.xlu0 %1323
      %1325 = vrot.lane.b32.xlu0 %v541, 24
      %v1326 = vpop.permute.xlu0 %1325
      %1327 = vrot.lane.b32.xlu0 %v542, 24
      %v1328 = vpop.permute.xlu0 %1327
      %1329 = vrot.lane.b32.xlu0 %v543, 24
      %v1330 = vpop.permute.xlu0 %1329
      %1331 = vrot.lane.b32.xlu0 %v544, 24
      %v1332 = vpop.permute.xlu0 %1331
      %1333 = vrot.lane.b32.xlu0 %v545, 24
      %v1334 = vpop.permute.xlu0 %1333
      %1335 = vrot.lane.b32.xlu0 %v546, 24
      %v1336 = vpop.permute.xlu0 %1335
      %1337 = vrot.lane.b32.xlu0 %v547, 24
      %v1338 = vpop.permute.xlu0 %1337
      %1339 = vrot.lane.b32.xlu0 %v548, 24
      %v1340 = vpop.permute.xlu0 %1339
      %1341 = vrot.lane.b32.xlu0 %v549, 24
      %v1342 = vpop.permute.xlu0 %1341
      %1343 = vrot.lane.b32.xlu0 %v550, 24
      %v1344 = vpop.permute.xlu0 %1343
      %1345 = vrot.lane.b32.xlu0 %v551, 24
      %v1346 = vpop.permute.xlu0 %1345
      %1347 = vrot.lane.b32.xlu0 %v552, 24
      %v1348 = vpop.permute.xlu0 %1347
      %1349 = vrot.lane.b32.xlu0 %v553, 24
      %v1350 = vpop.permute.xlu0 %1349
      %1351 = vrot.lane.b32.xlu0 %v554, 24
      %v1352 = vpop.permute.xlu0 %1351
      %1353 = vrot.lane.b32.xlu0 %v555, 24
      %v1354 = vpop.permute.xlu0 %1353
      %1355 = vrot.lane.b32.xlu0 %v556, 24
      %v1356 = vpop.permute.xlu0 %1355
      %1421 = vrot.lane.b32.xlu0 %v557, 28
      %v1422 = vpop.permute.xlu0 %1421
      %1423 = vrot.lane.b32.xlu0 %v558, 28
      %v1424 = vpop.permute.xlu0 %1423
      %1425 = vrot.lane.b32.xlu0 %v559, 28
      %v1426 = vpop.permute.xlu0 %1425
      %1427 = vrot.lane.b32.xlu0 %v560, 28
      %v1428 = vpop.permute.xlu0 %1427
      %1429 = vrot.lane.b32.xlu0 %v561, 28
      %v1430 = vpop.permute.xlu0 %1429
      %1431 = vrot.lane.b32.xlu0 %v562, 28
      %v1432 = vpop.permute.xlu0 %1431
      %1433 = vrot.lane.b32.xlu0 %v563, 28
      %v1434 = vpop.permute.xlu0 %1433
      %1435 = vrot.lane.b32.xlu0 %v564, 28
      %v1436 = vpop.permute.xlu0 %1435
      %1437 = vrot.lane.b32.xlu0 %v565, 28
      %v1438 = vpop.permute.xlu0 %1437
      %1439 = vrot.lane.b32.xlu0 %v566, 28
      %v1440 = vpop.permute.xlu0 %1439
      %1441 = vrot.lane.b32.xlu0 %v567, 28
      %v1442 = vpop.permute.xlu0 %1441
      %1443 = vrot.lane.b32.xlu0 %v568, 28
      %v1444 = vpop.permute.xlu0 %1443
      %1445 = vrot.lane.b32.xlu0 %v569, 28
      %v1446 = vpop.permute.xlu0 %1445
      %1447 = vrot.lane.b32.xlu0 %v570, 28
      %v1448 = vpop.permute.xlu0 %1447
      %1449 = vrot.lane.b32.xlu0 %v571, 28
      %v1450 = vpop.permute.xlu0 %1449
      %1451 = vrot.lane.b32.xlu0 %v572, 28
      %v1452 = vpop.permute.xlu0 %1451
      %1453 = vrot.lane.b32.xlu0 %v573, 28
      %v1454 = vpop.permute.xlu0 %1453
      %1455 = vrot.lane.b32.xlu0 %v574, 28
      %v1456 = vpop.permute.xlu0 %1455
      %1457 = vrot.lane.b32.xlu0 %v575, 28
      %v1458 = vpop.permute.xlu0 %1457
      %1459 = vrot.lane.b32.xlu0 %v576, 28
      %v1460 = vpop.permute.xlu0 %1459
      %1461 = vrot.lane.b32.xlu0 %v577, 28
      %v1462 = vpop.permute.xlu0 %1461
      %1463 = vrot.lane.b32.xlu0 %v578, 28
      %v1464 = vpop.permute.xlu0 %1463
      %1465 = vrot.lane.b32.xlu0 %v579, 28
      %v1466 = vpop.permute.xlu0 %1465
      %1467 = vrot.lane.b32.xlu0 %v580, 28
      %v1468 = vpop.permute.xlu0 %1467
      %1469 = vrot.lane.b32.xlu0 %v581, 28
      %v1470 = vpop.permute.xlu0 %1469
      %1471 = vrot.lane.b32.xlu0 %v582, 28
      %v1472 = vpop.permute.xlu0 %1471
      %1473 = vrot.lane.b32.xlu0 %v583, 28
      %v1474 = vpop.permute.xlu0 %1473
      %1475 = vrot.lane.b32.xlu0 %v584, 28
      %v1476 = vpop.permute.xlu0 %1475
      %1477 = vrot.lane.b32.xlu0 %v585, 28
      %v1478 = vpop.permute.xlu0 %1477
      %1479 = vrot.lane.b32.xlu0 %v586, 28
      %v1480 = vpop.permute.xlu0 %1479
      %1481 = vrot.lane.b32.xlu0 %v587, 28
      %v1482 = vpop.permute.xlu0 %1481
      %1483 = vrot.lane.b32.xlu0 %v588, 28
      %v1484 = vpop.permute.xlu0 %1483
      %1549 = vrot.lane.b32.xlu0 %v589, 32
      %v1550 = vpop.permute.xlu0 %1549
      %1551 = vrot.lane.b32.xlu0 %v590, 32
      %v1552 = vpop.permute.xlu0 %1551
      %1553 = vrot.lane.b32.xlu0 %v591, 32
      %v1554 = vpop.permute.xlu0 %1553
      %1555 = vrot.lane.b32.xlu0 %v592, 32
      %v1556 = vpop.permute.xlu0 %1555
      %1557 = vrot.lane.b32.xlu0 %v593, 32
      %v1558 = vpop.permute.xlu0 %1557
      %1559 = vrot.lane.b32.xlu0 %v594, 32
      %v1560 = vpop.permute.xlu0 %1559
      %1561 = vrot.lane.b32.xlu0 %v595, 32
      %v1562 = vpop.permute.xlu0 %1561
      %1563 = vrot.lane.b32.xlu0 %v596, 32
      %v1564 = vpop.permute.xlu0 %1563
      %1565 = vrot.lane.b32.xlu0 %v597, 32
      %v1566 = vpop.permute.xlu0 %1565
      %1567 = vrot.lane.b32.xlu0 %v598, 32
      %v1568 = vpop.permute.xlu0 %1567
      %1569 = vrot.lane.b32.xlu0 %v599, 32
      %v1570 = vpop.permute.xlu0 %1569
      %1571 = vrot.lane.b32.xlu0 %v600, 32
      %v1572 = vpop.permute.xlu0 %1571
      %1573 = vrot.lane.b32.xlu0 %v601, 32
      %v1574 = vpop.permute.xlu0 %1573
      %1575 = vrot.lane.b32.xlu0 %v602, 32
      %v1576 = vpop.permute.xlu0 %1575
      %1577 = vrot.lane.b32.xlu0 %v603, 32
      %v1578 = vpop.permute.xlu0 %1577
      %1579 = vrot.lane.b32.xlu0 %v604, 32
      %v1580 = vpop.permute.xlu0 %1579
      %1581 = vrot.lane.b32.xlu0 %v605, 32
      %v1582 = vpop.permute.xlu0 %1581
      %1583 = vrot.lane.b32.xlu0 %v606, 32
      %v1584 = vpop.permute.xlu0 %1583
      %1585 = vrot.lane.b32.xlu0 %v607, 32
      %v1586 = vpop.permute.xlu0 %1585
      %1587 = vrot.lane.b32.xlu0 %v608, 32
      %v1588 = vpop.permute.xlu0 %1587
      %1589 = vrot.lane.b32.xlu0 %v609, 32
      %v1590 = vpop.permute.xlu0 %1589
      %1591 = vrot.lane.b32.xlu0 %v610, 32
      %v1592 = vpop.permute.xlu0 %1591
      %1593 = vrot.lane.b32.xlu0 %v611, 32
      %v1594 = vpop.permute.xlu0 %1593
      %1595 = vrot.lane.b32.xlu0 %v612, 32
      %v1596 = vpop.permute.xlu0 %1595
      %1597 = vrot.lane.b32.xlu0 %v613, 32
      %v1598 = vpop.permute.xlu0 %1597
      %1599 = vrot.lane.b32.xlu0 %v614, 32
      %v1600 = vpop.permute.xlu0 %1599
      %1601 = vrot.lane.b32.xlu0 %v615, 32
      %v1602 = vpop.permute.xlu0 %1601
      %1603 = vrot.lane.b32.xlu0 %v616, 32
      %v1604 = vpop.permute.xlu0 %1603
      %1605 = vrot.lane.b32.xlu0 %v617, 32
      %v1606 = vpop.permute.xlu0 %1605
      %1607 = vrot.lane.b32.xlu0 %v618, 32
      %v1608 = vpop.permute.xlu0 %1607
      %1609 = vrot.lane.b32.xlu0 %v619, 32
      %v1610 = vpop.permute.xlu0 %1609
      %1611 = vrot.lane.b32.xlu0 %v620, 32
      %v1612 = vpop.permute.xlu0 %1611
      %v1645 = vsel %vm257, %v332, %v654
      %v1646 = vsel %vm257, %v333, %v656
      %v1647 = vsel %vm257, %v334, %v658
      %v1648 = vsel %vm257, %v335, %v660
      %v1649 = vsel %vm257, %v336, %v662
      %v1650 = vsel %vm257, %v337, %v664
      %v1651 = vsel %vm257, %v338, %v666
      %v1652 = vsel %vm257, %v339, %v668
      %v1653 = vsel %vm257, %v340, %v670
      %v1654 = vsel %vm257, %v341, %v672
      %v1655 = vsel %vm257, %v342, %v674
      %v1656 = vsel %vm257, %v343, %v676
      %v1657 = vsel %vm257, %v344, %v678
      %v1658 = vsel %vm257, %v345, %v680
      %v1659 = vsel %vm257, %v346, %v682
      %v1660 = vsel %vm257, %v347, %v684
      %v1661 = vsel %vm257, %v348, %v686
      %v1662 = vsel %vm257, %v349, %v688
      %v1663 = vsel %vm257, %v350, %v690
      %v1664 = vsel %vm257, %v351, %v692
      %v1665 = vsel %vm257, %v352, %v694
      %v1666 = vsel %vm257, %v353, %v696
      %v1667 = vsel %vm257, %v354, %v698
      %v1668 = vsel %vm257, %v355, %v700
      %v1669 = vsel %vm257, %v356, %v702
      %v1670 = vsel %vm257, %v357, %v704
      %v1671 = vsel %vm257, %v358, %v706
      %v1672 = vsel %vm257, %v359, %v708
      %v1673 = vsel %vm257, %v360, %v710
      %v1674 = vsel %vm257, %v361, %v712
      %v1675 = vsel %vm257, %v362, %v714
      %v1676 = vsel %vm257, %v363, %v716
      %vm1677 = vcmask 64512
      %v1678 = vsel %vm1677, %v1645, %v782
      %v1679 = vsel %vm1677, %v1646, %v784
      %v1680 = vsel %vm1677, %v1647, %v786
      %v1681 = vsel %vm1677, %v1648, %v788
      %v1682 = vsel %vm1677, %v1649, %v790
      %v1683 = vsel %vm1677, %v1650, %v792
      %v1684 = vsel %vm1677, %v1651, %v794
      %v1685 = vsel %vm1677, %v1652, %v796
      %v1686 = vsel %vm1677, %v1653, %v798
      %v1687 = vsel %vm1677, %v1654, %v800
      %v1688 = vsel %vm1677, %v1655, %v802
      %v1689 = vsel %vm1677, %v1656, %v804
      %v1690 = vsel %vm1677, %v1657, %v806
      %v1691 = vsel %vm1677, %v1658, %v808
      %v1692 = vsel %vm1677, %v1659, %v810
      %v1693 = vsel %vm1677, %v1660, %v812
      %v1694 = vsel %vm1677, %v1661, %v814
      %v1695 = vsel %vm1677, %v1662, %v816
      %v1696 = vsel %vm1677, %v1663, %v818
      %v1697 = vsel %vm1677, %v1664, %v820
      %v1698 = vsel %vm1677, %v1665, %v822
      %v1699 = vsel %vm1677, %v1666, %v824
      %v1700 = vsel %vm1677, %v1667, %v826
      %v1701 = vsel %vm1677, %v1668, %v828
      %v1702 = vsel %vm1677, %v1669, %v830
      %v1703 = vsel %vm1677, %v1670, %v832
      %v1704 = vsel %vm1677, %v1671, %v834
      %v1705 = vsel %vm1677, %v1672, %v836
      %v1706 = vsel %vm1677, %v1673, %v838
      %v1707 = vsel %vm1677, %v1674, %v840
      %v1708 = vsel %vm1677, %v1675, %v842
      %v1709 = vsel %vm1677, %v1676, %v844
      %vm1710 = vcmask 97280
      %v1711 = vsel %vm1710, %v1678, %v910
      %v1712 = vsel %vm1710, %v1679, %v912
      %v1713 = vsel %vm1710, %v1680, %v914
      %v1714 = vsel %vm1710, %v1681, %v916
      %v1715 = vsel %vm1710, %v1682, %v918
      %v1716 = vsel %vm1710, %v1683, %v920
      %v1717 = vsel %vm1710, %v1684, %v922
      %v1718 = vsel %vm1710, %v1685, %v924
      %v1719 = vsel %vm1710, %v1686, %v926
      %v1720 = vsel %vm1710, %v1687, %v928
      %v1721 = vsel %vm1710, %v1688, %v930
      %v1722 = vsel %vm1710, %v1689, %v932
      %v1723 = vsel %vm1710, %v1690, %v934
      %v1724 = vsel %vm1710, %v1691, %v936
      %v1725 = vsel %vm1710, %v1692, %v938
      %v1726 = vsel %vm1710, %v1693, %v940
      %v1727 = vsel %vm1710, %v1694, %v942
      %v1728 = vsel %vm1710, %v1695, %v944
      %v1729 = vsel %vm1710, %v1696, %v946
      %v1730 = vsel %vm1710, %v1697, %v948
      %v1731 = vsel %vm1710, %v1698, %v950
      %v1732 = vsel %vm1710, %v1699, %v952
      %v1733 = vsel %vm1710, %v1700, %v954
      %v1734 = vsel %vm1710, %v1701, %v956
      %v1735 = vsel %vm1710, %v1702, %v958
      %v1736 = vsel %vm1710, %v1703, %v960
      %v1737 = vsel %vm1710, %v1704, %v962
      %v1738 = vsel %vm1710, %v1705, %v964
      %v1739 = vsel %vm1710, %v1706, %v966
      %v1740 = vsel %vm1710, %v1707, %v968
      %v1741 = vsel %vm1710, %v1708, %v970
      %v1742 = vsel %vm1710, %v1709, %v972
      %vm1743 = vcmask 130048
      %v1744 = vsel %vm1743, %v1711, %v1038
      %v1745 = vsel %vm1743, %v1712, %v1040
      %v1746 = vsel %vm1743, %v1713, %v1042
      %v1747 = vsel %vm1743, %v1714, %v1044
      %v1748 = vsel %vm1743, %v1715, %v1046
      %v1749 = vsel %vm1743, %v1716, %v1048
      %v1750 = vsel %vm1743, %v1717, %v1050
      %v1751 = vsel %vm1743, %v1718, %v1052
      %v1752 = vsel %vm1743, %v1719, %v1054
      %v1753 = vsel %vm1743, %v1720, %v1056
      %v1754 = vsel %vm1743, %v1721, %v1058
      %v1755 = vsel %vm1743, %v1722, %v1060
      %v1756 = vsel %vm1743, %v1723, %v1062
      %v1757 = vsel %vm1743, %v1724, %v1064
      %v1758 = vsel %vm1743, %v1725, %v1066
      %v1759 = vsel %vm1743, %v1726, %v1068
      %v1760 = vsel %vm1743, %v1727, %v1070
      %v1761 = vsel %vm1743, %v1728, %v1072
      %v1762 = vsel %vm1743, %v1729, %v1074
      %v1763 = vsel %vm1743, %v1730, %v1076
      %v1764 = vsel %vm1743, %v1731, %v1078
      %v1765 = vsel %vm1743, %v1732, %v1080
      %v1766 = vsel %vm1743, %v1733, %v1082
      %v1767 = vsel %vm1743, %v1734, %v1084
      %v1768 = vsel %vm1743, %v1735, %v1086
      %v1769 = vsel %vm1743, %v1736, %v1088
      %v1770 = vsel %vm1743, %v1737, %v1090
      %v1771 = vsel %vm1743, %v1738, %v1092
      %v1772 = vsel %vm1743, %v1739, %v1094
      %v1773 = vsel %vm1743, %v1740, %v1096
      %v1774 = vsel %vm1743, %v1741, %v1098
      %v1775 = vsel %vm1743, %v1742, %v1100
      %vm1776 = vcmask 162816
      %v1777 = vsel %vm1776, %v1744, %v1166
      %v1778 = vsel %vm1776, %v1745, %v1168
      %v1779 = vsel %vm1776, %v1746, %v1170
      %v1780 = vsel %vm1776, %v1747, %v1172
      %v1781 = vsel %vm1776, %v1748, %v1174
      %v1782 = vsel %vm1776, %v1749, %v1176
      %v1783 = vsel %vm1776, %v1750, %v1178
      %v1784 = vsel %vm1776, %v1751, %v1180
      %v1785 = vsel %vm1776, %v1752, %v1182
      %v1786 = vsel %vm1776, %v1753, %v1184
      %v1787 = vsel %vm1776, %v1754, %v1186
      %v1788 = vsel %vm1776, %v1755, %v1188
      %v1789 = vsel %vm1776, %v1756, %v1190
      %v1790 = vsel %vm1776, %v1757, %v1192
      %v1791 = vsel %vm1776, %v1758, %v1194
      %v1792 = vsel %vm1776, %v1759, %v1196
      %v1793 = vsel %vm1776, %v1760, %v1198
      %v1794 = vsel %vm1776, %v1761, %v1200
      %v1795 = vsel %vm1776, %v1762, %v1202
      %v1796 = vsel %vm1776, %v1763, %v1204
      %v1797 = vsel %vm1776, %v1764, %v1206
      %v1798 = vsel %vm1776, %v1765, %v1208
      %v1799 = vsel %vm1776, %v1766, %v1210
      %v1800 = vsel %vm1776, %v1767, %v1212
      %v1801 = vsel %vm1776, %v1768, %v1214
      %v1802 = vsel %vm1776, %v1769, %v1216
      %v1803 = vsel %vm1776, %v1770, %v1218
      %v1804 = vsel %vm1776, %v1771, %v1220
      %v1805 = vsel %vm1776, %v1772, %v1222
      %v1806 = vsel %vm1776, %v1773, %v1224
      %v1807 = vsel %vm1776, %v1774, %v1226
      %v1808 = vsel %vm1776, %v1775, %v1228
      %vm1809 = vcmask 195584
      %v1810 = vsel %vm1809, %v1777, %v1294
      %v1811 = vsel %vm1809, %v1778, %v1296
      %v1812 = vsel %vm1809, %v1779, %v1298
      %v1813 = vsel %vm1809, %v1780, %v1300
      %v1814 = vsel %vm1809, %v1781, %v1302
      %v1815 = vsel %vm1809, %v1782, %v1304
      %v1816 = vsel %vm1809, %v1783, %v1306
      %v1817 = vsel %vm1809, %v1784, %v1308
      %v1818 = vsel %vm1809, %v1785, %v1310
      %v1819 = vsel %vm1809, %v1786, %v1312
      %v1820 = vsel %vm1809, %v1787, %v1314
      %v1821 = vsel %vm1809, %v1788, %v1316
      %v1822 = vsel %vm1809, %v1789, %v1318
      %v1823 = vsel %vm1809, %v1790, %v1320
      %v1824 = vsel %vm1809, %v1791, %v1322
      %v1825 = vsel %vm1809, %v1792, %v1324
      %v1826 = vsel %vm1809, %v1793, %v1326
      %v1827 = vsel %vm1809, %v1794, %v1328
      %v1828 = vsel %vm1809, %v1795, %v1330
      %v1829 = vsel %vm1809, %v1796, %v1332
      %v1830 = vsel %vm1809, %v1797, %v1334
      %v1831 = vsel %vm1809, %v1798, %v1336
      %v1832 = vsel %vm1809, %v1799, %v1338
      %v1833 = vsel %vm1809, %v1800, %v1340
      %v1834 = vsel %vm1809, %v1801, %v1342
      %v1835 = vsel %vm1809, %v1802, %v1344
      %v1836 = vsel %vm1809, %v1803, %v1346
      %v1837 = vsel %vm1809, %v1804, %v1348
      %v1838 = vsel %vm1809, %v1805, %v1350
      %v1839 = vsel %vm1809, %v1806, %v1352
      %v1840 = vsel %vm1809, %v1807, %v1354
      %v1841 = vsel %vm1809, %v1808, %v1356
      %vm1842 = vcmask 228352
      %v1843 = vsel %vm1842, %v1810, %v1422
      %v1844 = vsel %vm1842, %v1811, %v1424
      %v1845 = vsel %vm1842, %v1812, %v1426
      %v1846 = vsel %vm1842, %v1813, %v1428
      %v1847 = vsel %vm1842, %v1814, %v1430
      %v1848 = vsel %vm1842, %v1815, %v1432
      %v1849 = vsel %vm1842, %v1816, %v1434
      %v1850 = vsel %vm1842, %v1817, %v1436
      %v1851 = vsel %vm1842, %v1818, %v1438
      %v1852 = vsel %vm1842, %v1819, %v1440
      %v1853 = vsel %vm1842, %v1820, %v1442
      %v1854 = vsel %vm1842, %v1821, %v1444
      %v1855 = vsel %vm1842, %v1822, %v1446
      %v1856 = vsel %vm1842, %v1823, %v1448
      %v1857 = vsel %vm1842, %v1824, %v1450
      %v1858 = vsel %vm1842, %v1825, %v1452
      %v1859 = vsel %vm1842, %v1826, %v1454
      %v1860 = vsel %vm1842, %v1827, %v1456
      %v1861 = vsel %vm1842, %v1828, %v1458
      %v1862 = vsel %vm1842, %v1829, %v1460
      %v1863 = vsel %vm1842, %v1830, %v1462
      %v1864 = vsel %vm1842, %v1831, %v1464
      %v1865 = vsel %vm1842, %v1832, %v1466
      %v1866 = vsel %vm1842, %v1833, %v1468
      %v1867 = vsel %vm1842, %v1834, %v1470
      %v1868 = vsel %vm1842, %v1835, %v1472
      %v1869 = vsel %vm1842, %v1836, %v1474
      %v1870 = vsel %vm1842, %v1837, %v1476
      %v1871 = vsel %vm1842, %v1838, %v1478
      %v1872 = vsel %vm1842, %v1839, %v1480
      %v1873 = vsel %vm1842, %v1840, %v1482
      %v1874 = vsel %vm1842, %v1841, %v1484
      %vm1875 = vcmask 261120
      %v1876 = vsel %vm1875, %v1843, %v1550
      %v1877 = vsel %vm1875, %v1844, %v1552
      %v1878 = vsel %vm1875, %v1845, %v1554
      %v1879 = vsel %vm1875, %v1846, %v1556
      %v1880 = vsel %vm1875, %v1847, %v1558
      %v1881 = vsel %vm1875, %v1848, %v1560
      %v1882 = vsel %vm1875, %v1849, %v1562
      %v1883 = vsel %vm1875, %v1850, %v1564
      %v1884 = vsel %vm1875, %v1851, %v1566
      %v1885 = vsel %vm1875, %v1852, %v1568
      %v1886 = vsel %vm1875, %v1853, %v1570
      %v1887 = vsel %vm1875, %v1854, %v1572
      %v1888 = vsel %vm1875, %v1855, %v1574
      %v1889 = vsel %vm1875, %v1856, %v1576
      %v1890 = vsel %vm1875, %v1857, %v1578
      %v1891 = vsel %vm1875, %v1858, %v1580
      %v1892 = vsel %vm1875, %v1859, %v1582
      %v1893 = vsel %vm1875, %v1860, %v1584
      %v1894 = vsel %vm1875, %v1861, %v1586
      %v1895 = vsel %vm1875, %v1862, %v1588
      %v1896 = vsel %vm1875, %v1863, %v1590
      %v1897 = vsel %vm1875, %v1864, %v1592
      %v1898 = vsel %vm1875, %v1865, %v1594
      %v1899 = vsel %vm1875, %v1866, %v1596
      %v1900 = vsel %vm1875, %v1867, %v1598
      %v1901 = vsel %vm1875, %v1868, %v1600
      %v1902 = vsel %vm1875, %v1869, %v1602
      %v1903 = vsel %vm1875, %v1870, %v1604
      %v1904 = vsel %vm1875, %v1871, %v1606
      %v1905 = vsel %vm1875, %v1872, %v1608
      %v1906 = vsel %vm1875, %v1873, %v1610
      %v1907 = vsel %vm1875, %v1874, %v1612
      %v1908 = vld [vmem:[%s1] sm:$0xff]
      %v1909 = vld [vmem:[%s1 + $0x8] sm:$0xff]
      %v1910 = vld [vmem:[%s1 + $0x10] sm:$0xff]
      %v1911 = vld [vmem:[%s1 + $0x18] sm:$0xff]
      %v1912 = vld [vmem:[%s1 + $0x20] sm:$0xf]
      %v1913 = vld [vmem:[%s2] sm:$0x1]
      %v1915 = vlaneseq
      %v1916 = vshrl.u32 %v1915, 7
      %v1917 = vsub.s32 0, %v1916
      %v1918 = vrot.slane %v1913, %v1917
      %vm1920 = vcmask 293888
      %v1922 = vsel %vm1920, %v1876, 0
      %v1925 = vsel %vm1920, %v1877, 0
      %v1928 = vsel %vm1920, %v1878, 0
      %v1931 = vsel %vm1920, %v1879, 0
      %v1934 = vsel %vm1920, %v1880, 0
      %v1937 = vsel %vm1920, %v1881, 0
      %v1940 = vsel %vm1920, %v1882, 0
      %v1943 = vsel %vm1920, %v1883, 0
      %v1946 = vsel %vm1920, %v1884, 0
      %v1949 = vsel %vm1920, %v1885, 0
      %v1952 = vsel %vm1920, %v1886, 0
      %v1955 = vsel %vm1920, %v1887, 0
      %v1958 = vsel %vm1920, %v1888, 0
      %v1961 = vsel %vm1920, %v1889, 0
      %v1964 = vsel %vm1920, %v1890, 0
      %v1967 = vsel %vm1920, %v1891, 0
      %v1970 = vsel %vm1920, %v1892, 0
      %v1973 = vsel %vm1920, %v1893, 0
      %v1976 = vsel %vm1920, %v1894, 0
      %v1979 = vsel %vm1920, %v1895, 0
      %v1982 = vsel %vm1920, %v1896, 0
      %v1985 = vsel %vm1920, %v1897, 0
      %v1988 = vsel %vm1920, %v1898, 0
      %v1991 = vsel %vm1920, %v1899, 0
      %v1994 = vsel %vm1920, %v1900, 0
      %v1997 = vsel %vm1920, %v1901, 0
      %v2000 = vsel %vm1920, %v1902, 0
      %v2003 = vsel %vm1920, %v1903, 0
      %v2006 = vsel %vm1920, %v1904, 0
      %v2009 = vsel %vm1920, %v1905, 0
      %v2012 = vsel %vm1920, %v1906, 0
      %v2015 = vsel %vm1920, %v1907, 0
      %vm2017 = vcmask 1043456
      %v2019 = vsel %vm2017, %v1912, 0
      %2021 = vmatprep.subr.mxu0 0.0
      %2022 = vmatpush1.msra.mxu0 %v1908
      %2023 = vmatprep.subr.mxu0 0.0
      %2024 = vmatpush1.msra.mxu0 %v1909
      %2025 = vmatprep.subr.mxu0 0.0
      %2026 = vmatpush1.msra.mxu0 %v1910
      %2027 = vmatprep.subr.mxu0 0.0
      %2028 = vmatpush1.msra.mxu0 %v1911
      %2029 = vmatprep.subr.mxu0 0.0
      %2030 = vmatpush1.msra.mxu0 %v2019
      %2031 = vmatprep.subr.mxu0 0.0
      %2032 = vmatpush1.msra.mxu0 0.0
      %2033 = vmatprep.subr.mxu0 0.0
      %2034 = vmatpush1.msra.mxu0 0.0
      %2035 = vmatprep.subr.mxu0 0.0
      %2036 = vmatpush1.msra.mxu0 0.0
      %2037 = vmatprep.subr.mxu0 0.0
      %2038 = vmatpush1.msra.mxu0 0.0
      %2039 = vmatprep.subr.mxu0 0.0
      %2040 = vmatpush1.msra.mxu0 0.0
      %2041 = vmatprep.subr.mxu0 0.0
      %2042 = vmatpush1.msra.mxu0 0.0
      %2043 = vmatprep.subr.mxu0 0.0
      %2044 = vmatpush1.msra.mxu0 0.0
      %2045 = vmatprep.subr.mxu0 0.0
      %2046 = vmatpush1.msra.mxu0 0.0
      %2047 = vmatprep.subr.mxu0 0.0
      %2048 = vmatpush1.msra.mxu0 0.0
      %2049 = vmatprep.subr.mxu0 0.0
      %2050 = vmatpush1.msra.mxu0 0.0
      %2051 = vmatprep.subr.mxu0 0.0
      %2052 = vmatpush1.msra.mxu0 0.0
      %2053 = vmatprep.subr.mxu0 0.0
      %2054 = vmatpush1.msra.mxu0 0.0
      %2055 = vmatprep.subr.mxu0 0.0
      %2056 = vmatpush1.msra.mxu0 0.0
      %2057 = vmatprep.subr.mxu0 0.0
      %2058 = vmatpush1.msra.mxu0 0.0
      %2059 = vmatprep.subr.mxu0 0.0
      %2060 = vmatpush1.msra.mxu0 0.0
      %2061 = vmatprep.subr.mxu0 0.0
      %2062 = vmatpush1.msra.mxu0 0.0
      %2063 = vmatprep.subr.mxu0 0.0
      %2064 = vmatpush1.msra.mxu0 0.0
      %2065 = vmatprep.subr.mxu0 0.0
      %2066 = vmatpush1.msra.mxu0 0.0
      %2067 = vmatprep.subr.mxu0 0.0
      %2068 = vmatpush1.msra.mxu0 0.0
      %2069 = vmatprep.subr.mxu0 0.0
      %2070 = vmatpush1.msra.mxu0 0.0
      %2071 = vmatprep.subr.mxu0 0.0
      %2072 = vmatpush1.msra.mxu0 0.0
      %2073 = vmatprep.subr.mxu0 0.0
      %2074 = vmatpush1.msra.mxu0 0.0
      %2075 = vmatprep.subr.mxu0 0.0
      %2076 = vmatpush1.msra.mxu0 0.0
      %2077 = vmatprep.subr.mxu0 0.0
      %2078 = vmatpush1.msra.mxu0 0.0
      %2079 = vmatprep.subr.mxu0 0.0
      %2080 = vmatpush1.msra.mxu0 0.0
      %2081 = vmatprep.subr.mxu0 0.0
      %2082 = vmatpush1.msra.mxu0 0.0
      %2083 = vmatprep.subr.mxu0 0.0
      %2084 = vmatpush1.msra.mxu0 0.0
      %2085 = vmatprep.mubr.f32.mxu0 0.0
      %2086 = vmatmul.mubr.f32.gmra.mrb[0].mxu0 %v1922
      %v2087 = vpop.f32.mrb[0].mxu0
      %v2088 = vadd.f32 %v1918, %v2087
      %v2089 = vpop.f32.mrb[0].mxu0
      %2090 = vmatprep.mubr.f32.mxu0 0.0
      %2091 = vmatmul.mubr.f32.gmra.mrb[0].mxu0 %v1925
      %v2092 = vpop.f32.mrb[0].mxu0
      %v2093 = vadd.f32 %v1918, %v2092
      %v2094 = vpop.f32.mrb[0].mxu0
      %2095 = vmatprep.mubr.f32.mxu0 0.0
      %2096 = vmatmul.mubr.f32.gmra.mrb[0].mxu0 %v1928
      %v2097 = vpop.f32.mrb[0].mxu0
      %v2098 = vadd.f32 %v1918, %v2097
      %v2099 = vpop.f32.mrb[0].mxu0
      %2100 = vmatprep.mubr.f32.mxu0 0.0
      %2101 = vmatmul.mubr.f32.gmra.mrb[0].mxu0 %v1931
      %v2102 = vpop.f32.mrb[0].mxu0
      %v2103 = vadd.f32 %v1918, %v2102
      %v2104 = vpop.f32.mrb[0].mxu0
      %2105 = vmatprep.mubr.f32.mxu0 0.0
      %2106 = vmatmul.mubr.f32.gmra.mrb[0].mxu0 %v1934
      %v2107 = vpop.f32.mrb[0].mxu0
      %v2108 = vadd.f32 %v1918, %v2107
      %v2109 = vpop.f32.mrb[0].mxu0
      %2110 = vmatprep.mubr.f32.mxu0 0.0
      %2111 = vmatmul.mubr.f32.gmra.mrb[0].mxu0 %v1937
      %v2112 = vpop.f32.mrb[0].mxu0
      %v2113 = vadd.f32 %v1918, %v2112
      %v2114 = vpop.f32.mrb[0].mxu0
      %2115 = vmatprep.mubr.f32.mxu0 0.0
      %2116 = vmatmul.mubr.f32.gmra.mrb[0].mxu0 %v1940
      %v2117 = vpop.f32.mrb[0].mxu0
      %v2118 = vadd.f32 %v1918, %v2117
      %v2119 = vpop.f32.mrb[0].mxu0
      %2120 = vmatprep.mubr.f32.mxu0 0.0
      %2121 = vmatmul.mubr.f32.gmra.mrb[0].mxu0 %v1943
      %v2122 = vpop.f32.mrb[0].mxu0
      %v2123 = vadd.f32 %v1918, %v2122
      %v2124 = vpop.f32.mrb[0].mxu0
      %2125 = vmatprep.mubr.f32.mxu0 0.0
      %2126 = vmatmul.mubr.f32.gmra.mrb[0].mxu0 %v1946
      %v2127 = vpop.f32.mrb[0].mxu0
      %v2128 = vadd.f32 %v1918, %v2127
      %v2129 = vpop.f32.mrb[0].mxu0
      %2130 = vmatprep.mubr.f32.mxu0 0.0
      %2131 = vmatmul.mubr.f32.gmra.mrb[0].mxu0 %v1949
      %v2132 = vpop.f32.mrb[0].mxu0
      %v2133 = vadd.f32 %v1918, %v2132
      %v2134 = vpop.f32.mrb[0].mxu0
      %2135 = vmatprep.mubr.f32.mxu0 0.0
      %2136 = vmatmul.mubr.f32.gmra.mrb[0].mxu0 %v1952
      %v2137 = vpop.f32.mrb[0].mxu0
      %v2138 = vadd.f32 %v1918, %v2137
      %v2139 = vpop.f32.mrb[0].mxu0
      %2140 = vmatprep.mubr.f32.mxu0 0.0
      %2141 = vmatmul.mubr.f32.gmra.mrb[0].mxu0 %v1955
      %v2142 = vpop.f32.mrb[0].mxu0
      %v2143 = vadd.f32 %v1918, %v2142
      %v2144 = vpop.f32.mrb[0].mxu0
      %2145 = vmatprep.mubr.f32.mxu0 0.0
      %2146 = vmatmul.mubr.f32.gmra.mrb[0].mxu0 %v1958
      %v2147 = vpop.f32.mrb[0].mxu0
      %v2148 = vadd.f32 %v1918, %v2147
      %v2149 = vpop.f32.mrb[0].mxu0
      %2150 = vmatprep.mubr.f32.mxu0 0.0
      %2151 = vmatmul.mubr.f32.gmra.mrb[0].mxu0 %v1961
      %v2152 = vpop.f32.mrb[0].mxu0
      %v2153 = vadd.f32 %v1918, %v2152
      %v2154 = vpop.f32.mrb[0].mxu0
      %2155 = vmatprep.mubr.f32.mxu0 0.0
      %2156 = vmatmul.mubr.f32.gmra.mrb[0].mxu0 %v1964
      %v2157 = vpop.f32.mrb[0].mxu0
      %v2158 = vadd.f32 %v1918, %v2157
      %v2159 = vpop.f32.mrb[0].mxu0
      %2160 = vmatprep.mubr.f32.mxu0 0.0
      %2161 = vmatmul.mubr.f32.gmra.mrb[0].mxu0 %v1967
      %v2162 = vpop.f32.mrb[0].mxu0
      %v2163 = vadd.f32 %v1918, %v2162
      %v2164 = vpop.f32.mrb[0].mxu0
      %2165 = vmatprep.mubr.f32.mxu0 0.0
      %2166 = vmatmul.mubr.f32.gmra.mrb[0].mxu0 %v1970
      %v2167 = vpop.f32.mrb[0].mxu0
      %v2168 = vadd.f32 %v1918, %v2167
      %v2169 = vpop.f32.mrb[0].mxu0
      %2170 = vmatprep.mubr.f32.mxu0 0.0
      %2171 = vmatmul.mubr.f32.gmra.mrb[0].mxu0 %v1973
      %v2172 = vpop.f32.mrb[0].mxu0
      %v2173 = vadd.f32 %v1918, %v2172
      %v2174 = vpop.f32.mrb[0].mxu0
      %2175 = vmatprep.mubr.f32.mxu0 0.0
      %2176 = vmatmul.mubr.f32.gmra.mrb[0].mxu0 %v1976
      %v2177 = vpop.f32.mrb[0].mxu0
      %v2178 = vadd.f32 %v1918, %v2177
      %v2179 = vpop.f32.mrb[0].mxu0
      %2180 = vmatprep.mubr.f32.mxu0 0.0
      %2181 = vmatmul.mubr.f32.gmra.mrb[0].mxu0 %v1979
      %v2182 = vpop.f32.mrb[0].mxu0
      %v2183 = vadd.f32 %v1918, %v2182
      %v2184 = vpop.f32.mrb[0].mxu0
      %2185 = vmatprep.mubr.f32.mxu0 0.0
      %2186 = vmatmul.mubr.f32.gmra.mrb[0].mxu0 %v1982
      %v2187 = vpop.f32.mrb[0].mxu0
      %v2188 = vadd.f32 %v1918, %v2187
      %v2189 = vpop.f32.mrb[0].mxu0
      %2190 = vmatprep.mubr.f32.mxu0 0.0
      %2191 = vmatmul.mubr.f32.gmra.mrb[0].mxu0 %v1985
      %v2192 = vpop.f32.mrb[0].mxu0
      %v2193 = vadd.f32 %v1918, %v2192
      %v2194 = vpop.f32.mrb[0].mxu0
      %2195 = vmatprep.mubr.f32.mxu0 0.0
      %2196 = vmatmul.mubr.f32.gmra.mrb[0].mxu0 %v1988
      %v2197 = vpop.f32.mrb[0].mxu0
      %v2198 = vadd.f32 %v1918, %v2197
      %v2199 = vpop.f32.mrb[0].mxu0
      %2200 = vmatprep.mubr.f32.mxu0 0.0
      %2201 = vmatmul.mubr.f32.gmra.mrb[0].mxu0 %v1991
      %v2202 = vpop.f32.mrb[0].mxu0
      %v2203 = vadd.f32 %v1918, %v2202
      %v2204 = vpop.f32.mrb[0].mxu0
      %2205 = vmatprep.mubr.f32.mxu0 0.0
      %2206 = vmatmul.mubr.f32.gmra.mrb[0].mxu0 %v1994
      %v2207 = vpop.f32.mrb[0].mxu0
      %v2208 = vadd.f32 %v1918, %v2207
      %v2209 = vpop.f32.mrb[0].mxu0
      %2210 = vmatprep.mubr.f32.mxu0 0.0
      %2211 = vmatmul.mubr.f32.gmra.mrb[0].mxu0 %v1997
      %v2212 = vpop.f32.mrb[0].mxu0
      %v2213 = vadd.f32 %v1918, %v2212
      %v2214 = vpop.f32.mrb[0].mxu0
      %2215 = vmatprep.mubr.f32.mxu0 0.0
      %2216 = vmatmul.mubr.f32.gmra.mrb[0].mxu0 %v2000
      %v2217 = vpop.f32.mrb[0].mxu0
      %v2218 = vadd.f32 %v1918, %v2217
      %v2219 = vpop.f32.mrb[0].mxu0
      %2220 = vmatprep.mubr.f32.mxu0 0.0
      %2221 = vmatmul.mubr.f32.gmra.mrb[0].mxu0 %v2003
      %v2222 = vpop.f32.mrb[0].mxu0
      %v2223 = vadd.f32 %v1918, %v2222
      %v2224 = vpop.f32.mrb[0].mxu0
      %2225 = vmatprep.mubr.f32.mxu0 0.0
      %2226 = vmatmul.mubr.f32.gmra.mrb[0].mxu0 %v2006
      %v2227 = vpop.f32.mrb[0].mxu0
      %v2228 = vadd.f32 %v1918, %v2227
      %v2229 = vpop.f32.mrb[0].mxu0
      %2230 = vmatprep.mubr.f32.mxu0 0.0
      %2231 = vmatmul.mubr.f32.gmra.mrb[0].mxu0 %v2009
      %v2232 = vpop.f32.mrb[0].mxu0
      %v2233 = vadd.f32 %v1918, %v2232
      %v2234 = vpop.f32.mrb[0].mxu0
      %2235 = vmatprep.mubr.f32.mxu0 0.0
      %2236 = vmatmul.mubr.f32.gmra.mrb[0].mxu0 %v2012
      %v2237 = vpop.f32.mrb[0].mxu0
      %v2238 = vadd.f32 %v1918, %v2237
      %v2239 = vpop.f32.mrb[0].mxu0
      %2240 = vmatprep.mubr.f32.mxu0 0.0
      %2241 = vmatmul.mubr.f32.gmra.mrb[0].mxu0 %v2015
      %v2242 = vpop.f32.mrb[0].mxu0
      %v2243 = vadd.f32 %v1918, %v2242
      %v2244 = vpop.f32.mrb[0].mxu0
      %2245 = vdwg.mxu0
      %v2246 = vmax.f32 %v2088, 0.0
      %v2247 = vmax.f32 %v2093, 0.0
      %v2248 = vmax.f32 %v2098, 0.0
      %v2249 = vmax.f32 %v2103, 0.0
      %v2250 = vmax.f32 %v2108, 0.0
      %v2251 = vmax.f32 %v2113, 0.0
      %v2252 = vmax.f32 %v2118, 0.0
      %v2253 = vmax.f32 %v2123, 0.0
      %v2254 = vmax.f32 %v2128, 0.0
      %v2255 = vmax.f32 %v2133, 0.0
      %v2256 = vmax.f32 %v2138, 0.0
      %v2257 = vmax.f32 %v2143, 0.0
      %v2258 = vmax.f32 %v2148, 0.0
      %v2259 = vmax.f32 %v2153, 0.0
      %v2260 = vmax.f32 %v2158, 0.0
      %v2261 = vmax.f32 %v2163, 0.0
      %v2262 = vmax.f32 %v2168, 0.0
      %v2263 = vmax.f32 %v2173, 0.0
      %v2264 = vmax.f32 %v2178, 0.0
      %v2265 = vmax.f32 %v2183, 0.0
      %v2266 = vmax.f32 %v2188, 0.0
      %v2267 = vmax.f32 %v2193, 0.0
      %v2268 = vmax.f32 %v2198, 0.0
      %v2269 = vmax.f32 %v2203, 0.0
      %v2270 = vmax.f32 %v2208, 0.0
      %v2271 = vmax.f32 %v2213, 0.0
      %v2272 = vmax.f32 %v2218, 0.0
      %v2273 = vmax.f32 %v2223, 0.0
      %v2274 = vmax.f32 %v2228, 0.0
      %v2275 = vmax.f32 %v2233, 0.0
      %v2276 = vmax.f32 %v2238, 0.0
      %v2277 = vmax.f32 %v2243, 0.0
      %2278 = vst.msk [vmem:[#allocation3] sm:$0xff] %vm1677, 0.0
      %2279 = vst.msk [vmem:[#allocation3 + $0x8] sm:$0xff] %vm1677, 0.0
      %vm2280 = vcmask 58368
      %2281 = vst.msk [vmem:[#allocation3 + $0x10] sm:$0x3] %vm2280, 0.0
      %s2282 = scalar_lea.vmem [#allocation3], 408
      %2283 = vst.msk [vmem:[%s2282] sm:$0xff] %vm1677, 0.0
      %2284 = vst.msk [vmem:[%s2282 + $0x8] sm:$0xff] %vm1677, 0.0
      %2285 = vst.msk [vmem:[%s2282 + $0x10] sm:$0x3] %vm2280, 0.0
      %s2286 = scalar_lea.vmem [#allocation3], 24
      %vm2287 = vcmask 57344
      %2288 = vst.msk [vmem:[%s2286] sm:$0x1] %vm2287, 0.0
      %2289 = vst.msk [vmem:[%s2286 + $0x18] sm:$0x1] %vm2287, 0.0
      %2290 = vst.msk [vmem:[%s2286 + $0x30] sm:$0x1] %vm2287, 0.0
      %2291 = vst.msk [vmem:[%s2286 + $0x48] sm:$0x1] %vm2287, 0.0
      %2292 = vst.msk [vmem:[%s2286 + $0x60] sm:$0x1] %vm2287, 0.0
      %2293 = vst.msk [vmem:[%s2286 + $0x78] sm:$0x1] %vm2287, 0.0
      %2294 = vst.msk [vmem:[%s2286 + $0x90] sm:$0x1] %vm2287, 0.0
      %2295 = vst.msk [vmem:[%s2286 + $0xa8] sm:$0x1] %vm2287, 0.0
      %2296 = vst.msk [vmem:[%s2286 + $0xc0] sm:$0x1] %vm2287, 0.0
      %2297 = vst.msk [vmem:[%s2286 + $0xd8] sm:$0x1] %vm2287, 0.0
      %2298 = vst.msk [vmem:[%s2286 + $0xf0] sm:$0x1] %vm2287, 0.0
      %2299 = vst.msk [vmem:[%s2286 + $0x108] sm:$0x1] %vm2287, 0.0
      %2300 = vst.msk [vmem:[%s2286 + $0x120] sm:$0x1] %vm2287, 0.0
      %2301 = vst.msk [vmem:[%s2286 + $0x138] sm:$0x1] %vm2287, 0.0
      %2302 = vst.msk [vmem:[%s2286 + $0x150] sm:$0x1] %vm2287, 0.0
      %2303 = vst.msk [vmem:[%s2286 + $0x168] sm:$0x1] %vm2287, 0.0
      %2304 = vst.msk [vmem:[%s2286 + $0x11] sm:$0x1] %vm2287, 0.0
      %2305 = vst.msk [vmem:[%s2286 + $0x29] sm:$0x1] %vm2287, 0.0
      %2306 = vst.msk [vmem:[%s2286 + $0x41] sm:$0x1] %vm2287, 0.0
      %2307 = vst.msk [vmem:[%s2286 + $0x59] sm:$0x1] %vm2287, 0.0
      %2308 = vst.msk [vmem:[%s2286 + $0x71] sm:$0x1] %vm2287, 0.0
      %2309 = vst.msk [vmem:[%s2286 + $0x89] sm:$0x1] %vm2287, 0.0
      %2310 = vst.msk [vmem:[%s2286 + $0xa1] sm:$0x1] %vm2287, 0.0
      %2311 = vst.msk [vmem:[%s2286 + $0xb9] sm:$0x1] %vm2287, 0.0
      %2312 = vst.msk [vmem:[%s2286 + $0xd1] sm:$0x1] %vm2287, 0.0
      %2313 = vst.msk [vmem:[%s2286 + $0xe9] sm:$0x1] %vm2287, 0.0
      %2314 = vst.msk [vmem:[%s2286 + $0x101] sm:$0x1] %vm2287, 0.0
      %2315 = vst.msk [vmem:[%s2286 + $0x119] sm:$0x1] %vm2287, 0.0
      %2316 = vst.msk [vmem:[%s2286 + $0x131] sm:$0x1] %vm2287, 0.0
      %2317 = vst.msk [vmem:[%s2286 + $0x149] sm:$0x1] %vm2287, 0.0
      %2318 = vst.msk [vmem:[%s2286 + $0x161] sm:$0x1] %vm2287, 0.0
      %2319 = vst.msk [vmem:[%s2286 + $0x179] sm:$0x1] %vm2287, 0.0
      %2320 = vst.msk [vmem:[%s2286 + $0x1] sm:$0xff] %vm1677, %v2246
      %2321 = vst.msk [vmem:[%s2286 + $0x9] sm:$0xff] %vm1677, %v2247
      %2322 = vst.msk [vmem:[%s2286 + $0x19] sm:$0xff] %vm1677, %v2248
      %2323 = vst.msk [vmem:[%s2286 + $0x21] sm:$0xff] %vm1677, %v2249
      %2324 = vst.msk [vmem:[%s2286 + $0x31] sm:$0xff] %vm1677, %v2250
      %2325 = vst.msk [vmem:[%s2286 + $0x39] sm:$0xff] %vm1677, %v2251
      %2326 = vst.msk [vmem:[%s2286 + $0x49] sm:$0xff] %vm1677, %v2252
      %2327 = vst.msk [vmem:[%s2286 + $0x51] sm:$0xff] %vm1677, %v2253
      %2328 = vst.msk [vmem:[%s2286 + $0x61] sm:$0xff] %vm1677, %v2254
      %2329 = vst.msk [vmem:[%s2286 + $0x69] sm:$0xff] %vm1677, %v2255
      %2330 = vst.msk [vmem:[%s2286 + $0x79] sm:$0xff] %vm1677, %v2256
      %2331 = vst.msk [vmem:[%s2286 + $0x81] sm:$0xff] %vm1677, %v2257
      %2332 = vst.msk [vmem:[%s2286 + $0x91] sm:$0xff] %vm1677, %v2258
      %2333 = vst.msk [vmem:[%s2286 + $0x99] sm:$0xff] %vm1677, %v2259
      %2334 = vst.msk [vmem:[%s2286 + $0xa9] sm:$0xff] %vm1677, %v2260
      %2335 = vst.msk [vmem:[%s2286 + $0xb1] sm:$0xff] %vm1677, %v2261
      %2336 = vst.msk [vmem:[%s2286 + $0xc1] sm:$0xff] %vm1677, %v2262
      %2337 = vst.msk [vmem:[%s2286 + $0xc9] sm:$0xff] %vm1677, %v2263
      %2338 = vst.msk [vmem:[%s2286 + $0xd9] sm:$0xff] %vm1677, %v2264
      %2339 = vst.msk [vmem:[%s2286 + $0xe1] sm:$0xff] %vm1677, %v2265
      %2340 = vst.msk [vmem:[%s2286 + $0xf1] sm:$0xff] %vm1677, %v2266
      %2341 = vst.msk [vmem:[%s2286 + $0xf9] sm:$0xff] %vm1677, %v2267
      %2342 = vst.msk [vmem:[%s2286 + $0x109] sm:$0xff] %vm1677, %v2268
      %2343 = vst.msk [vmem:[%s2286 + $0x111] sm:$0xff] %vm1677, %v2269
      %2344 = vst.msk [vmem:[%s2286 + $0x121] sm:$0xff] %vm1677, %v2270
      %2345 = vst.msk [vmem:[%s2286 + $0x129] sm:$0xff] %vm1677, %v2271
      %2346 = vst.msk [vmem:[%s2286 + $0x139] sm:$0xff] %vm1677, %v2272
      %2347 = vst.msk [vmem:[%s2286 + $0x141] sm:$0xff] %vm1677, %v2273
      %2348 = vst.msk [vmem:[%s2286 + $0x151] sm:$0xff] %vm1677, %v2274
      %2349 = vst.msk [vmem:[%s2286 + $0x159] sm:$0xff] %vm1677, %v2275
      %2350 = vst.msk [vmem:[%s2286 + $0x169] sm:$0xff] %vm1677, %v2276
      %2351 = vst.msk [vmem:[%s2286 + $0x171] sm:$0xff] %vm1677, %v2277
      %v2352 = vld [vmem:[#allocation3] sm:$0xff]
      %v2353 = vld [vmem:[#allocation3 + $0x8] sm:$0xff]
      %v2354 = vld [vmem:[#allocation3 + $0x18] sm:$0xff]
      %v2355 = vld [vmem:[#allocation3 + $0x20] sm:$0xff]
      %v2356 = vld [vmem:[#allocation3 + $0x30] sm:$0xff]
      %v2357 = vld [vmem:[#allocation3 + $0x38] sm:$0xff]
      %v2358 = vld [vmem:[#allocation3 + $0x48] sm:$0xff]
      %v2359 = vld [vmem:[#allocation3 + $0x50] sm:$0xff]
      %v2360 = vld [vmem:[#allocation3 + $0x60] sm:$0xff]
      %v2361 = vld [vmem:[#allocation3 + $0x68] sm:$0xff]
      %v2362 = vld [vmem:[#allocation3 + $0x78] sm:$0xff]
      %v2363 = vld [vmem:[#allocation3 + $0x80] sm:$0xff]
      %v2364 = vld [vmem:[#allocation3 + $0x90] sm:$0xff]
      %v2365 = vld [vmem:[#allocation3 + $0x98] sm:$0xff]
      %v2366 = vld [vmem:[#allocation3 + $0xa8] sm:$0xff]
      %v2367 = vld [vmem:[#allocation3 + $0xb0] sm:$0xff]
      %v2368 = vld [vmem:[#allocation3 + $0xc0] sm:$0xff]
      %v2369 = vld [vmem:[#allocation3 + $0xc8] sm:$0xff]
      %v2370 = vld [vmem:[#allocation3 + $0xd8] sm:$0xff]
      %v2371 = vld [vmem:[#allocation3 + $0xe0] sm:$0xff]
      %v2372 = vld [vmem:[#allocation3 + $0xf0] sm:$0xff]
      %v2373 = vld [vmem:[#allocation3 + $0xf8] sm:$0xff]
      %v2374 = vld [vmem:[#allocation3 + $0x108] sm:$0xff]
      %v2375 = vld [vmem:[#allocation3 + $0x110] sm:$0xff]
      %v2376 = vld [vmem:[#allocation3 + $0x120] sm:$0xff]
      %v2377 = vld [vmem:[#allocation3 + $0x128] sm:$0xff]
      %v2378 = vld [vmem:[#allocation3 + $0x138] sm:$0xff]
      %v2379 = vld [vmem:[#allocation3 + $0x140] sm:$0xff]
      %v2380 = vld [vmem:[#allocation3 + $0x150] sm:$0xff]
      %v2381 = vld [vmem:[#allocation3 + $0x158] sm:$0xff]
      %v2382 = vld [vmem:[#allocation3 + $0x168] sm:$0xff]
      %v2383 = vld [vmem:[#allocation3 + $0x170] sm:$0xff]
      %v2384 = vld [vmem:[#allocation3 + $0x1] sm:$0xff]
      %v2385 = vld [vmem:[#allocation3 + $0x9] sm:$0xff]
      %v2386 = vld [vmem:[#allocation3 + $0x19] sm:$0xff]
      %v2387 = vld [vmem:[#allocation3 + $0x21] sm:$0xff]
      %v2388 = vld [vmem:[#allocation3 + $0x31] sm:$0xff]
      %v2389 = vld [vmem:[#allocation3 + $0x39] sm:$0xff]
      %v2390 = vld [vmem:[#allocation3 + $0x49] sm:$0xff]
      %v2391 = vld [vmem:[#allocation3 + $0x51] sm:$0xff]
      %v2392 = vld [vmem:[#allocation3 + $0x61] sm:$0xff]
      %v2393 = vld [vmem:[#allocation3 + $0x69] sm:$0xff]
      %v2394 = vld [vmem:[#allocation3 + $0x79] sm:$0xff]
      %v2395 = vld [vmem:[#allocation3 + $0x81] sm:$0xff]
      %v2396 = vld [vmem:[#allocation3 + $0x91] sm:$0xff]
      %v2397 = vld [vmem:[#allocation3 + $0x99] sm:$0xff]
      %v2398 = vld [vmem:[#allocation3 + $0xa9] sm:$0xff]
      %v2399 = vld [vmem:[#allocation3 + $0xb1] sm:$0xff]
      %v2400 = vld [vmem:[#allocation3 + $0xc1] sm:$0xff]
      %v2401 = vld [vmem:[#allocation3 + $0xc9] sm:$0xff]
      %v2402 = vld [vmem:[#allocation3 + $0xd9] sm:$0xff]
      %v2403 = vld [vmem:[#allocation3 + $0xe1] sm:$0xff]
      %v2404 = vld [vmem:[#allocation3 + $0xf1] sm:$0xff]
      %v2405 = vld [vmem:[#allocation3 + $0xf9] sm:$0xff]
      %v2406 = vld [vmem:[#allocation3 + $0x109] sm:$0xff]
      %v2407 = vld [vmem:[#allocation3 + $0x111] sm:$0xff]
      %v2408 = vld [vmem:[#allocation3 + $0x121] sm:$0xff]
      %v2409 = vld [vmem:[#allocation3 + $0x129] sm:$0xff]
      %v2410 = vld [vmem:[#allocation3 + $0x139] sm:$0xff]
      %v2411 = vld [vmem:[#allocation3 + $0x141] sm:$0xff]
      %v2412 = vld [vmem:[#allocation3 + $0x151] sm:$0xff]
      %v2413 = vld [vmem:[#allocation3 + $0x159] sm:$0xff]
      %v2414 = vld [vmem:[#allocation3 + $0x169] sm:$0xff]
      %v2415 = vld [vmem:[#allocation3 + $0x171] sm:$0xff]
      %v2416 = vld [vmem:[#allocation3 + $0x2] sm:$0xff]
      %v2417 = vld [vmem:[#allocation3 + $0xa] sm:$0xff]
      %v2418 = vld [vmem:[#allocation3 + $0x1a] sm:$0xff]
      %v2419 = vld [vmem:[#allocation3 + $0x22] sm:$0xff]
      %v2420 = vld [vmem:[#allocation3 + $0x32] sm:$0xff]
      %v2421 = vld [vmem:[#allocation3 + $0x3a] sm:$0xff]
      %v2422 = vld [vmem:[#allocation3 + $0x4a] sm:$0xff]
      %v2423 = vld [vmem:[#allocation3 + $0x52] sm:$0xff]
      %v2424 = vld [vmem:[#allocation3 + $0x62] sm:$0xff]
      %v2425 = vld [vmem:[#allocation3 + $0x6a] sm:$0xff]
      %v2426 = vld [vmem:[#allocation3 + $0x7a] sm:$0xff]
      %v2427 = vld [vmem:[#allocation3 + $0x82] sm:$0xff]
      %v2428 = vld [vmem:[#allocation3 + $0x92] sm:$0xff]
      %v2429 = vld [vmem:[#allocation3 + $0x9a] sm:$0xff]
      %v2430 = vld [vmem:[#allocation3 + $0xaa] sm:$0xff]
      %v2431 = vld [vmem:[#allocation3 + $0xb2] sm:$0xff]
      %v2432 = vld [vmem:[#allocation3 + $0xc2] sm:$0xff]
      %v2433 = vld [vmem:[#allocation3 + $0xca] sm:$0xff]
      %v2434 = vld [vmem:[#allocation3 + $0xda] sm:$0xff]
      %v2435 = vld [vmem:[#allocation3 + $0xe2] sm:$0xff]
      %v2436 = vld [vmem:[#allocation3 + $0xf2] sm:$0xff]
      %v2437 = vld [vmem:[#allocation3 + $0xfa] sm:$0xff]
      %v2438 = vld [vmem:[#allocation3 + $0x10a] sm:$0xff]
      %v2439 = vld [vmem:[#allocation3 + $0x112] sm:$0xff]
      %v2440 = vld [vmem:[#allocation3 + $0x122] sm:$0xff]
      %v2441 = vld [vmem:[#allocation3 + $0x12a] sm:$0xff]
      %v2442 = vld [vmem:[#allocation3 + $0x13a] sm:$0xff]
      %v2443 = vld [vmem:[#allocation3 + $0x142] sm:$0xff]
      %v2444 = vld [vmem:[#allocation3 + $0x152] sm:$0xff]
      %v2445 = vld [vmem:[#allocation3 + $0x15a] sm:$0xff]
      %v2446 = vld [vmem:[#allocation3 + $0x16a] sm:$0xff]
      %v2447 = vld [vmem:[#allocation3 + $0x172] sm:$0xff]
      %v2448 = vld [vmem:[%s2286] sm:$0xff]
      %v2449 = vld [vmem:[%s2286 + $0x8] sm:$0xff]
      %v2450 = vld [vmem:[%s2286 + $0x18] sm:$0xff]
      %v2451 = vld [vmem:[%s2286 + $0x20] sm:$0xff]
      %v2452 = vld [vmem:[%s2286 + $0x30] sm:$0xff]
      %v2453 = vld [vmem:[%s2286 + $0x38] sm:$0xff]
      %v2454 = vld [vmem:[%s2286 + $0x48] sm:$0xff]
      %v2455 = vld [vmem:[%s2286 + $0x50] sm:$0xff]
      %v2456 = vld [vmem:[%s2286 + $0x60] sm:$0xff]
      %v2457 = vld [vmem:[%s2286 + $0x68] sm:$0xff]
      %v2458 = vld [vmem:[%s2286 + $0x78] sm:$0xff]
      %v2459 = vld [vmem:[%s2286 + $0x80] sm:$0xff]
      %v2460 = vld [vmem:[%s2286 + $0x90] sm:$0xff]
      %v2461 = vld [vmem:[%s2286 + $0x98] sm:$0xff]
      %v2462 = vld [vmem:[%s2286 + $0xa8] sm:$0xff]
      %v2463 = vld [vmem:[%s2286 + $0xb0] sm:$0xff]
      %v2464 = vld [vmem:[%s2286 + $0xc0] sm:$0xff]
      %v2465 = vld [vmem:[%s2286 + $0xc8] sm:$0xff]
      %v2466 = vld [vmem:[%s2286 + $0xd8] sm:$0xff]
      %v2467 = vld [vmem:[%s2286 + $0xe0] sm:$0xff]
      %v2468 = vld [vmem:[%s2286 + $0xf0] sm:$0xff]
      %v2469 = vld [vmem:[%s2286 + $0xf8] sm:$0xff]
      %v2470 = vld [vmem:[%s2286 + $0x108] sm:$0xff]
      %v2471 = vld [vmem:[%s2286 + $0x110] sm:$0xff]
      %v2472 = vld [vmem:[%s2286 + $0x120] sm:$0xff]
      %v2473 = vld [vmem:[%s2286 + $0x128] sm:$0xff]
      %v2474 = vld [vmem:[%s2286 + $0x138] sm:$0xff]
      %v2475 = vld [vmem:[%s2286 + $0x140] sm:$0xff]
      %v2476 = vld [vmem:[%s2286 + $0x150] sm:$0xff]
      %v2477 = vld [vmem:[%s2286 + $0x158] sm:$0xff]
      %v2478 = vld [vmem:[%s2286 + $0x168] sm:$0xff]
      %v2479 = vld [vmem:[%s2286 + $0x170] sm:$0xff]
      %v2480 = vld [vmem:[%s2286 + $0x1] sm:$0xff]
      %v2481 = vld [vmem:[%s2286 + $0x9] sm:$0xff]
      %v2482 = vld [vmem:[%s2286 + $0x19] sm:$0xff]
      %v2483 = vld [vmem:[%s2286 + $0x21] sm:$0xff]
      %v2484 = vld [vmem:[%s2286 + $0x31] sm:$0xff]
      %v2485 = vld [vmem:[%s2286 + $0x39] sm:$0xff]
      %v2486 = vld [vmem:[%s2286 + $0x49] sm:$0xff]
      %v2487 = vld [vmem:[%s2286 + $0x51] sm:$0xff]
      %v2488 = vld [vmem:[%s2286 + $0x61] sm:$0xff]
      %v2489 = vld [vmem:[%s2286 + $0x69] sm:$0xff]
      %v2490 = vld [vmem:[%s2286 + $0x79] sm:$0xff]
      %v2491 = vld [vmem:[%s2286 + $0x81] sm:$0xff]
      %v2492 = vld [vmem:[%s2286 + $0x91] sm:$0xff]
      %v2493 = vld [vmem:[%s2286 + $0x99] sm:$0xff]
      %v2494 = vld [vmem:[%s2286 + $0xa9] sm:$0xff]
      %v2495 = vld [vmem:[%s2286 + $0xb1] sm:$0xff]
      %v2496 = vld [vmem:[%s2286 + $0xc1] sm:$0xff]
      %v2497 = vld [vmem:[%s2286 + $0xc9] sm:$0xff]
      %v2498 = vld [vmem:[%s2286 + $0xd9] sm:$0xff]
      %v2499 = vld [vmem:[%s2286 + $0xe1] sm:$0xff]
      %v2500 = vld [vmem:[%s2286 + $0xf1] sm:$0xff]
      %v2501 = vld [vmem:[%s2286 + $0xf9] sm:$0xff]
      %v2502 = vld [vmem:[%s2286 + $0x109] sm:$0xff]
      %v2503 = vld [vmem:[%s2286 + $0x111] sm:$0xff]
      %v2504 = vld [vmem:[%s2286 + $0x121] sm:$0xff]
      %v2505 = vld [vmem:[%s2286 + $0x129] sm:$0xff]
      %v2506 = vld [vmem:[%s2286 + $0x139] sm:$0xff]
      %v2507 = vld [vmem:[%s2286 + $0x141] sm:$0xff]
      %v2508 = vld [vmem:[%s2286 + $0x151] sm:$0xff]
      %v2509 = vld [vmem:[%s2286 + $0x159] sm:$0xff]
      %v2510 = vld [vmem:[%s2286 + $0x169] sm:$0xff]
      %v2511 = vld [vmem:[%s2286 + $0x171] sm:$0xff]
      %v2512 = vld [vmem:[%s2286 + $0x2] sm:$0xff]
      %v2513 = vld [vmem:[%s2286 + $0xa] sm:$0xff]
      %v2514 = vld [vmem:[%s2286 + $0x1a] sm:$0xff]
      %v2515 = vld [vmem:[%s2286 + $0x22] sm:$0xff]
      %v2516 = vld [vmem:[%s2286 + $0x32] sm:$0xff]
      %v2517 = vld [vmem:[%s2286 + $0x3a] sm:$0xff]
      %v2518 = vld [vmem:[%s2286 + $0x4a] sm:$0xff]
      %v2519 = vld [vmem:[%s2286 + $0x52] sm:$0xff]
      %v2520 = vld [vmem:[%s2286 + $0x62] sm:$0xff]
      %v2521 = vld [vmem:[%s2286 + $0x6a] sm:$0xff]
      %v2522 = vld [vmem:[%s2286 + $0x7a] sm:$0xff]
      %v2523 = vld [vmem:[%s2286 + $0x82] sm:$0xff]
      %v2524 = vld [vmem:[%s2286 + $0x92] sm:$0xff]
      %v2525 = vld [vmem:[%s2286 + $0x9a] sm:$0xff]
      %v2526 = vld [vmem:[%s2286 + $0xaa] sm:$0xff]
      %v2527 = vld [vmem:[%s2286 + $0xb2] sm:$0xff]
      %v2528 = vld [vmem:[%s2286 + $0xc2] sm:$0xff]
      %v2529 = vld [vmem:[%s2286 + $0xca] sm:$0xff]
      %v2530 = vld [vmem:[%s2286 + $0xda] sm:$0xff]
      %v2531 = vld [vmem:[%s2286 + $0xe2] sm:$0xff]
      %v2532 = vld [vmem:[%s2286 + $0xf2] sm:$0xff]
      %v2533 = vld [vmem:[%s2286 + $0xfa] sm:$0xff]
      %v2534 = vld [vmem:[%s2286 + $0x10a] sm:$0xff]
      %v2535 = vld [vmem:[%s2286 + $0x112] sm:$0xff]
      %v2536 = vld [vmem:[%s2286 + $0x122] sm:$0xff]
      %v2537 = vld [vmem:[%s2286 + $0x12a] sm:$0xff]
      %v2538 = vld [vmem:[%s2286 + $0x13a] sm:$0xff]
      %v2539 = vld [vmem:[%s2286 + $0x142] sm:$0xff]
      %v2540 = vld [vmem:[%s2286 + $0x152] sm:$0xff]
      %v2541 = vld [vmem:[%s2286 + $0x15a] sm:$0xff]
      %v2542 = vld [vmem:[%s2286 + $0x16a] sm:$0xff]
      %v2543 = vld [vmem:[%s2286 + $0x172] sm:$0xff]
      %s2544 = scalar_lea.vmem [#allocation3], 48
      %v2545 = vld [vmem:[%s2544] sm:$0xff]
      %v2546 = vld [vmem:[%s2544 + $0x8] sm:$0xff]
      %v2547 = vld [vmem:[%s2544 + $0x18] sm:$0xff]
      %v2548 = vld [vmem:[%s2544 + $0x20] sm:$0xff]
      %v2549 = vld [vmem:[%s2544 + $0x30] sm:$0xff]
      %v2550 = vld [vmem:[%s2544 + $0x38] sm:$0xff]
      %v2551 = vld [vmem:[%s2544 + $0x48] sm:$0xff]
      %v2552 = vld [vmem:[%s2544 + $0x50] sm:$0xff]
      %v2553 = vld [vmem:[%s2544 + $0x60] sm:$0xff]
      %v2554 = vld [vmem:[%s2544 + $0x68] sm:$0xff]
      %v2555 = vld [vmem:[%s2544 + $0x78] sm:$0xff]
      %v2556 = vld [vmem:[%s2544 + $0x80] sm:$0xff]
      %v2557 = vld [vmem:[%s2544 + $0x90] sm:$0xff]
      %v2558 = vld [vmem:[%s2544 + $0x98] sm:$0xff]
      %v2559 = vld [vmem:[%s2544 + $0xa8] sm:$0xff]
      %v2560 = vld [vmem:[%s2544 + $0xb0] sm:$0xff]
      %v2561 = vld [vmem:[%s2544 + $0xc0] sm:$0xff]
      %v2562 = vld [vmem:[%s2544 + $0xc8] sm:$0xff]
      %v2563 = vld [vmem:[%s2544 + $0xd8] sm:$0xff]
      %v2564 = vld [vmem:[%s2544 + $0xe0] sm:$0xff]
      %v2565 = vld [vmem:[%s2544 + $0xf0] sm:$0xff]
      %v2566 = vld [vmem:[%s2544 + $0xf8] sm:$0xff]
      %v2567 = vld [vmem:[%s2544 + $0x108] sm:$0xff]
      %v2568 = vld [vmem:[%s2544 + $0x110] sm:$0xff]
      %v2569 = vld [vmem:[%s2544 + $0x120] sm:$0xff]
      %v2570 = vld [vmem:[%s2544 + $0x128] sm:$0xff]
      %v2571 = vld [vmem:[%s2544 + $0x138] sm:$0xff]
      %v2572 = vld [vmem:[%s2544 + $0x140] sm:$0xff]
      %v2573 = vld [vmem:[%s2544 + $0x150] sm:$0xff]
      %v2574 = vld [vmem:[%s2544 + $0x158] sm:$0xff]
      %v2575 = vld [vmem:[%s2544 + $0x168] sm:$0xff]
      %v2576 = vld [vmem:[%s2544 + $0x170] sm:$0xff]
      %v2577 = vld [vmem:[%s2544 + $0x1] sm:$0xff]
      %v2578 = vld [vmem:[%s2544 + $0x9] sm:$0xff]
      %v2579 = vld [vmem:[%s2544 + $0x19] sm:$0xff]
      %v2580 = vld [vmem:[%s2544 + $0x21] sm:$0xff]
      %v2581 = vld [vmem:[%s2544 + $0x31] sm:$0xff]
      %v2582 = vld [vmem:[%s2544 + $0x39] sm:$0xff]
      %v2583 = vld [vmem:[%s2544 + $0x49] sm:$0xff]
      %v2584 = vld [vmem:[%s2544 + $0x51] sm:$0xff]
      %v2585 = vld [vmem:[%s2544 + $0x61] sm:$0xff]
      %v2586 = vld [vmem:[%s2544 + $0x69] sm:$0xff]
      %v2587 = vld [vmem:[%s2544 + $0x79] sm:$0xff]
      %v2588 = vld [vmem:[%s2544 + $0x81] sm:$0xff]
      %v2589 = vld [vmem:[%s2544 + $0x91] sm:$0xff]
      %v2590 = vld [vmem:[%s2544 + $0x99] sm:$0xff]
      %v2591 = vld [vmem:[%s2544 + $0xa9] sm:$0xff]
      %v2592 = vld [vmem:[%s2544 + $0xb1] sm:$0xff]
      %v2593 = vld [vmem:[%s2544 + $0xc1] sm:$0xff]
      %v2594 = vld [vmem:[%s2544 + $0xc9] sm:$0xff]
      %v2595 = vld [vmem:[%s2544 + $0xd9] sm:$0xff]
      %v2596 = vld [vmem:[%s2544 + $0xe1] sm:$0xff]
      %v2597 = vld [vmem:[%s2544 + $0xf1] sm:$0xff]
      %v2598 = vld [vmem:[%s2544 + $0xf9] sm:$0xff]
      %v2599 = vld [vmem:[%s2544 + $0x109] sm:$0xff]
      %v2600 = vld [vmem:[%s2544 + $0x111] sm:$0xff]
      %v2601 = vld [vmem:[%s2544 + $0x121] sm:$0xff]
      %v2602 = vld [vmem:[%s2544 + $0x129] sm:$0xff]
      %v2603 = vld [vmem:[%s2544 + $0x139] sm:$0xff]
      %v2604 = vld [vmem:[%s2544 + $0x141] sm:$0xff]
      %v2605 = vld [vmem:[%s2544 + $0x151] sm:$0xff]
      %v2606 = vld [vmem:[%s2544 + $0x159] sm:$0xff]
      %v2607 = vld [vmem:[%s2544 + $0x169] sm:$0xff]
      %v2608 = vld [vmem:[%s2544 + $0x171] sm:$0xff]
      %v2609 = vld [vmem:[%s2544 + $0x2] sm:$0xff]
      %v2610 = vld [vmem:[%s2544 + $0xa] sm:$0xff]
      %v2611 = vld [vmem:[%s2544 + $0x1a] sm:$0xff]
      %v2612 = vld [vmem:[%s2544 + $0x22] sm:$0xff]
      %v2613 = vld [vmem:[%s2544 + $0x32] sm:$0xff]
      %v2614 = vld [vmem:[%s2544 + $0x3a] sm:$0xff]
      %v2615 = vld [vmem:[%s2544 + $0x4a] sm:$0xff]
      %v2616 = vld [vmem:[%s2544 + $0x52] sm:$0xff]
      %v2617 = vld [vmem:[%s2544 + $0x62] sm:$0xff]
      %v2618 = vld [vmem:[%s2544 + $0x6a] sm:$0xff]
      %v2619 = vld [vmem:[%s2544 + $0x7a] sm:$0xff]
      %v2620 = vld [vmem:[%s2544 + $0x82] sm:$0xff]
      %v2621 = vld [vmem:[%s2544 + $0x92] sm:$0xff]
      %v2622 = vld [vmem:[%s2544 + $0x9a] sm:$0xff]
      %v2623 = vld [vmem:[%s2544 + $0xaa] sm:$0xff]
      %v2624 = vld [vmem:[%s2544 + $0xb2] sm:$0xff]
      %v2625 = vld [vmem:[%s2544 + $0xc2] sm:$0xff]
      %v2626 = vld [vmem:[%s2544 + $0xca] sm:$0xff]
      %v2627 = vld [vmem:[%s2544 + $0xda] sm:$0xff]
      %v2628 = vld [vmem:[%s2544 + $0xe2] sm:$0xff]
      %v2629 = vld [vmem:[%s2544 + $0xf2] sm:$0xff]
      %v2630 = vld [vmem:[%s2544 + $0xfa] sm:$0xff]
      %v2631 = vld [vmem:[%s2544 + $0x10a] sm:$0xff]
      %v2632 = vld [vmem:[%s2544 + $0x112] sm:$0xff]
      %v2633 = vld [vmem:[%s2544 + $0x122] sm:$0xff]
      %v2634 = vld [vmem:[%s2544 + $0x12a] sm:$0xff]
      %v2635 = vld [vmem:[%s2544 + $0x13a] sm:$0xff]
      %v2636 = vld [vmem:[%s2544 + $0x142] sm:$0xff]
      %v2637 = vld [vmem:[%s2544 + $0x152] sm:$0xff]
      %v2638 = vld [vmem:[%s2544 + $0x15a] sm:$0xff]
      %v2639 = vld [vmem:[%s2544 + $0x16a] sm:$0xff]
      %v2640 = vld [vmem:[%s2544 + $0x172] sm:$0xff]
      %2673 = vrot.lane.b32.xlu0 %v2384, 8
      %v2674 = vpop.permute.xlu0 %2673
      %2675 = vrot.lane.b32.xlu0 %v2385, 8
      %v2676 = vpop.permute.xlu0 %2675
      %2677 = vrot.lane.b32.xlu0 %v2386, 8
      %v2678 = vpop.permute.xlu0 %2677
      %2679 = vrot.lane.b32.xlu0 %v2387, 8
      %v2680 = vpop.permute.xlu0 %2679
      %2681 = vrot.lane.b32.xlu0 %v2388, 8
      %v2682 = vpop.permute.xlu0 %2681
      %2683 = vrot.lane.b32.xlu0 %v2389, 8
      %v2684 = vpop.permute.xlu0 %2683
      %2685 = vrot.lane.b32.xlu0 %v2390, 8
      %v2686 = vpop.permute.xlu0 %2685
      %2687 = vrot.lane.b32.xlu0 %v2391, 8
      %v2688 = vpop.permute.xlu0 %2687
      %2689 = vrot.lane.b32.xlu0 %v2392, 8
      %v2690 = vpop.permute.xlu0 %2689
      %2691 = vrot.lane.b32.xlu0 %v2393, 8
      %v2692 = vpop.permute.xlu0 %2691
      %2693 = vrot.lane.b32.xlu0 %v2394, 8
      %v2694 = vpop.permute.xlu0 %2693
      %2695 = vrot.lane.b32.xlu0 %v2395, 8
      %v2696 = vpop.permute.xlu0 %2695
      %2697 = vrot.lane.b32.xlu0 %v2396, 8
      %v2698 = vpop.permute.xlu0 %2697
      %2699 = vrot.lane.b32.xlu0 %v2397, 8
      %v2700 = vpop.permute.xlu0 %2699
      %2701 = vrot.lane.b32.xlu0 %v2398, 8
      %v2702 = vpop.permute.xlu0 %2701
      %2703 = vrot.lane.b32.xlu0 %v2399, 8
      %v2704 = vpop.permute.xlu0 %2703
      %2705 = vrot.lane.b32.xlu0 %v2400, 8
      %v2706 = vpop.permute.xlu0 %2705
      %2707 = vrot.lane.b32.xlu0 %v2401, 8
      %v2708 = vpop.permute.xlu0 %2707
      %2709 = vrot.lane.b32.xlu0 %v2402, 8
      %v2710 = vpop.permute.xlu0 %2709
      %2711 = vrot.lane.b32.xlu0 %v2403, 8
      %v2712 = vpop.permute.xlu0 %2711
      %2713 = vrot.lane.b32.xlu0 %v2404, 8
      %v2714 = vpop.permute.xlu0 %2713
      %2715 = vrot.lane.b32.xlu0 %v2405, 8
      %v2716 = vpop.permute.xlu0 %2715
      %2717 = vrot.lane.b32.xlu0 %v2406, 8
      %v2718 = vpop.permute.xlu0 %2717
      %2719 = vrot.lane.b32.xlu0 %v2407, 8
      %v2720 = vpop.permute.xlu0 %2719
      %2721 = vrot.lane.b32.xlu0 %v2408, 8
      %v2722 = vpop.permute.xlu0 %2721
      %2723 = vrot.lane.b32.xlu0 %v2409, 8
      %v2724 = vpop.permute.xlu0 %2723
      %2725 = vrot.lane.b32.xlu0 %v2410, 8
      %v2726 = vpop.permute.xlu0 %2725
      %2727 = vrot.lane.b32.xlu0 %v2411, 8
      %v2728 = vpop.permute.xlu0 %2727
      %2729 = vrot.lane.b32.xlu0 %v2412, 8
      %v2730 = vpop.permute.xlu0 %2729
      %2731 = vrot.lane.b32.xlu0 %v2413, 8
      %v2732 = vpop.permute.xlu0 %2731
      %2733 = vrot.lane.b32.xlu0 %v2414, 8
      %v2734 = vpop.permute.xlu0 %2733
      %2735 = vrot.lane.b32.xlu0 %v2415, 8
      %v2736 = vpop.permute.xlu0 %2735
      %2801 = vrot.lane.b32.xlu0 %v2416, 16
      %v2802 = vpop.permute.xlu0 %2801
      %2803 = vrot.lane.b32.xlu0 %v2417, 16
      %v2804 = vpop.permute.xlu0 %2803
      %2805 = vrot.lane.b32.xlu0 %v2418, 16
      %v2806 = vpop.permute.xlu0 %2805
      %2807 = vrot.lane.b32.xlu0 %v2419, 16
      %v2808 = vpop.permute.xlu0 %2807
      %2809 = vrot.lane.b32.xlu0 %v2420, 16
      %v2810 = vpop.permute.xlu0 %2809
      %2811 = vrot.lane.b32.xlu0 %v2421, 16
      %v2812 = vpop.permute.xlu0 %2811
      %2813 = vrot.lane.b32.xlu0 %v2422, 16
      %v2814 = vpop.permute.xlu0 %2813
      %2815 = vrot.lane.b32.xlu0 %v2423, 16
      %v2816 = vpop.permute.xlu0 %2815
      %2817 = vrot.lane.b32.xlu0 %v2424, 16
      %v2818 = vpop.permute.xlu0 %2817
      %2819 = vrot.lane.b32.xlu0 %v2425, 16
      %v2820 = vpop.permute.xlu0 %2819
      %2821 = vrot.lane.b32.xlu0 %v2426, 16
      %v2822 = vpop.permute.xlu0 %2821
      %2823 = vrot.lane.b32.xlu0 %v2427, 16
      %v2824 = vpop.permute.xlu0 %2823
      %2825 = vrot.lane.b32.xlu0 %v2428, 16
      %v2826 = vpop.permute.xlu0 %2825
      %2827 = vrot.lane.b32.xlu0 %v2429, 16
      %v2828 = vpop.permute.xlu0 %2827
      %2829 = vrot.lane.b32.xlu0 %v2430, 16
      %v2830 = vpop.permute.xlu0 %2829
      %2831 = vrot.lane.b32.xlu0 %v2431, 16
      %v2832 = vpop.permute.xlu0 %2831
      %2833 = vrot.lane.b32.xlu0 %v2432, 16
      %v2834 = vpop.permute.xlu0 %2833
      %2835 = vrot.lane.b32.xlu0 %v2433, 16
      %v2836 = vpop.permute.xlu0 %2835
      %2837 = vrot.lane.b32.xlu0 %v2434, 16
      %v2838 = vpop.permute.xlu0 %2837
      %2839 = vrot.lane.b32.xlu0 %v2435, 16
      %v2840 = vpop.permute.xlu0 %2839
      %2841 = vrot.lane.b32.xlu0 %v2436, 16
      %v2842 = vpop.permute.xlu0 %2841
      %2843 = vrot.lane.b32.xlu0 %v2437, 16
      %v2844 = vpop.permute.xlu0 %2843
      %2845 = vrot.lane.b32.xlu0 %v2438, 16
      %v2846 = vpop.permute.xlu0 %2845
      %2847 = vrot.lane.b32.xlu0 %v2439, 16
      %v2848 = vpop.permute.xlu0 %2847
      %2849 = vrot.lane.b32.xlu0 %v2440, 16
      %v2850 = vpop.permute.xlu0 %2849
      %2851 = vrot.lane.b32.xlu0 %v2441, 16
      %v2852 = vpop.permute.xlu0 %2851
      %2853 = vrot.lane.b32.xlu0 %v2442, 16
      %v2854 = vpop.permute.xlu0 %2853
      %2855 = vrot.lane.b32.xlu0 %v2443, 16
      %v2856 = vpop.permute.xlu0 %2855
      %2857 = vrot.lane.b32.xlu0 %v2444, 16
      %v2858 = vpop.permute.xlu0 %2857
      %2859 = vrot.lane.b32.xlu0 %v2445, 16
      %v2860 = vpop.permute.xlu0 %2859
      %2861 = vrot.lane.b32.xlu0 %v2446, 16
      %v2862 = vpop.permute.xlu0 %2861
      %2863 = vrot.lane.b32.xlu0 %v2447, 16
      %v2864 = vpop.permute.xlu0 %2863
      %2929 = vrot.lane.b32.xlu0 %v2448, 24
      %v2930 = vpop.permute.xlu0 %2929
      %2931 = vrot.lane.b32.xlu0 %v2449, 24
      %v2932 = vpop.permute.xlu0 %2931
      %2933 = vrot.lane.b32.xlu0 %v2450, 24
      %v2934 = vpop.permute.xlu0 %2933
      %2935 = vrot.lane.b32.xlu0 %v2451, 24
      %v2936 = vpop.permute.xlu0 %2935
      %2937 = vrot.lane.b32.xlu0 %v2452, 24
      %v2938 = vpop.permute.xlu0 %2937
      %2939 = vrot.lane.b32.xlu0 %v2453, 24
      %v2940 = vpop.permute.xlu0 %2939
      %2941 = vrot.lane.b32.xlu0 %v2454, 24
      %v2942 = vpop.permute.xlu0 %2941
      %2943 = vrot.lane.b32.xlu0 %v2455, 24
      %v2944 = vpop.permute.xlu0 %2943
      %2945 = vrot.lane.b32.xlu0 %v2456, 24
      %v2946 = vpop.permute.xlu0 %2945
      %2947 = vrot.lane.b32.xlu0 %v2457, 24
      %v2948 = vpop.permute.xlu0 %2947
      %2949 = vrot.lane.b32.xlu0 %v2458, 24
      %v2950 = vpop.permute.xlu0 %2949
      %2951 = vrot.lane.b32.xlu0 %v2459, 24
      %v2952 = vpop.permute.xlu0 %2951
      %2953 = vrot.lane.b32.xlu0 %v2460, 24
      %v2954 = vpop.permute.xlu0 %2953
      %2955 = vrot.lane.b32.xlu0 %v2461, 24
      %v2956 = vpop.permute.xlu0 %2955
      %2957 = vrot.lane.b32.xlu0 %v2462, 24
      %v2958 = vpop.permute.xlu0 %2957
      %2959 = vrot.lane.b32.xlu0 %v2463, 24
      %v2960 = vpop.permute.xlu0 %2959
      %2961 = vrot.lane.b32.xlu0 %v2464, 24
      %v2962 = vpop.permute.xlu0 %2961
      %2963 = vrot.lane.b32.xlu0 %v2465, 24
      %v2964 = vpop.permute.xlu0 %2963
      %2965 = vrot.lane.b32.xlu0 %v2466, 24
      %v2966 = vpop.permute.xlu0 %2965
      %2967 = vrot.lane.b32.xlu0 %v2467, 24
      %v2968 = vpop.permute.xlu0 %2967
      %2969 = vrot.lane.b32.xlu0 %v2468, 24
      %v2970 = vpop.permute.xlu0 %2969
      %2971 = vrot.lane.b32.xlu0 %v2469, 24
      %v2972 = vpop.permute.xlu0 %2971
      %2973 = vrot.lane.b32.xlu0 %v2470, 24
      %v2974 = vpop.permute.xlu0 %2973
      %2975 = vrot.lane.b32.xlu0 %v2471, 24
      %v2976 = vpop.permute.xlu0 %2975
      %2977 = vrot.lane.b32.xlu0 %v2472, 24
      %v2978 = vpop.permute.xlu0 %2977
      %2979 = vrot.lane.b32.xlu0 %v2473, 24
      %v2980 = vpop.permute.xlu0 %2979
      %2981 = vrot.lane.b32.xlu0 %v2474, 24
      %v2982 = vpop.permute.xlu0 %2981
      %2983 = vrot.lane.b32.xlu0 %v2475, 24
      %v2984 = vpop.permute.xlu0 %2983
      %2985 = vrot.lane.b32.xlu0 %v2476, 24
      %v2986 = vpop.permute.xlu0 %2985
      %2987 = vrot.lane.b32.xlu0 %v2477, 24
      %v2988 = vpop.permute.xlu0 %2987
      %2989 = vrot.lane.b32.xlu0 %v2478, 24
      %v2990 = vpop.permute.xlu0 %2989
      %2991 = vrot.lane.b32.xlu0 %v2479, 24
      %v2992 = vpop.permute.xlu0 %2991
      %3057 = vrot.lane.b32.xlu0 %v2480, 32
      %v3058 = vpop.permute.xlu0 %3057
      %3059 = vrot.lane.b32.xlu0 %v2481, 32
      %v3060 = vpop.permute.xlu0 %3059
      %3061 = vrot.lane.b32.xlu0 %v2482, 32
      %v3062 = vpop.permute.xlu0 %3061
      %3063 = vrot.lane.b32.xlu0 %v2483, 32
      %v3064 = vpop.permute.xlu0 %3063
      %3065 = vrot.lane.b32.xlu0 %v2484, 32
      %v3066 = vpop.permute.xlu0 %3065
      %3067 = vrot.lane.b32.xlu0 %v2485, 32
      %v3068 = vpop.permute.xlu0 %3067
      %3069 = vrot.lane.b32.xlu0 %v2486, 32
      %v3070 = vpop.permute.xlu0 %3069
      %3071 = vrot.lane.b32.xlu0 %v2487, 32
      %v3072 = vpop.permute.xlu0 %3071
      %3073 = vrot.lane.b32.xlu0 %v2488, 32
      %v3074 = vpop.permute.xlu0 %3073
      %3075 = vrot.lane.b32.xlu0 %v2489, 32
      %v3076 = vpop.permute.xlu0 %3075
      %3077 = vrot.lane.b32.xlu0 %v2490, 32
      %v3078 = vpop.permute.xlu0 %3077
      %3079 = vrot.lane.b32.xlu0 %v2491, 32
      %v3080 = vpop.permute.xlu0 %3079
      %3081 = vrot.lane.b32.xlu0 %v2492, 32
      %v3082 = vpop.permute.xlu0 %3081
      %3083 = vrot.lane.b32.xlu0 %v2493, 32
      %v3084 = vpop.permute.xlu0 %3083
      %3085 = vrot.lane.b32.xlu0 %v2494, 32
      %v3086 = vpop.permute.xlu0 %3085
      %3087 = vrot.lane.b32.xlu0 %v2495, 32
      %v3088 = vpop.permute.xlu0 %3087
      %3089 = vrot.lane.b32.xlu0 %v2496, 32
      %v3090 = vpop.permute.xlu0 %3089
      %3091 = vrot.lane.b32.xlu0 %v2497, 32
      %v3092 = vpop.permute.xlu0 %3091
      %3093 = vrot.lane.b32.xlu0 %v2498, 32
      %v3094 = vpop.permute.xlu0 %3093
      %3095 = vrot.lane.b32.xlu0 %v2499, 32
      %v3096 = vpop.permute.xlu0 %3095
      %3097 = vrot.lane.b32.xlu0 %v2500, 32
      %v3098 = vpop.permute.xlu0 %3097
      %3099 = vrot.lane.b32.xlu0 %v2501, 32
      %v3100 = vpop.permute.xlu0 %3099
      %3101 = vrot.lane.b32.xlu0 %v2502, 32
      %v3102 = vpop.permute.xlu0 %3101
      %3103 = vrot.lane.b32.xlu0 %v2503, 32
      %v3104 = vpop.permute.xlu0 %3103
      %3105 = vrot.lane.b32.xlu0 %v2504, 32
      %v3106 = vpop.permute.xlu0 %3105
      %3107 = vrot.lane.b32.xlu0 %v2505, 32
      %v3108 = vpop.permute.xlu0 %3107
      %3109 = vrot.lane.b32.xlu0 %v2506, 32
      %v3110 = vpop.permute.xlu0 %3109
      %3111 = vrot.lane.b32.xlu0 %v2507, 32
      %v3112 = vpop.permute.xlu0 %3111
      %3113 = vrot.lane.b32.xlu0 %v2508, 32
      %v3114 = vpop.permute.xlu0 %3113
      %3115 = vrot.lane.b32.xlu0 %v2509, 32
      %v3116 = vpop.permute.xlu0 %3115
      %3117 = vrot.lane.b32.xlu0 %v2510, 32
      %v3118 = vpop.permute.xlu0 %3117
      %3119 = vrot.lane.b32.xlu0 %v2511, 32
      %v3120 = vpop.permute.xlu0 %3119
      %3185 = vrot.lane.b32.xlu0 %v2512, 40
      %v3186 = vpop.permute.xlu0 %3185
      %3187 = vrot.lane.b32.xlu0 %v2513, 40
      %v3188 = vpop.permute.xlu0 %3187
      %3189 = vrot.lane.b32.xlu0 %v2514, 40
      %v3190 = vpop.permute.xlu0 %3189
      %3191 = vrot.lane.b32.xlu0 %v2515, 40
      %v3192 = vpop.permute.xlu0 %3191
      %3193 = vrot.lane.b32.xlu0 %v2516, 40
      %v3194 = vpop.permute.xlu0 %3193
      %3195 = vrot.lane.b32.xlu0 %v2517, 40
      %v3196 = vpop.permute.xlu0 %3195
      %3197 = vrot.lane.b32.xlu0 %v2518, 40
      %v3198 = vpop.permute.xlu0 %3197
      %3199 = vrot.lane.b32.xlu0 %v2519, 40
      %v3200 = vpop.permute.xlu0 %3199
      %3201 = vrot.lane.b32.xlu0 %v2520, 40
      %v3202 = vpop.permute.xlu0 %3201
      %3203 = vrot.lane.b32.xlu0 %v2521, 40
      %v3204 = vpop.permute.xlu0 %3203
      %3205 = vrot.lane.b32.xlu0 %v2522, 40
      %v3206 = vpop.permute.xlu0 %3205
      %3207 = vrot.lane.b32.xlu0 %v2523, 40
      %v3208 = vpop.permute.xlu0 %3207
      %3209 = vrot.lane.b32.xlu0 %v2524, 40
      %v3210 = vpop.permute.xlu0 %3209
      %3211 = vrot.lane.b32.xlu0 %v2525, 40
      %v3212 = vpop.permute.xlu0 %3211
      %3213 = vrot.lane.b32.xlu0 %v2526, 40
      %v3214 = vpop.permute.xlu0 %3213
      %3215 = vrot.lane.b32.xlu0 %v2527, 40
      %v3216 = vpop.permute.xlu0 %3215
      %3217 = vrot.lane.b32.xlu0 %v2528, 40
      %v3218 = vpop.permute.xlu0 %3217
      %3219 = vrot.lane.b32.xlu0 %v2529, 40
      %v3220 = vpop.permute.xlu0 %3219
      %3221 = vrot.lane.b32.xlu0 %v2530, 40
      %v3222 = vpop.permute.xlu0 %3221
      %3223 = vrot.lane.b32.xlu0 %v2531, 40
      %v3224 = vpop.permute.xlu0 %3223
      %3225 = vrot.lane.b32.xlu0 %v2532, 40
      %v3226 = vpop.permute.xlu0 %3225
      %3227 = vrot.lane.b32.xlu0 %v2533, 40
      %v3228 = vpop.permute.xlu0 %3227
      %3229 = vrot.lane.b32.xlu0 %v2534, 40
      %v3230 = vpop.permute.xlu0 %3229
      %3231 = vrot.lane.b32.xlu0 %v2535, 40
      %v3232 = vpop.permute.xlu0 %3231
      %3233 = vrot.lane.b32.xlu0 %v2536, 40
      %v3234 = vpop.permute.xlu0 %3233
      %3235 = vrot.lane.b32.xlu0 %v2537, 40
      %v3236 = vpop.permute.xlu0 %3235
      %3237 = vrot.lane.b32.xlu0 %v2538, 40
      %v3238 = vpop.permute.xlu0 %3237
      %3239 = vrot.lane.b32.xlu0 %v2539, 40
      %v3240 = vpop.permute.xlu0 %3239
      %3241 = vrot.lane.b32.xlu0 %v2540, 40
      %v3242 = vpop.permute.xlu0 %3241
      %3243 = vrot.lane.b32.xlu0 %v2541, 40
      %v3244 = vpop.permute.xlu0 %3243
      %3245 = vrot.lane.b32.xlu0 %v2542, 40
      %v3246 = vpop.permute.xlu0 %3245
      %3247 = vrot.lane.b32.xlu0 %v2543, 40
      %v3248 = vpop.permute.xlu0 %3247
      %3313 = vrot.lane.b32.xlu0 %v2545, 48
      %v3314 = vpop.permute.xlu0 %3313
      %3315 = vrot.lane.b32.xlu0 %v2546, 48
      %v3316 = vpop.permute.xlu0 %3315
      %3317 = vrot.lane.b32.xlu0 %v2547, 48
      %v3318 = vpop.permute.xlu0 %3317
      %3319 = vrot.lane.b32.xlu0 %v2548, 48
      %v3320 = vpop.permute.xlu0 %3319
      %3321 = vrot.lane.b32.xlu0 %v2549, 48
      %v3322 = vpop.permute.xlu0 %3321
      %3323 = vrot.lane.b32.xlu0 %v2550, 48
      %v3324 = vpop.permute.xlu0 %3323
      %3325 = vrot.lane.b32.xlu0 %v2551, 48
      %v3326 = vpop.permute.xlu0 %3325
      %3327 = vrot.lane.b32.xlu0 %v2552, 48
      %v3328 = vpop.permute.xlu0 %3327
      %3329 = vrot.lane.b32.xlu0 %v2553, 48
      %v3330 = vpop.permute.xlu0 %3329
      %3331 = vrot.lane.b32.xlu0 %v2554, 48
      %v3332 = vpop.permute.xlu0 %3331
      %3333 = vrot.lane.b32.xlu0 %v2555, 48
      %v3334 = vpop.permute.xlu0 %3333
      %3335 = vrot.lane.b32.xlu0 %v2556, 48
      %v3336 = vpop.permute.xlu0 %3335
      %3337 = vrot.lane.b32.xlu0 %v2557, 48
      %v3338 = vpop.permute.xlu0 %3337
      %3339 = vrot.lane.b32.xlu0 %v2558, 48
      %v3340 = vpop.permute.xlu0 %3339
      %3341 = vrot.lane.b32.xlu0 %v2559, 48
      %v3342 = vpop.permute.xlu0 %3341
      %3343 = vrot.lane.b32.xlu0 %v2560, 48
      %v3344 = vpop.permute.xlu0 %3343
      %3345 = vrot.lane.b32.xlu0 %v2561, 48
      %v3346 = vpop.permute.xlu0 %3345
      %3347 = vrot.lane.b32.xlu0 %v2562, 48
      %v3348 = vpop.permute.xlu0 %3347
      %3349 = vrot.lane.b32.xlu0 %v2563, 48
      %v3350 = vpop.permute.xlu0 %3349
      %3351 = vrot.lane.b32.xlu0 %v2564, 48
      %v3352 = vpop.permute.xlu0 %3351
      %3353 = vrot.lane.b32.xlu0 %v2565, 48
      %v3354 = vpop.permute.xlu0 %3353
      %3355 = vrot.lane.b32.xlu0 %v2566, 48
      %v3356 = vpop.permute.xlu0 %3355
      %3357 = vrot.lane.b32.xlu0 %v2567, 48
      %v3358 = vpop.permute.xlu0 %3357
      %3359 = vrot.lane.b32.xlu0 %v2568, 48
      %v3360 = vpop.permute.xlu0 %3359
      %3361 = vrot.lane.b32.xlu0 %v2569, 48
      %v3362 = vpop.permute.xlu0 %3361
      %3363 = vrot.lane.b32.xlu0 %v2570, 48
      %v3364 = vpop.permute.xlu0 %3363
      %3365 = vrot.lane.b32.xlu0 %v2571, 48
      %v3366 = vpop.permute.xlu0 %3365
      %3367 = vrot.lane.b32.xlu0 %v2572, 48
      %v3368 = vpop.permute.xlu0 %3367
      %3369 = vrot.lane.b32.xlu0 %v2573, 48
      %v3370 = vpop.permute.xlu0 %3369
      %3371 = vrot.lane.b32.xlu0 %v2574, 48
      %v3372 = vpop.permute.xlu0 %3371
      %3373 = vrot.lane.b32.xlu0 %v2575, 48
      %v3374 = vpop.permute.xlu0 %3373
      %3375 = vrot.lane.b32.xlu0 %v2576, 48
      %v3376 = vpop.permute.xlu0 %3375
      %3441 = vrot.lane.b32.xlu0 %v2577, 56
      %v3442 = vpop.permute.xlu0 %3441
      %3443 = vrot.lane.b32.xlu0 %v2578, 56
      %v3444 = vpop.permute.xlu0 %3443
      %3445 = vrot.lane.b32.xlu0 %v2579, 56
      %v3446 = vpop.permute.xlu0 %3445
      %3447 = vrot.lane.b32.xlu0 %v2580, 56
      %v3448 = vpop.permute.xlu0 %3447
      %3449 = vrot.lane.b32.xlu0 %v2581, 56
      %v3450 = vpop.permute.xlu0 %3449
      %3451 = vrot.lane.b32.xlu0 %v2582, 56
      %v3452 = vpop.permute.xlu0 %3451
      %3453 = vrot.lane.b32.xlu0 %v2583, 56
      %v3454 = vpop.permute.xlu0 %3453
      %3455 = vrot.lane.b32.xlu0 %v2584, 56
      %v3456 = vpop.permute.xlu0 %3455
      %3457 = vrot.lane.b32.xlu0 %v2585, 56
      %v3458 = vpop.permute.xlu0 %3457
      %3459 = vrot.lane.b32.xlu0 %v2586, 56
      %v3460 = vpop.permute.xlu0 %3459
      %3461 = vrot.lane.b32.xlu0 %v2587, 56
      %v3462 = vpop.permute.xlu0 %3461
      %3463 = vrot.lane.b32.xlu0 %v2588, 56
      %v3464 = vpop.permute.xlu0 %3463
      %3465 = vrot.lane.b32.xlu0 %v2589, 56
      %v3466 = vpop.permute.xlu0 %3465
      %3467 = vrot.lane.b32.xlu0 %v2590, 56
      %v3468 = vpop.permute.xlu0 %3467
      %3469 = vrot.lane.b32.xlu0 %v2591, 56
      %v3470 = vpop.permute.xlu0 %3469
      %3471 = vrot.lane.b32.xlu0 %v2592, 56
      %v3472 = vpop.permute.xlu0 %3471
      %3473 = vrot.lane.b32.xlu0 %v2593, 56
      %v3474 = vpop.permute.xlu0 %3473
      %3475 = vrot.lane.b32.xlu0 %v2594, 56
      %v3476 = vpop.permute.xlu0 %3475
      %3477 = vrot.lane.b32.xlu0 %v2595, 56
      %v3478 = vpop.permute.xlu0 %3477
      %3479 = vrot.lane.b32.xlu0 %v2596, 56
      %v3480 = vpop.permute.xlu0 %3479
      %3481 = vrot.lane.b32.xlu0 %v2597, 56
      %v3482 = vpop.permute.xlu0 %3481
      %3483 = vrot.lane.b32.xlu0 %v2598, 56
      %v3484 = vpop.permute.xlu0 %3483
      %3485 = vrot.lane.b32.xlu0 %v2599, 56
      %v3486 = vpop.permute.xlu0 %3485
      %3487 = vrot.lane.b32.xlu0 %v2600, 56
      %v3488 = vpop.permute.xlu0 %3487
      %3489 = vrot.lane.b32.xlu0 %v2601, 56
      %v3490 = vpop.permute.xlu0 %3489
      %3491 = vrot.lane.b32.xlu0 %v2602, 56
      %v3492 = vpop.permute.xlu0 %3491
      %3493 = vrot.lane.b32.xlu0 %v2603, 56
      %v3494 = vpop.permute.xlu0 %3493
      %3495 = vrot.lane.b32.xlu0 %v2604, 56
      %v3496 = vpop.permute.xlu0 %3495
      %3497 = vrot.lane.b32.xlu0 %v2605, 56
      %v3498 = vpop.permute.xlu0 %3497
      %3499 = vrot.lane.b32.xlu0 %v2606, 56
      %v3500 = vpop.permute.xlu0 %3499
      %3501 = vrot.lane.b32.xlu0 %v2607, 56
      %v3502 = vpop.permute.xlu0 %3501
      %3503 = vrot.lane.b32.xlu0 %v2608, 56
      %v3504 = vpop.permute.xlu0 %3503
      %3569 = vrot.lane.b32.xlu0 %v2609, 64
      %v3570 = vpop.permute.xlu0 %3569
      %3571 = vrot.lane.b32.xlu0 %v2610, 64
      %v3572 = vpop.permute.xlu0 %3571
      %3573 = vrot.lane.b32.xlu0 %v2611, 64
      %v3574 = vpop.permute.xlu0 %3573
      %3575 = vrot.lane.b32.xlu0 %v2612, 64
      %v3576 = vpop.permute.xlu0 %3575
      %3577 = vrot.lane.b32.xlu0 %v2613, 64
      %v3578 = vpop.permute.xlu0 %3577
      %3579 = vrot.lane.b32.xlu0 %v2614, 64
      %v3580 = vpop.permute.xlu0 %3579
      %3581 = vrot.lane.b32.xlu0 %v2615, 64
      %v3582 = vpop.permute.xlu0 %3581
      %3583 = vrot.lane.b32.xlu0 %v2616, 64
      %v3584 = vpop.permute.xlu0 %3583
      %3585 = vrot.lane.b32.xlu0 %v2617, 64
      %v3586 = vpop.permute.xlu0 %3585
      %3587 = vrot.lane.b32.xlu0 %v2618, 64
      %v3588 = vpop.permute.xlu0 %3587
      %3589 = vrot.lane.b32.xlu0 %v2619, 64
      %v3590 = vpop.permute.xlu0 %3589
      %3591 = vrot.lane.b32.xlu0 %v2620, 64
      %v3592 = vpop.permute.xlu0 %3591
      %3593 = vrot.lane.b32.xlu0 %v2621, 64
      %v3594 = vpop.permute.xlu0 %3593
      %3595 = vrot.lane.b32.xlu0 %v2622, 64
      %v3596 = vpop.permute.xlu0 %3595
      %3597 = vrot.lane.b32.xlu0 %v2623, 64
      %v3598 = vpop.permute.xlu0 %3597
      %3599 = vrot.lane.b32.xlu0 %v2624, 64
      %v3600 = vpop.permute.xlu0 %3599
      %3601 = vrot.lane.b32.xlu0 %v2625, 64
      %v3602 = vpop.permute.xlu0 %3601
      %3603 = vrot.lane.b32.xlu0 %v2626, 64
      %v3604 = vpop.permute.xlu0 %3603
      %3605 = vrot.lane.b32.xlu0 %v2627, 64
      %v3606 = vpop.permute.xlu0 %3605
      %3607 = vrot.lane.b32.xlu0 %v2628, 64
      %v3608 = vpop.permute.xlu0 %3607
      %3609 = vrot.lane.b32.xlu0 %v2629, 64
      %v3610 = vpop.permute.xlu0 %3609
      %3611 = vrot.lane.b32.xlu0 %v2630, 64
      %v3612 = vpop.permute.xlu0 %3611
      %3613 = vrot.lane.b32.xlu0 %v2631, 64
      %v3614 = vpop.permute.xlu0 %3613
      %3615 = vrot.lane.b32.xlu0 %v2632, 64
      %v3616 = vpop.permute.xlu0 %3615
      %3617 = vrot.lane.b32.xlu0 %v2633, 64
      %v3618 = vpop.permute.xlu0 %3617
      %3619 = vrot.lane.b32.xlu0 %v2634, 64
      %v3620 = vpop.permute.xlu0 %3619
      %3621 = vrot.lane.b32.xlu0 %v2635, 64
      %v3622 = vpop.permute.xlu0 %3621
      %3623 = vrot.lane.b32.xlu0 %v2636, 64
      %v3624 = vpop.permute.xlu0 %3623
      %3625 = vrot.lane.b32.xlu0 %v2637, 64
      %v3626 = vpop.permute.xlu0 %3625
      %3627 = vrot.lane.b32.xlu0 %v2638, 64
      %v3628 = vpop.permute.xlu0 %3627
      %3629 = vrot.lane.b32.xlu0 %v2639, 64
      %v3630 = vpop.permute.xlu0 %3629
      %3631 = vrot.lane.b32.xlu0 %v2640, 64
      %v3632 = vpop.permute.xlu0 %3631
      %v3665 = vsel %vm1677, %v2352, %v2674
      %v3666 = vsel %vm1677, %v2353, %v2676
      %v3667 = vsel %vm1677, %v2354, %v2678
      %v3668 = vsel %vm1677, %v2355, %v2680
      %v3669 = vsel %vm1677, %v2356, %v2682
      %v3670 = vsel %vm1677, %v2357, %v2684
      %v3671 = vsel %vm1677, %v2358, %v2686
      %v3672 = vsel %vm1677, %v2359, %v2688
      %v3673 = vsel %vm1677, %v2360, %v2690
      %v3674 = vsel %vm1677, %v2361, %v2692
      %v3675 = vsel %vm1677, %v2362, %v2694
      %v3676 = vsel %vm1677, %v2363, %v2696
      %v3677 = vsel %vm1677, %v2364, %v2698
      %v3678 = vsel %vm1677, %v2365, %v2700
      %v3679 = vsel %vm1677, %v2366, %v2702
      %v3680 = vsel %vm1677, %v2367, %v2704
      %v3681 = vsel %vm1677, %v2368, %v2706
      %v3682 = vsel %vm1677, %v2369, %v2708
      %v3683 = vsel %vm1677, %v2370, %v2710
      %v3684 = vsel %vm1677, %v2371, %v2712
      %v3685 = vsel %vm1677, %v2372, %v2714
      %v3686 = vsel %vm1677, %v2373, %v2716
      %v3687 = vsel %vm1677, %v2374, %v2718
      %v3688 = vsel %vm1677, %v2375, %v2720
      %v3689 = vsel %vm1677, %v2376, %v2722
      %v3690 = vsel %vm1677, %v2377, %v2724
      %v3691 = vsel %vm1677, %v2378, %v2726
      %v3692 = vsel %vm1677, %v2379, %v2728
      %v3693 = vsel %vm1677, %v2380, %v2730
      %v3694 = vsel %vm1677, %v2381, %v2732
      %v3695 = vsel %vm1677, %v2382, %v2734
      %v3696 = vsel %vm1677, %v2383, %v2736
      %v3697 = vsel %vm1743, %v3665, %v2802
      %v3698 = vsel %vm1743, %v3666, %v2804
      %v3699 = vsel %vm1743, %v3667, %v2806
      %v3700 = vsel %vm1743, %v3668, %v2808
      %v3701 = vsel %vm1743, %v3669, %v2810
      %v3702 = vsel %vm1743, %v3670, %v2812
      %v3703 = vsel %vm1743, %v3671, %v2814
      %v3704 = vsel %vm1743, %v3672, %v2816
      %v3705 = vsel %vm1743, %v3673, %v2818
      %v3706 = vsel %vm1743, %v3674, %v2820
      %v3707 = vsel %vm1743, %v3675, %v2822
      %v3708 = vsel %vm1743, %v3676, %v2824
      %v3709 = vsel %vm1743, %v3677, %v2826
      %v3710 = vsel %vm1743, %v3678, %v2828
      %v3711 = vsel %vm1743, %v3679, %v2830
      %v3712 = vsel %vm1743, %v3680, %v2832
      %v3713 = vsel %vm1743, %v3681, %v2834
      %v3714 = vsel %vm1743, %v3682, %v2836
      %v3715 = vsel %vm1743, %v3683, %v2838
      %v3716 = vsel %vm1743, %v3684, %v2840
      %v3717 = vsel %vm1743, %v3685, %v2842
      %v3718 = vsel %vm1743, %v3686, %v2844
      %v3719 = vsel %vm1743, %v3687, %v2846
      %v3720 = vsel %vm1743, %v3688, %v2848
      %v3721 = vsel %vm1743, %v3689, %v2850
      %v3722 = vsel %vm1743, %v3690, %v2852
      %v3723 = vsel %vm1743, %v3691, %v2854
      %v3724 = vsel %vm1743, %v3692, %v2856
      %v3725 = vsel %vm1743, %v3693, %v2858
      %v3726 = vsel %vm1743, %v3694, %v2860
      %v3727 = vsel %vm1743, %v3695, %v2862
      %v3728 = vsel %vm1743, %v3696, %v2864
      %v3729 = vsel %vm1809, %v3697, %v2930
      %v3730 = vsel %vm1809, %v3698, %v2932
      %v3731 = vsel %vm1809, %v3699, %v2934
      %v3732 = vsel %vm1809, %v3700, %v2936
      %v3733 = vsel %vm1809, %v3701, %v2938
      %v3734 = vsel %vm1809, %v3702, %v2940
      %v3735 = vsel %vm1809, %v3703, %v2942
      %v3736 = vsel %vm1809, %v3704, %v2944
      %v3737 = vsel %vm1809, %v3705, %v2946
      %v3738 = vsel %vm1809, %v3706, %v2948
      %v3739 = vsel %vm1809, %v3707, %v2950
      %v3740 = vsel %vm1809, %v3708, %v2952
      %v3741 = vsel %vm1809, %v3709, %v2954
      %v3742 = vsel %vm1809, %v3710, %v2956
      %v3743 = vsel %vm1809, %v3711, %v2958
      %v3744 = vsel %vm1809, %v3712, %v2960
      %v3745 = vsel %vm1809, %v3713, %v2962
      %v3746 = vsel %vm1809, %v3714, %v2964
      %v3747 = vsel %vm1809, %v3715, %v2966
      %v3748 = vsel %vm1809, %v3716, %v2968
      %v3749 = vsel %vm1809, %v3717, %v2970
      %v3750 = vsel %vm1809, %v3718, %v2972
      %v3751 = vsel %vm1809, %v3719, %v2974
      %v3752 = vsel %vm1809, %v3720, %v2976
      %v3753 = vsel %vm1809, %v3721, %v2978
      %v3754 = vsel %vm1809, %v3722, %v2980
      %v3755 = vsel %vm1809, %v3723, %v2982
      %v3756 = vsel %vm1809, %v3724, %v2984
      %v3757 = vsel %vm1809, %v3725, %v2986
      %v3758 = vsel %vm1809, %v3726, %v2988
      %v3759 = vsel %vm1809, %v3727, %v2990
      %v3760 = vsel %vm1809, %v3728, %v2992
      %v3761 = vsel %vm1875, %v3729, %v3058
      %v3762 = vsel %vm1875, %v3730, %v3060
      %v3763 = vsel %vm1875, %v3731, %v3062
      %v3764 = vsel %vm1875, %v3732, %v3064
      %v3765 = vsel %vm1875, %v3733, %v3066
      %v3766 = vsel %vm1875, %v3734, %v3068
      %v3767 = vsel %vm1875, %v3735, %v3070
      %v3768 = vsel %vm1875, %v3736, %v3072
      %v3769 = vsel %vm1875, %v3737, %v3074
      %v3770 = vsel %vm1875, %v3738, %v3076
      %v3771 = vsel %vm1875, %v3739, %v3078
      %v3772 = vsel %vm1875, %v3740, %v3080
      %v3773 = vsel %vm1875, %v3741, %v3082
      %v3774 = vsel %vm1875, %v3742, %v3084
      %v3775 = vsel %vm1875, %v3743, %v3086
      %v3776 = vsel %vm1875, %v3744, %v3088
      %v3777 = vsel %vm1875, %v3745, %v3090
      %v3778 = vsel %vm1875, %v3746, %v3092
      %v3779 = vsel %vm1875, %v3747, %v3094
      %v3780 = vsel %vm1875, %v3748, %v3096
      %v3781 = vsel %vm1875, %v3749, %v3098
      %v3782 = vsel %vm1875, %v3750, %v3100
      %v3783 = vsel %vm1875, %v3751, %v3102
      %v3784 = vsel %vm1875, %v3752, %v3104
      %v3785 = vsel %vm1875, %v3753, %v3106
      %v3786 = vsel %vm1875, %v3754, %v3108
      %v3787 = vsel %vm1875, %v3755, %v3110
      %v3788 = vsel %vm1875, %v3756, %v3112
      %v3789 = vsel %vm1875, %v3757, %v3114
      %v3790 = vsel %vm1875, %v3758, %v3116
      %v3791 = vsel %vm1875, %v3759, %v3118
      %v3792 = vsel %vm1875, %v3760, %v3120
      %vm3793 = vcmask 326656
      %v3794 = vsel %vm3793, %v3761, %v3186
      %v3795 = vsel %vm3793, %v3762, %v3188
      %v3796 = vsel %vm3793, %v3763, %v3190
      %v3797 = vsel %vm3793, %v3764, %v3192
      %v3798 = vsel %vm3793, %v3765, %v3194
      %v3799 = vsel %vm3793, %v3766, %v3196
      %v3800 = vsel %vm3793, %v3767, %v3198
      %v3801 = vsel %vm3793, %v3768, %v3200
      %v3802 = vsel %vm3793, %v3769, %v3202
      %v3803 = vsel %vm3793, %v3770, %v3204
      %v3804 = vsel %vm3793, %v3771, %v3206
      %v3805 = vsel %vm3793, %v3772, %v3208
      %v3806 = vsel %vm3793, %v3773, %v3210
      %v3807 = vsel %vm3793, %v3774, %v3212
      %v3808 = vsel %vm3793, %v3775, %v3214
      %v3809 = vsel %vm3793, %v3776, %v3216
      %v3810 = vsel %vm3793, %v3777, %v3218
      %v3811 = vsel %vm3793, %v3778, %v3220
      %v3812 = vsel %vm3793, %v3779, %v3222
      %v3813 = vsel %vm3793, %v3780, %v3224
      %v3814 = vsel %vm3793, %v3781, %v3226
      %v3815 = vsel %vm3793, %v3782, %v3228
      %v3816 = vsel %vm3793, %v3783, %v3230
      %v3817 = vsel %vm3793, %v3784, %v3232
      %v3818 = vsel %vm3793, %v3785, %v3234
      %v3819 = vsel %vm3793, %v3786, %v3236
      %v3820 = vsel %vm3793, %v3787, %v3238
      %v3821 = vsel %vm3793, %v3788, %v3240
      %v3822 = vsel %vm3793, %v3789, %v3242
      %v3823 = vsel %vm3793, %v3790, %v3244
      %v3824 = vsel %vm3793, %v3791, %v3246
      %v3825 = vsel %vm3793, %v3792, %v3248
      %vm3826 = vcmask 392192
      %v3827 = vsel %vm3826, %v3794, %v3314
      %v3828 = vsel %vm3826, %v3795, %v3316
      %v3829 = vsel %vm3826, %v3796, %v3318
      %v3830 = vsel %vm3826, %v3797, %v3320
      %v3831 = vsel %vm3826, %v3798, %v3322
      %v3832 = vsel %vm3826, %v3799, %v3324
      %v3833 = vsel %vm3826, %v3800, %v3326
      %v3834 = vsel %vm3826, %v3801, %v3328
      %v3835 = vsel %vm3826, %v3802, %v3330
      %v3836 = vsel %vm3826, %v3803, %v3332
      %v3837 = vsel %vm3826, %v3804, %v3334
      %v3838 = vsel %vm3826, %v3805, %v3336
      %v3839 = vsel %vm3826, %v3806, %v3338
      %v3840 = vsel %vm3826, %v3807, %v3340
      %v3841 = vsel %vm3826, %v3808, %v3342
      %v3842 = vsel %vm3826, %v3809, %v3344
      %v3843 = vsel %vm3826, %v3810, %v3346
      %v3844 = vsel %vm3826, %v3811, %v3348
      %v3845 = vsel %vm3826, %v3812, %v3350
      %v3846 = vsel %vm3826, %v3813, %v3352
      %v3847 = vsel %vm3826, %v3814, %v3354
      %v3848 = vsel %vm3826, %v3815, %v3356
      %v3849 = vsel %vm3826, %v3816, %v3358
      %v3850 = vsel %vm3826, %v3817, %v3360
      %v3851 = vsel %vm3826, %v3818, %v3362
      %v3852 = vsel %vm3826, %v3819, %v3364
      %v3853 = vsel %vm3826, %v3820, %v3366
      %v3854 = vsel %vm3826, %v3821, %v3368
      %v3855 = vsel %vm3826, %v3822, %v3370
      %v3856 = vsel %vm3826, %v3823, %v3372
      %v3857 = vsel %vm3826, %v3824, %v3374
      %v3858 = vsel %vm3826, %v3825, %v3376
      %vm3859 = vcmask 457728
      %v3860 = vsel %vm3859, %v3827, %v3442
      %v3861 = vsel %vm3859, %v3828, %v3444
      %v3862 = vsel %vm3859, %v3829, %v3446
      %v3863 = vsel %vm3859, %v3830, %v3448
      %v3864 = vsel %vm3859, %v3831, %v3450
      %v3865 = vsel %vm3859, %v3832, %v3452
      %v3866 = vsel %vm3859, %v3833, %v3454
      %v3867 = vsel %vm3859, %v3834, %v3456
      %v3868 = vsel %vm3859, %v3835, %v3458
      %v3869 = vsel %vm3859, %v3836, %v3460
      %v3870 = vsel %vm3859, %v3837, %v3462
      %v3871 = vsel %vm3859, %v3838, %v3464
      %v3872 = vsel %vm3859, %v3839, %v3466
      %v3873 = vsel %vm3859, %v3840, %v3468
      %v3874 = vsel %vm3859, %v3841, %v3470
      %v3875 = vsel %vm3859, %v3842, %v3472
      %v3876 = vsel %vm3859, %v3843, %v3474
      %v3877 = vsel %vm3859, %v3844, %v3476
      %v3878 = vsel %vm3859, %v3845, %v3478
      %v3879 = vsel %vm3859, %v3846, %v3480
      %v3880 = vsel %vm3859, %v3847, %v3482
      %v3881 = vsel %vm3859, %v3848, %v3484
      %v3882 = vsel %vm3859, %v3849, %v3486
      %v3883 = vsel %vm3859, %v3850, %v3488
      %v3884 = vsel %vm3859, %v3851, %v3490
      %v3885 = vsel %vm3859, %v3852, %v3492
      %v3886 = vsel %vm3859, %v3853, %v3494
      %v3887 = vsel %vm3859, %v3854, %v3496
      %v3888 = vsel %vm3859, %v3855, %v3498
      %v3889 = vsel %vm3859, %v3856, %v3500
      %v3890 = vsel %vm3859, %v3857, %v3502
      %v3891 = vsel %vm3859, %v3858, %v3504
      %vm3892 = vcmask 523264
      %v3893 = vsel %vm3892, %v3860, %v3570
      %v3894 = vsel %vm3892, %v3861, %v3572
      %v3895 = vsel %vm3892, %v3862, %v3574
      %v3896 = vsel %vm3892, %v3863, %v3576
      %v3897 = vsel %vm3892, %v3864, %v3578
      %v3898 = vsel %vm3892, %v3865, %v3580
      %v3899 = vsel %vm3892, %v3866, %v3582
      %v3900 = vsel %vm3892, %v3867, %v3584
      %v3901 = vsel %vm3892, %v3868, %v3586
      %v3902 = vsel %vm3892, %v3869, %v3588
      %v3903 = vsel %vm3892, %v3870, %v3590
      %v3904 = vsel %vm3892, %v3871, %v3592
      %v3905 = vsel %vm3892, %v3872, %v3594
      %v3906 = vsel %vm3892, %v3873, %v3596
      %v3907 = vsel %vm3892, %v3874, %v3598
      %v3908 = vsel %vm3892, %v3875, %v3600
      %v3909 = vsel %vm3892, %v3876, %v3602
      %v3910 = vsel %vm3892, %v3877, %v3604
      %v3911 = vsel %vm3892, %v3878, %v3606
      %v3912 = vsel %vm3892, %v3879, %v3608
      %v3913 = vsel %vm3892, %v3880, %v3610
      %v3914 = vsel %vm3892, %v3881, %v3612
      %v3915 = vsel %vm3892, %v3882, %v3614
      %v3916 = vsel %vm3892, %v3883, %v3616
      %v3917 = vsel %vm3892, %v3884, %v3618
      %v3918 = vsel %vm3892, %v3885, %v3620
      %v3919 = vsel %vm3892, %v3886, %v3622
      %v3920 = vsel %vm3892, %v3887, %v3624
      %v3921 = vsel %vm3892, %v3888, %v3626
      %v3922 = vsel %vm3892, %v3889, %v3628
      %v3923 = vsel %vm3892, %v3890, %v3630
      %v3924 = vsel %vm3892, %v3891, %v3632
      %v3925 = vld [vmem:[%s3] sm:$0xff]
      %v3926 = vld [vmem:[%s3 + $0x8] sm:$0xff]
      %v3927 = vld [vmem:[%s3 + $0x10] sm:$0xff]
      %v3928 = vld [vmem:[%s3 + $0x18] sm:$0xff]
      %v3929 = vld [vmem:[%s3 + $0x20] sm:$0xff]
      %v3930 = vld [vmem:[%s3 + $0x28] sm:$0xff]
      %v3931 = vld [vmem:[%s3 + $0x30] sm:$0xff]
      %v3932 = vld [vmem:[%s3 + $0x38] sm:$0xff]
      %v3933 = vld [vmem:[%s3 + $0x40] sm:$0xff]
      %v3934 = vld [vmem:[%s4] sm:$0x1]
      %v3936 = vlaneseq
      %v3937 = vshrl.u32 %v3936, 7
      %v3938 = vsub.s32 0, %v3937
      %v3939 = vrot.slane %v3934, %v3938
      %vm3941 = vcmask 588800
      %v3943 = vsel %vm3941, %v3893, 0
      %v3946 = vsel %vm3941, %v3894, 0
      %v3949 = vsel %vm3941, %v3895, 0
      %v3952 = vsel %vm3941, %v3896, 0
      %v3955 = vsel %vm3941, %v3897, 0
      %v3958 = vsel %vm3941, %v3898, 0
      %v3961 = vsel %vm3941, %v3899, 0
      %v3964 = vsel %vm3941, %v3900, 0
      %v3967 = vsel %vm3941, %v3901, 0
      %v3970 = vsel %vm3941, %v3902, 0
      %v3973 = vsel %vm3941, %v3903, 0
      %v3976 = vsel %vm3941, %v3904, 0
      %v3979 = vsel %vm3941, %v3905, 0
      %v3982 = vsel %vm3941, %v3906, 0
      %v3985 = vsel %vm3941, %v3907, 0
      %v3988 = vsel %vm3941, %v3908, 0
      %v3991 = vsel %vm3941, %v3909, 0
      %v3994 = vsel %vm3941, %v3910, 0
      %v3997 = vsel %vm3941, %v3911, 0
      %v4000 = vsel %vm3941, %v3912, 0
      %v4003 = vsel %vm3941, %v3913, 0
      %v4006 = vsel %vm3941, %v3914, 0
      %v4009 = vsel %vm3941, %v3915, 0
      %v4012 = vsel %vm3941, %v3916, 0
      %v4015 = vsel %vm3941, %v3917, 0
      %v4018 = vsel %vm3941, %v3918, 0
      %v4021 = vsel %vm3941, %v3919, 0
      %v4024 = vsel %vm3941, %v3920, 0
      %v4027 = vsel %vm3941, %v3921, 0
      %v4030 = vsel %vm3941, %v3922, 0
      %v4033 = vsel %vm3941, %v3923, 0
      %v4036 = vsel %vm3941, %v3924, 0
      %4038 = vmatprep.subr.mxu0 0.0
      %4039 = vmatpush1.msra.mxu0 %v3925
      %4040 = vmatprep.subr.mxu0 0.0
      %4041 = vmatpush1.msra.mxu0 %v3926
      %4042 = vmatprep.subr.mxu0 0.0
      %4043 = vmatpush1.msra.mxu0 %v3927
      %4044 = vmatprep.subr.mxu0 0.0
      %4045 = vmatpush1.msra.mxu0 %v3928
      %4046 = vmatprep.subr.mxu0 0.0
      %4047 = vmatpush1.msra.mxu0 %v3929
      %4048 = vmatprep.subr.mxu0 0.0
      %4049 = vmatpush1.msra.mxu0 %v3930
      %4050 = vmatprep.subr.mxu0 0.0
      %4051 = vmatpush1.msra.mxu0 %v3931
      %4052 = vmatprep.subr.mxu0 0.0
      %4053 = vmatpush1.msra.mxu0 %v3932
      %4054 = vmatprep.subr.mxu0 0.0
      %4055 = vmatpush1.msra.mxu0 %v3933
      %4056 = vmatprep.subr.mxu0 0.0
      %4057 = vmatpush1.msra.mxu0 0.0
      %4058 = vmatprep.subr.mxu0 0.0
      %4059 = vmatpush1.msra.mxu0 0.0
      %4060 = vmatprep.subr.mxu0 0.0
      %4061 = vmatpush1.msra.mxu0 0.0
      %4062 = vmatprep.subr.mxu0 0.0
      %4063 = vmatpush1.msra.mxu0 0.0
      %4064 = vmatprep.subr.mxu0 0.0
      %4065 = vmatpush1.msra.mxu0 0.0
      %4066 = vmatprep.subr.mxu0 0.0
      %4067 = vmatpush1.msra.mxu0 0.0
      %4068 = vmatprep.subr.mxu0 0.0
      %4069 = vmatpush1.msra.mxu0 0.0
      %4070 = vmatprep.subr.mxu0 0.0
      %4071 = vmatpush1.msra.mxu0 0.0
      %4072 = vmatprep.subr.mxu0 0.0
      %4073 = vmatpush1.msra.mxu0 0.0
      %4074 = vmatprep.subr.mxu0 0.0
      %4075 = vmatpush1.msra.mxu0 0.0
      %4076 = vmatprep.subr.mxu0 0.0
      %4077 = vmatpush1.msra.mxu0 0.0
      %4078 = vmatprep.subr.mxu0 0.0
      %4079 = vmatpush1.msra.mxu0 0.0
      %4080 = vmatprep.subr.mxu0 0.0
      %4081 = vmatpush1.msra.mxu0 0.0
      %4082 = vmatprep.subr.mxu0 0.0
      %4083 = vmatpush1.msra.mxu0 0.0
      %4084 = vmatprep.subr.mxu0 0.0
      %4085 = vmatpush1.msra.mxu0 0.0
      %4086 = vmatprep.subr.mxu0 0.0
      %4087 = vmatpush1.msra.mxu0 0.0
      %4088 = vmatprep.subr.mxu0 0.0
      %4089 = vmatpush1.msra.mxu0 0.0
      %4090 = vmatprep.subr.mxu0 0.0
      %4091 = vmatpush1.msra.mxu0 0.0
      %4092 = vmatprep.subr.mxu0 0.0
      %4093 = vmatpush1.msra.mxu0 0.0
      %4094 = vmatprep.subr.mxu0 0.0
      %4095 = vmatpush1.msra.mxu0 0.0
      %4096 = vmatprep.subr.mxu0 0.0
      %4097 = vmatpush1.msra.mxu0 0.0
      %4098 = vmatprep.subr.mxu0 0.0
      %4099 = vmatpush1.msra.mxu0 0.0
      %4100 = vmatprep.subr.mxu0 0.0
      %4101 = vmatpush1.msra.mxu0 0.0
      %4102 = vmatprep.mubr.f32.mxu0 0.0
      %4103 = vmatmul.mubr.f32.gmra.mrb[0].mxu0 %v3943
      %v4104 = vpop.f32.mrb[0].mxu0
      %v4105 = vadd.f32 %v3939, %v4104
      %v4106 = vpop.f32.mrb[0].mxu0
      %4107 = vmatprep.mubr.f32.mxu0 0.0
      %4108 = vmatmul.mubr.f32.gmra.mrb[0].mxu0 %v3946
      %v4109 = vpop.f32.mrb[0].mxu0
      %v4110 = vadd.f32 %v3939, %v4109
      %v4111 = vpop.f32.mrb[0].mxu0
      %4112 = vmatprep.mubr.f32.mxu0 0.0
      %4113 = vmatmul.mubr.f32.gmra.mrb[0].mxu0 %v3949
      %v4114 = vpop.f32.mrb[0].mxu0
      %v4115 = vadd.f32 %v3939, %v4114
      %v4116 = vpop.f32.mrb[0].mxu0
      %4117 = vmatprep.mubr.f32.mxu0 0.0
      %4118 = vmatmul.mubr.f32.gmra.mrb[0].mxu0 %v3952
      %v4119 = vpop.f32.mrb[0].mxu0
      %v4120 = vadd.f32 %v3939, %v4119
      %v4121 = vpop.f32.mrb[0].mxu0
      %4122 = vmatprep.mubr.f32.mxu0 0.0
      %4123 = vmatmul.mubr.f32.gmra.mrb[0].mxu0 %v3955
      %v4124 = vpop.f32.mrb[0].mxu0
      %v4125 = vadd.f32 %v3939, %v4124
      %v4126 = vpop.f32.mrb[0].mxu0
      %4127 = vmatprep.mubr.f32.mxu0 0.0
      %4128 = vmatmul.mubr.f32.gmra.mrb[0].mxu0 %v3958
      %v4129 = vpop.f32.mrb[0].mxu0
      %v4130 = vadd.f32 %v3939, %v4129
      %v4131 = vpop.f32.mrb[0].mxu0
      %4132 = vmatprep.mubr.f32.mxu0 0.0
      %4133 = vmatmul.mubr.f32.gmra.mrb[0].mxu0 %v3961
      %v4134 = vpop.f32.mrb[0].mxu0
      %v4135 = vadd.f32 %v3939, %v4134
      %v4136 = vpop.f32.mrb[0].mxu0
      %4137 = vmatprep.mubr.f32.mxu0 0.0
      %4138 = vmatmul.mubr.f32.gmra.mrb[0].mxu0 %v3964
      %v4139 = vpop.f32.mrb[0].mxu0
      %v4140 = vadd.f32 %v3939, %v4139
      %v4141 = vpop.f32.mrb[0].mxu0
      %4142 = vmatprep.mubr.f32.mxu0 0.0
      %4143 = vmatmul.mubr.f32.gmra.mrb[0].mxu0 %v3967
      %v4144 = vpop.f32.mrb[0].mxu0
      %v4145 = vadd.f32 %v3939, %v4144
      %v4146 = vpop.f32.mrb[0].mxu0
      %4147 = vmatprep.mubr.f32.mxu0 0.0
      %4148 = vmatmul.mubr.f32.gmra.mrb[0].mxu0 %v3970
      %v4149 = vpop.f32.mrb[0].mxu0
      %v4150 = vadd.f32 %v3939, %v4149
      %v4151 = vpop.f32.mrb[0].mxu0
      %4152 = vmatprep.mubr.f32.mxu0 0.0
      %4153 = vmatmul.mubr.f32.gmra.mrb[0].mxu0 %v3973
      %v4154 = vpop.f32.mrb[0].mxu0
      %v4155 = vadd.f32 %v3939, %v4154
      %v4156 = vpop.f32.mrb[0].mxu0
      %4157 = vmatprep.mubr.f32.mxu0 0.0
      %4158 = vmatmul.mubr.f32.gmra.mrb[0].mxu0 %v3976
      %v4159 = vpop.f32.mrb[0].mxu0
      %v4160 = vadd.f32 %v3939, %v4159
      %v4161 = vpop.f32.mrb[0].mxu0
      %4162 = vmatprep.mubr.f32.mxu0 0.0
      %4163 = vmatmul.mubr.f32.gmra.mrb[0].mxu0 %v3979
      %v4164 = vpop.f32.mrb[0].mxu0
      %v4165 = vadd.f32 %v3939, %v4164
      %v4166 = vpop.f32.mrb[0].mxu0
      %4167 = vmatprep.mubr.f32.mxu0 0.0
      %4168 = vmatmul.mubr.f32.gmra.mrb[0].mxu0 %v3982
      %v4169 = vpop.f32.mrb[0].mxu0
      %v4170 = vadd.f32 %v3939, %v4169
      %v4171 = vpop.f32.mrb[0].mxu0
      %4172 = vmatprep.mubr.f32.mxu0 0.0
      %4173 = vmatmul.mubr.f32.gmra.mrb[0].mxu0 %v3985
      %v4174 = vpop.f32.mrb[0].mxu0
      %v4175 = vadd.f32 %v3939, %v4174
      %v4176 = vpop.f32.mrb[0].mxu0
      %4177 = vmatprep.mubr.f32.mxu0 0.0
      %4178 = vmatmul.mubr.f32.gmra.mrb[0].mxu0 %v3988
      %v4179 = vpop.f32.mrb[0].mxu0
      %v4180 = vadd.f32 %v3939, %v4179
      %v4181 = vpop.f32.mrb[0].mxu0
      %4182 = vmatprep.mubr.f32.mxu0 0.0
      %4183 = vmatmul.mubr.f32.gmra.mrb[0].mxu0 %v3991
      %v4184 = vpop.f32.mrb[0].mxu0
      %v4185 = vadd.f32 %v3939, %v4184
      %v4186 = vpop.f32.mrb[0].mxu0
      %4187 = vmatprep.mubr.f32.mxu0 0.0
      %4188 = vmatmul.mubr.f32.gmra.mrb[0].mxu0 %v3994
      %v4189 = vpop.f32.mrb[0].mxu0
      %v4190 = vadd.f32 %v3939, %v4189
      %v4191 = vpop.f32.mrb[0].mxu0
      %4192 = vmatprep.mubr.f32.mxu0 0.0
      %4193 = vmatmul.mubr.f32.gmra.mrb[0].mxu0 %v3997
      %v4194 = vpop.f32.mrb[0].mxu0
      %v4195 = vadd.f32 %v3939, %v4194
      %v4196 = vpop.f32.mrb[0].mxu0
      %4197 = vmatprep.mubr.f32.mxu0 0.0
      %4198 = vmatmul.mubr.f32.gmra.mrb[0].mxu0 %v4000
      %v4199 = vpop.f32.mrb[0].mxu0
      %v4200 = vadd.f32 %v3939, %v4199
      %v4201 = vpop.f32.mrb[0].mxu0
      %4202 = vmatprep.mubr.f32.mxu0 0.0
      %4203 = vmatmul.mubr.f32.gmra.mrb[0].mxu0 %v4003
      %v4204 = vpop.f32.mrb[0].mxu0
      %v4205 = vadd.f32 %v3939, %v4204
      %v4206 = vpop.f32.mrb[0].mxu0
      %4207 = vmatprep.mubr.f32.mxu0 0.0
      %4208 = vmatmul.mubr.f32.gmra.mrb[0].mxu0 %v4006
      %v4209 = vpop.f32.mrb[0].mxu0
      %v4210 = vadd.f32 %v3939, %v4209
      %v4211 = vpop.f32.mrb[0].mxu0
      %4212 = vmatprep.mubr.f32.mxu0 0.0
      %4213 = vmatmul.mubr.f32.gmra.mrb[0].mxu0 %v4009
      %v4214 = vpop.f32.mrb[0].mxu0
      %v4215 = vadd.f32 %v3939, %v4214
      %v4216 = vpop.f32.mrb[0].mxu0
      %4217 = vmatprep.mubr.f32.mxu0 0.0
      %4218 = vmatmul.mubr.f32.gmra.mrb[0].mxu0 %v4012
      %v4219 = vpop.f32.mrb[0].mxu0
      %v4220 = vadd.f32 %v3939, %v4219
      %v4221 = vpop.f32.mrb[0].mxu0
      %4222 = vmatprep.mubr.f32.mxu0 0.0
      %4223 = vmatmul.mubr.f32.gmra.mrb[0].mxu0 %v4015
      %v4224 = vpop.f32.mrb[0].mxu0
      %v4225 = vadd.f32 %v3939, %v4224
      %v4226 = vpop.f32.mrb[0].mxu0
      %4227 = vmatprep.mubr.f32.mxu0 0.0
      %4228 = vmatmul.mubr.f32.gmra.mrb[0].mxu0 %v4018
      %v4229 = vpop.f32.mrb[0].mxu0
      %v4230 = vadd.f32 %v3939, %v4229
      %v4231 = vpop.f32.mrb[0].mxu0
      %4232 = vmatprep.mubr.f32.mxu0 0.0
      %4233 = vmatmul.mubr.f32.gmra.mrb[0].mxu0 %v4021
      %v4234 = vpop.f32.mrb[0].mxu0
      %v4235 = vadd.f32 %v3939, %v4234
      %v4236 = vpop.f32.mrb[0].mxu0
      %4237 = vmatprep.mubr.f32.mxu0 0.0
      %4238 = vmatmul.mubr.f32.gmra.mrb[0].mxu0 %v4024
      %v4239 = vpop.f32.mrb[0].mxu0
      %v4240 = vadd.f32 %v3939, %v4239
      %v4241 = vpop.f32.mrb[0].mxu0
      %4242 = vmatprep.mubr.f32.mxu0 0.0
      %4243 = vmatmul.mubr.f32.gmra.mrb[0].mxu0 %v4027
      %v4244 = vpop.f32.mrb[0].mxu0
      %v4245 = vadd.f32 %v3939, %v4244
      %v4246 = vpop.f32.mrb[0].mxu0
      %4247 = vmatprep.mubr.f32.mxu0 0.0
      %4248 = vmatmul.mubr.f32.gmra.mrb[0].mxu0 %v4030
      %v4249 = vpop.f32.mrb[0].mxu0
      %v4250 = vadd.f32 %v3939, %v4249
      %v4251 = vpop.f32.mrb[0].mxu0
      %4252 = vmatprep.mubr.f32.mxu0 0.0
      %4253 = vmatmul.mubr.f32.gmra.mrb[0].mxu0 %v4033
      %v4254 = vpop.f32.mrb[0].mxu0
      %v4255 = vadd.f32 %v3939, %v4254
      %v4256 = vpop.f32.mrb[0].mxu0
      %4257 = vmatprep.mubr.f32.mxu0 0.0
      %4258 = vmatmul.mubr.f32.gmra.mrb[0].mxu0 %v4036
      %v4259 = vpop.f32.mrb[0].mxu0
      %v4260 = vadd.f32 %v3939, %v4259
      %v4261 = vpop.f32.mrb[0].mxu0
      %4262 = vdwg.mxu0
      %v4263 = vmax.f32 %v4105, 0.0
      %v4264 = vmax.f32 %v4110, 0.0
      %v4265 = vmax.f32 %v4115, 0.0
      %v4266 = vmax.f32 %v4120, 0.0
      %v4267 = vmax.f32 %v4125, 0.0
      %v4268 = vmax.f32 %v4130, 0.0
      %v4269 = vmax.f32 %v4135, 0.0
      %v4270 = vmax.f32 %v4140, 0.0
      %v4271 = vmax.f32 %v4145, 0.0
      %v4272 = vmax.f32 %v4150, 0.0
      %v4273 = vmax.f32 %v4155, 0.0
      %v4274 = vmax.f32 %v4160, 0.0
      %v4275 = vmax.f32 %v4165, 0.0
      %v4276 = vmax.f32 %v4170, 0.0
      %v4277 = vmax.f32 %v4175, 0.0
      %v4278 = vmax.f32 %v4180, 0.0
      %v4279 = vmax.f32 %v4185, 0.0
      %v4280 = vmax.f32 %v4190, 0.0
      %v4281 = vmax.f32 %v4195, 0.0
      %v4282 = vmax.f32 %v4200, 0.0
      %v4283 = vmax.f32 %v4205, 0.0
      %v4284 = vmax.f32 %v4210, 0.0
      %v4285 = vmax.f32 %v4215, 0.0
      %v4286 = vmax.f32 %v4220, 0.0
      %v4287 = vmax.f32 %v4225, 0.0
      %v4288 = vmax.f32 %v4230, 0.0
      %v4289 = vmax.f32 %v4235, 0.0
      %v4290 = vmax.f32 %v4240, 0.0
      %v4291 = vmax.f32 %v4245, 0.0
      %v4292 = vmax.f32 %v4250, 0.0
      %v4293 = vmax.f32 %v4255, 0.0
      %v4294 = vmax.f32 %v4260, 0.0
      %4295 = vst.msk [vmem:[%s224] sm:$0xff] %vm1677, %v4263
      %4296 = vst.msk [vmem:[%s224 + $0x8] sm:$0xff] %vm1677, %v4264
      %4297 = vst.msk [vmem:[%s224 + $0x10] sm:$0xff] %vm1677, %v4265
      %4298 = vst.msk [vmem:[%s224 + $0x18] sm:$0xff] %vm1677, %v4266
      %4299 = vst.msk [vmem:[%s224 + $0x20] sm:$0xff] %vm1677, %v4267
      %4300 = vst.msk [vmem:[%s224 + $0x28] sm:$0xff] %vm1677, %v4268
      %4301 = vst.msk [vmem:[%s224 + $0x30] sm:$0xff] %vm1677, %v4269
      %4302 = vst.msk [vmem:[%s224 + $0x38] sm:$0xff] %vm1677, %v4270
      %4303 = vst.msk [vmem:[%s224 + $0x40] sm:$0xff] %vm1677, %v4271
      %4304 = vst.msk [vmem:[%s224 + $0x48] sm:$0xff] %vm1677, %v4272
      %4305 = vst.msk [vmem:[%s224 + $0x50] sm:$0xff] %vm1677, %v4273
      %4306 = vst.msk [vmem:[%s224 + $0x58] sm:$0xff] %vm1677, %v4274
      %4307 = vst.msk [vmem:[%s224 + $0x60] sm:$0xff] %vm1677, %v4275
      %4308 = vst.msk [vmem:[%s224 + $0x68] sm:$0xff] %vm1677, %v4276
      %4309 = vst.msk [vmem:[%s224 + $0x70] sm:$0xff] %vm1677, %v4277
      %4310 = vst.msk [vmem:[%s224 + $0x78] sm:$0xff] %vm1677, %v4278
      %4311 = vst.msk [vmem:[%s224 + $0x80] sm:$0xff] %vm1677, %v4279
      %4312 = vst.msk [vmem:[%s224 + $0x88] sm:$0xff] %vm1677, %v4280
      %4313 = vst.msk [vmem:[%s224 + $0x90] sm:$0xff] %vm1677, %v4281
      %4314 = vst.msk [vmem:[%s224 + $0x98] sm:$0xff] %vm1677, %v4282
      %4315 = vst.msk [vmem:[%s224 + $0xa0] sm:$0xff] %vm1677, %v4283
      %4316 = vst.msk [vmem:[%s224 + $0xa8] sm:$0xff] %vm1677, %v4284
      %4317 = vst.msk [vmem:[%s224 + $0xb0] sm:$0xff] %vm1677, %v4285
      %4318 = vst.msk [vmem:[%s224 + $0xb8] sm:$0xff] %vm1677, %v4286
      %4319 = vst.msk [vmem:[%s224 + $0xc0] sm:$0xff] %vm1677, %v4287
      %4320 = vst.msk [vmem:[%s224 + $0xc8] sm:$0xff] %vm1677, %v4288
      %4321 = vst.msk [vmem:[%s224 + $0xd0] sm:$0xff] %vm1677, %v4289
      %4322 = vst.msk [vmem:[%s224 + $0xd8] sm:$0xff] %vm1677, %v4290
      %4323 = vst.msk [vmem:[%s224 + $0xe0] sm:$0xff] %vm1677, %v4291
      %4324 = vst.msk [vmem:[%s224 + $0xe8] sm:$0xff] %vm1677, %v4292
      %4325 = vst.msk [vmem:[%s224 + $0xf0] sm:$0xff] %vm1677, %v4293
      %4326 = vst.msk [vmem:[%s224 + $0xf8] sm:$0xff] %vm1677, %v4294
      %p4327 = scmp.lt.s32.totalorder %s16, 1
      %s4328 = scalar_select %p4327, %s16, 1
      %s4329 = smul.addr %s4328, 32
      %s4330 = smul.addr %s4329, 8
      %s4331 = scalar_lea.vmem %s5, %s4330
      // Predicated region
      $region41: #{tpu_custom_call.1} parent=39 // pred_check
        %p4332 = pneg %p144
      $region42: #{tpu_custom_call.1} parent=39 // pred_check_branch
        %4334 = sbr.rel (%p4332) target = $region44
      $region43: #{tpu_custom_call.1} parent=39 // pred_region
        _
      $region44: #{tpu_custom_call.1} parent=39 // pred_fallthru
        _
    $region40: #{tpu_custom_call.1} parent=5 // pred_fallthru
      _
    %p4335 = scmp.le.s32.totalorder 2, %s11
    // Predicated region
    $region45: #{tpu_custom_call.1} parent=5 // pred_check
      %p4336 = pneg %p4335
    $region46: #{tpu_custom_call.1} parent=5 // pred_check_branch
      %4338 = sbr.rel (%p4336) target = $region48
    $region47: #{tpu_custom_call.1} parent=5 // pred_region
      %s4339 = ssub.s32 %s11, 2
      // Predicated region
      $region49: #{tpu_custom_call.1} parent=47 // pred_check
        %p4340 = pneg %p150
      $region50: #{tpu_custom_call.1} parent=47 // pred_check_branch
        %4342 = sbr.rel (%p4340) target = $region52
      $region51: #{tpu_custom_call.1} parent=47 // pred_region
        %p4343 = scmp.lt.s32.totalorder %s17, 1
        %s4344 = scalar_select %p4343, %s17, 1
        %s4345 = smul.addr %s4344, 32
        %s4346 = smul.addr %s4345, 8
        %s4347 = scalar_lea.vmem %s5, %s4346
      $region52: #{tpu_custom_call.1} parent=47 // pred_fallthru
        _
    $region48: #{tpu_custom_call.1} parent=5 // pred_fallthru
      _
  $region6: #{tpu_custom_call.1} parent=0 // loop_footer
    %s15 = sadd.s32 1, %s11
  $region7: #{tpu_custom_call.1} parent=0 // loop_footer_branch
    %10 = sbr.rel target = $region3
  $region8: #{tpu_custom_call.1} parent=0 // loop_exit
    _

</llo_original>
